<compile_context>
chip_gen: v6e
topology: v6e:2x2x1
jax: 0.10.0
libtpu: 0.0.40
codegen_flags: <defaults>
</compile_context>

<pallas_src>
import functools

import jax
import jax.numpy as jnp
from jax.experimental import pallas as pl
from jax.experimental.pallas import tpu as pltpu


def _trilinear_lut_kernel(lut_ref, s_ref, kb_ref, kg_ref, kr_ref, x_ref, o_ref,
                          *, dim):
    # lut_ref: (N_pad, K_pad) f32  lut_T[c*dim + r, b*dim + g] = LUT[c, b, g, r]
    # s_ref:   (3, N_pad)     f32  channel-segment summation matrix (transposed)
    # kb_ref:  (K_pad, 1)     f32  row -> b bin  (padded rows = -2.0)
    # kg_ref:  (K_pad, 1)     f32  row -> g bin  (padded rows = -2.0)
    # kr_ref:  (N_pad, 1)     f32  row -> r bin  (padded rows = -2.0)
    # x_ref:   (3, TILE_P)    f32  pixels on lanes, channels (r, g, b) on sublanes
    # o_ref:   (3, TILE_P)    f32
    inv_binsize = (dim - 1) / 1.0001

    q = x_ref[...] * inv_binsize          # (3, TP); multiply by inverse, no divide
    q_r = q[0:1, :]                       # (1, TP)
    q_g = q[1:2, :]
    q_b = q[2:3, :]

    # "Tent" interpolation weights: max(0, 1 - |bin - q|) reproduces the
    # (1 - frac)/frac one-hot pair exactly, with no floor / int32 compares.
    w_b = jnp.maximum(1.0 - jnp.abs(kb_ref[...] - q_b), 0.0)   # (K_pad, TP)
    w_g = jnp.maximum(1.0 - jnp.abs(kg_ref[...] - q_g), 0.0)   # (K_pad, TP)

    # Single fused MXU matmul over all three channels (lane dim = pixels).
    t = jnp.dot(lut_ref[...], w_b * w_g,
                preferred_element_type=jnp.float32)            # (N_pad, TP)

    # r-axis interpolation + per-channel summation matmul -> (3, TP), stored
    # lane-dense in one shot.
    w_r = jnp.maximum(1.0 - jnp.abs(kr_ref[...] - q_r), 0.0)   # (N_pad, TP)
    o = jnp.dot(s_ref[...], t * w_r, preferred_element_type=jnp.float32)
    o_ref[...] = o.astype(o_ref.dtype)


def generator3dlut_zero_forward(lut, x_nchw, *, tile_p_target=1024):
    """Apply a (3, dim, dim, dim) LUT to an NCHW image via trilinear interp.

    tile_p_target: pixel-tile size (multiple of 128).  1024 is safe for every
    generation's scoped VMEM; sweep up to 2048 on v6e/v7x.
    """
    B, C, H, W = x_nchw.shape
    assert C == 3, "input must have 3 channels (r, g, b)"
    dim = lut.shape[-1]
    P = H * W

    # Pixels-on-lanes layout (no transposes): (B, 3, P), padded to a multiple
    # of the tile so the grid is regular.  Padded pixels are valid zeros and
    # are sliced off the output.
    if P >= tile_p_target:
        tile_p = tile_p_target
    else:
        tile_p = ((P + 127) // 128) * 128
    P_pad = ((P + tile_p - 1) // tile_p) * tile_p
    x_pix = x_nchw.reshape(B, 3, P).astype(jnp.float32)
    if P_pad != P:
        x_pix = jnp.pad(x_pix, ((0, 0), (0, 0), (0, P_pad - P)))

    K = dim * dim
    K_pad = ((K + 7) // 8) * 8            # contraction dim (sublanes of w_bg)
    N = 3 * dim
    N_pad = ((N + 7) // 8) * 8

    # LUT (3, dim, dim, dim) -> packed transposed (N_pad, K_pad) f32 buffer:
    #   lut_t[c*dim + r, b*dim + g] = lut[c, b, g, r]
    lut_t = jnp.transpose(lut.astype(jnp.float32).reshape(3, K, dim),
                          (0, 2, 1)).reshape(N, K)
    lut_t = jnp.pad(lut_t, ((0, N_pad - N), (0, K_pad - K)))

    # Constant f32 bin-index columns; padded rows get -2.0 -> tent weight 0
    # for any q >= 0.
    k_idx = jnp.arange(K_pad)
    kb_col = jnp.where(k_idx < K, (k_idx // dim).astype(jnp.float32),
                       -2.0)[:, None]                          # (K_pad, 1)
    kg_col = jnp.where(k_idx < K, (k_idx % dim).astype(jnp.float32),
                       -2.0)[:, None]                          # (K_pad, 1)
    n_idx = jnp.arange(N_pad)
    kr_col = jnp.where(n_idx < N, (n_idx % dim).astype(jnp.float32),
                       -2.0)[:, None]                          # (N_pad, 1)

    # Channel-segment summation matrix (transposed): S[c, c*dim + r] = 1.
    s_t = jnp.pad(jnp.repeat(jnp.eye(3, dtype=jnp.float32), dim, axis=1),
                  ((0, 0), (0, N_pad - N)))                    # (3, N_pad)

    grid = (B, P_pad // tile_p)

    flops = 2 * B * P_pad * (N_pad * K_pad + 3 * N_pad)
    bytes_accessed = (2 * B * P_pad * 3 + lut_t.size) * 4

    out_pix = pl.pallas_call(
        functools.partial(_trilinear_lut_kernel, dim=dim),
        out_shape=jax.ShapeDtypeStruct((B, 3, P_pad), jnp.float32),
        grid=grid,
        in_specs=[
            pl.BlockSpec((N_pad, K_pad), lambda bb, pp: (0, 0)),      # packed LUT^T
            pl.BlockSpec((3, N_pad), lambda bb, pp: (0, 0)),          # sum matrix^T
            pl.BlockSpec((K_pad, 1), lambda bb, pp: (0, 0)),          # kb column
            pl.BlockSpec((K_pad, 1), lambda bb, pp: (0, 0)),          # kg column
            pl.BlockSpec((N_pad, 1), lambda bb, pp: (0, 0)),          # kr column
            pl.BlockSpec((None, 3, tile_p), lambda bb, pp: (bb, 0, pp)),  # pixels
        ],
        out_specs=pl.BlockSpec((None, 3, tile_p), lambda bb, pp: (bb, 0, pp)),
        compiler_params=pltpu.CompilerParams(
            dimension_semantics=("parallel", "parallel"),
            vmem_limit_bytes=64 * 1024 * 1024),
        cost_estimate=pl.CostEstimate(
            flops=int(flops), transcendentals=0,
            bytes_accessed=int(bytes_accessed)),
    )(lut_t, s_t, kb_col, kg_col, kr_col, x_pix)

    return out_pix[:, :, :P].reshape(B, 3, H, W)


def _trilinear_reference(lut, x_nchw):
    """Pure-JAX reference matching the trilinear_forward C op."""
    dim = lut.shape[-1]
    binsize = 1.0001 / (dim - 1)
    r, g, b = x_nchw[:, 0], x_nchw[:, 1], x_nchw[:, 2]

    def idf(v):
        q = v / binsize
        vid = jnp.floor(q)
        return vid.astype(jnp.int32), q - vid

    r_id, r_d = idf(r)
    g_id, g_d = idf(g)
    b_id, b_d = idf(b)

    def gat(c, bi, gi, ri):
        return lut[c][bi, gi, ri]

    outs = []
    for c in range(3):
        o = ((1 - r_d) * (1 - g_d) * (1 - b_d) * gat(c, b_id, g_id, r_id)
             + r_d * (1 - g_d) * (1 - b_d) * gat(c, b_id, g_id, r_id + 1)
             + (1 - r_d) * g_d * (1 - b_d) * gat(c, b_id, g_id + 1, r_id)
             + r_d * g_d * (1 - b_d) * gat(c, b_id, g_id + 1, r_id + 1)
             + (1 - r_d) * (1 - g_d) * b_d * gat(c, b_id + 1, g_id, r_id)
             + r_d * (1 - g_d) * b_d * gat(c, b_id + 1, g_id, r_id + 1)
             + (1 - r_d) * g_d * b_d * gat(c, b_id + 1, g_id + 1, r_id)
             + r_d * g_d * b_d * gat(c, b_id + 1, g_id + 1, r_id + 1))
        outs.append(o)
    return jnp.stack(outs, axis=1)


if __name__ == "__main__":
    B, H, W, dim = 2, 16, 16, 33
    key = jax.random.PRNGKey(0)
    x = jax.random.uniform(key, (B, 3, H, W), dtype=jnp.float32)  # NCHW, [0, 1)

    # Module-faithful parameter init: Generator3DLUT_zero uses a zero LUT.
    lut_zero = jnp.zeros((3, dim, dim, dim), dtype=jnp.float32)
    out_zero = generator3dlut_zero_forward(lut_zero, x)
    jax.block_until_ready(out_zero)
    assert out_zero.shape == x.shape
    assert bool(jnp.allclose(out_zero, 0.0)), "zero LUT must give zero output"

    # Sanity-check the interpolation math with a non-trivial (deterministic) LUT.
    lut_rand = jax.random.normal(jax.random.PRNGKey(1), (3, dim, dim, dim),
                                 dtype=jnp.float32)
    out_kernel = generator3dlut_zero_forward(lut_rand, x)
    out_ref = _trilinear_reference(lut_rand, x)
    jax.block_until_ready(out_kernel)
    assert bool(jnp.allclose(out_kernel, out_ref, atol=1e-5, rtol=1e-5)), (
        "Pallas kernel does not match trilinear reference")

    print("KERNEL_OK")
</pallas_src>

<mosaic_0001>
module attributes {stable_mosaic.version = 11 : i64} {
  func.func @_trilinear_lut_kernel(%arg0: i32, %arg1: i32, %arg2: memref<104x1096xf32, #tpu.memory_space<vmem>>, %arg3: memref<3x104xf32, #tpu.memory_space<vmem>>, %arg4: memref<1096x1xf32, #tpu.memory_space<vmem>>, %arg5: memref<1096x1xf32, #tpu.memory_space<vmem>>, %arg6: memref<104x1xf32, #tpu.memory_space<vmem>>, %arg7: memref<1x3x256xf32, #tpu.memory_space<vmem>>, %arg8: memref<1x3x256xf32, #tpu.memory_space<vmem>>) attributes {dimension_semantics = [#tpu.dimension_semantics<parallel>, #tpu.dimension_semantics<parallel>], iteration_bounds = array<i64: 2, 1>, scalar_prefetch = 0 : i64, scratch_operands = 0 : i64, tpu.core_type = #tpu.core_type<tc>, window_params = [{pipeline_mode = #tpu.pipeline_mode<synchronous>, transform_indices = @transform_0, window_bounds = array<i64: 104, 1096>}, {pipeline_mode = #tpu.pipeline_mode<synchronous>, transform_indices = @transform_1, window_bounds = array<i64: 3, 104>}, {pipeline_mode = #tpu.pipeline_mode<synchronous>, transform_indices = @transform_2, window_bounds = array<i64: 1096, 1>}, {pipeline_mode = #tpu.pipeline_mode<synchronous>, transform_indices = @transform_3, window_bounds = array<i64: 1096, 1>}, {pipeline_mode = #tpu.pipeline_mode<synchronous>, transform_indices = @transform_4, window_bounds = array<i64: 104, 1>}, {transform_indices = @transform_5, window_bounds = array<i64: 1, 3, 256>}, {transform_indices = @transform_6, window_bounds = array<i64: 1, 3, 256>}]} {
    %c0 = arith.constant 0 : index
    %c0_0 = arith.constant 0 : index
    %c0_1 = arith.constant 0 : index
    %0 = vector.load %arg7[%c0, %c0_0, %c0_1] : memref<1x3x256xf32, #tpu.memory_space<vmem>>, vector<1x3x256xf32>
    %1 = vector.shape_cast %0 : vector<1x3x256xf32> to vector<3x256xf32>
    %cst = arith.constant 3.199680e+01 : f32
    %2 = vector.broadcast %cst : f32 to vector<3x256xf32>
    %3 = arith.mulf %1, %2 : vector<3x256xf32>
    %4 = vector.extract_strided_slice %3 {offsets = [0, 0], sizes = [1, 256], strides = [1, 1]} : vector<3x256xf32> to vector<1x256xf32>
    %5 = vector.extract_strided_slice %3 {offsets = [1, 0], sizes = [1, 256], strides = [1, 1]} : vector<3x256xf32> to vector<1x256xf32>
    %6 = vector.extract_strided_slice %3 {offsets = [2, 0], sizes = [1, 256], strides = [1, 1]} : vector<3x256xf32> to vector<1x256xf32>
    %c0_2 = arith.constant 0 : index
    %c0_3 = arith.constant 0 : index
    %7 = vector.load %arg4[%c0_2, %c0_3] : memref<1096x1xf32, #tpu.memory_space<vmem>>, vector<1096x1xf32>
    %8 = vector.broadcast %7 : vector<1096x1xf32> to vector<1096x256xf32>
    %9 = vector.broadcast %6 : vector<1x256xf32> to vector<1096x256xf32>
    %10 = arith.subf %8, %9 : vector<1096x256xf32>
    %11 = math.absf %10 : vector<1096x256xf32>
    %cst_4 = arith.constant 1.000000e+00 : f32
    %12 = vector.broadcast %cst_4 : f32 to vector<1096x256xf32>
    %13 = arith.subf %12, %11 : vector<1096x256xf32>
    %cst_5 = arith.constant 0.000000e+00 : f32
    %14 = vector.broadcast %cst_5 : f32 to vector<1096x256xf32>
    %15 = arith.maximumf %13, %14 : vector<1096x256xf32>
    %c0_6 = arith.constant 0 : index
    %c0_7 = arith.constant 0 : index
    %16 = vector.load %arg5[%c0_6, %c0_7] : memref<1096x1xf32, #tpu.memory_space<vmem>>, vector<1096x1xf32>
    %17 = vector.broadcast %16 : vector<1096x1xf32> to vector<1096x256xf32>
    %18 = vector.broadcast %5 : vector<1x256xf32> to vector<1096x256xf32>
    %19 = arith.subf %17, %18 : vector<1096x256xf32>
    %20 = math.absf %19 : vector<1096x256xf32>
    %cst_8 = arith.constant 1.000000e+00 : f32
    %21 = vector.broadcast %cst_8 : f32 to vector<1096x256xf32>
    %22 = arith.subf %21, %20 : vector<1096x256xf32>
    %cst_9 = arith.constant 0.000000e+00 : f32
    %23 = vector.broadcast %cst_9 : f32 to vector<1096x256xf32>
    %24 = arith.maximumf %22, %23 : vector<1096x256xf32>
    %c0_10 = arith.constant 0 : index
    %c0_11 = arith.constant 0 : index
    %25 = vector.load %arg2[%c0_10, %c0_11] : memref<104x1096xf32, #tpu.memory_space<vmem>>, vector<104x1096xf32>
    %26 = arith.mulf %15, %24 : vector<1096x256xf32>
    %cst_12 = arith.constant dense<0.000000e+00> : vector<104x256xf32>
    %27 = tpu.matmul %25, %26, %cst_12 {dimension_numbers = #tpu.dot_dimension_numbers<[1], [0], [0], [1], [0, 0, 1, 1], [], []>} : vector<104x1096xf32>, vector<1096x256xf32>, vector<104x256xf32> -> vector<104x256xf32>
    %c0_13 = arith.constant 0 : index
    %c0_14 = arith.constant 0 : index
    %28 = vector.load %arg6[%c0_13, %c0_14] : memref<104x1xf32, #tpu.memory_space<vmem>>, vector<104x1xf32>
    %29 = vector.broadcast %28 : vector<104x1xf32> to vector<104x256xf32>
    %30 = vector.broadcast %4 : vector<1x256xf32> to vector<104x256xf32>
    %31 = arith.subf %29, %30 : vector<104x256xf32>
    %32 = math.absf %31 : vector<104x256xf32>
    %cst_15 = arith.constant 1.000000e+00 : f32
    %33 = vector.broadcast %cst_15 : f32 to vector<104x256xf32>
    %34 = arith.subf %33, %32 : vector<104x256xf32>
    %cst_16 = arith.constant 0.000000e+00 : f32
    %35 = vector.broadcast %cst_16 : f32 to vector<104x256xf32>
    %36 = arith.maximumf %34, %35 : vector<104x256xf32>
    %c0_17 = arith.constant 0 : index
    %c0_18 = arith.constant 0 : index
    %37 = vector.load %arg3[%c0_17, %c0_18] : memref<3x104xf32, #tpu.memory_space<vmem>>, vector<3x104xf32>
    %38 = arith.mulf %27, %36 : vector<104x256xf32>
    %cst_19 = arith.constant dense<0.000000e+00> : vector<3x256xf32>
    %39 = tpu.matmul %37, %38, %cst_19 {dimension_numbers = #tpu.dot_dimension_numbers<[1], [0], [0], [1], [0, 0, 1, 1], [], []>} : vector<3x104xf32>, vector<104x256xf32>, vector<3x256xf32> -> vector<3x256xf32>
    %c0_20 = arith.constant 0 : index
    %c0_21 = arith.constant 0 : index
    %c0_22 = arith.constant 0 : index
    %40 = vector.load %arg8[%c0_20, %c0_21, %c0_22] : memref<1x3x256xf32, #tpu.memory_space<vmem>>, vector<1x3x256xf32>
    %41 = vector.shape_cast %40 : vector<1x3x256xf32> to vector<3x256xf32>
    %42 = vector.shape_cast %39 : vector<3x256xf32> to vector<1x3x256xf32>
    tpu.vector_store %arg8[%c0_20, %c0_21, %c0_22], %42 {strides = array<i32>} : memref<1x3x256xf32, #tpu.memory_space<vmem>>, vector<1x3x256xf32>,
    return
  }
  func.func @transform_0(%arg0: i32, %arg1: i32) -> (i32, i32) {
    %c0_i32 = arith.constant 0 : i32
    %c0_i32_0 = arith.constant 0 : i32
    %c0_i32_1 = arith.constant 0 : i32
    return %c0_i32, %c0_i32_0 : i32, i32
  }
  func.func @transform_1(%arg0: i32, %arg1: i32) -> (i32, i32) {
    %c0_i32 = arith.constant 0 : i32
    %c0_i32_0 = arith.constant 0 : i32
    %c0_i32_1 = arith.constant 0 : i32
    return %c0_i32, %c0_i32_0 : i32, i32
  }
  func.func @transform_2(%arg0: i32, %arg1: i32) -> (i32, i32) {
    %c0_i32 = arith.constant 0 : i32
    %c0_i32_0 = arith.constant 0 : i32
    %c0_i32_1 = arith.constant 0 : i32
    return %c0_i32, %c0_i32_0 : i32, i32
  }
  func.func @transform_3(%arg0: i32, %arg1: i32) -> (i32, i32) {
    %c0_i32 = arith.constant 0 : i32
    %c0_i32_0 = arith.constant 0 : i32
    %c0_i32_1 = arith.constant 0 : i32
    return %c0_i32, %c0_i32_0 : i32, i32
  }
  func.func @transform_4(%arg0: i32, %arg1: i32) -> (i32, i32) {
    %c0_i32 = arith.constant 0 : i32
    %c0_i32_0 = arith.constant 0 : i32
    %c0_i32_1 = arith.constant 0 : i32
    return %c0_i32, %c0_i32_0 : i32, i32
  }
  func.func @transform_5(%arg0: i32, %arg1: i32) -> (i32, i32, i32) {
    %c0_i32 = arith.constant 0 : i32
    %c0_i32_0 = arith.constant 0 : i32
    return %arg0, %c0_i32, %arg1 : i32, i32, i32
  }
  func.func @transform_6(%arg0: i32, %arg1: i32) -> (i32, i32, i32) {
    %c0_i32 = arith.constant 0 : i32
    %c0_i32_0 = arith.constant 0 : i32
    return %arg0, %c0_i32, %arg1 : i32, i32, i32
  }
}

</mosaic_0001>

<llo_original>
// kernel: tpu_custom_call.1
$region0: #{tpu_custom_call.1}
  #allocation0 [shape = 'u32[]', space=smem, size = 0x4, offset = 0x4, fixed_abs, tag = 'smem constant byte address 0x4 - core index']
  #allocation1 [shape = 'u32[144,128]{1,0:T(1,128)}', space=vmem, size = 0x12000, scoped, tag = 'internal scratch']
  %s0 = inlined_call_operand.vmem [shape: f32[104,1096], index: 0, kind: input, shape index: {}]
  %s1 = inlined_call_operand.vmem [shape: f32[3,104], index: 1, kind: input, shape index: {}]
  %s2 = inlined_call_operand.vmem [shape: f32[1096,1], index: 2, kind: input, shape index: {}]
  %s3 = inlined_call_operand.vmem [shape: f32[1096,1], index: 3, kind: input, shape index: {}]
  %s4 = inlined_call_operand.vmem [shape: f32[104,1], index: 4, kind: input, shape index: {}]
  %s5 = inlined_call_operand.vmem [shape: f32[2,3,256], index: 5, kind: input, shape index: {}]
  %s6 = inlined_call_operand.vmem [shape: f32[2,3,256], index: 6, kind: output, shape index: {}]
  %s7 = sld [smem:[#allocation0]]
  $region57: #{tpu_custom_call.1} parent=0
    _
  %s9 = ssub.s32 1, %s7
  %s10 = scalar_select 0, %s9, %s7
  loop: start=0, step=1, limit=4
  $region2: #{tpu_custom_call.1} parent=0 // loop_pre_header
    _
  $region3: #{tpu_custom_call.1} parent=0 // loop_header
    %s12 = sphi 0, %s16
    %p13 = scmp.ge.s32.totalorder %s12, 4
    %s19 = sphi 0, %s31
    %s20 = sphi 0, %s27
    %s21 = sphi 0, %s19
    %s22 = sphi 0, %s20
    %s23 = sphi 0, %s21
    %s24 = sphi 0, %s22
    %s32 = sphi 0, %s32
    %s34 = sphi 0, %s32
    %s35 = sphi 0, %s34
    %s49 = sphi 0, %s35
    %s53 = sphi 0, %s53
    %s55 = sphi 0, %s53
    %s56 = sphi 0, %s55
    %s70 = sphi 0, %s56
    %s74 = sphi 0, %s74
    %s76 = sphi 0, %s74
    %s77 = sphi 0, %s76
    %s91 = sphi 0, %s77
    %s95 = sphi 0, %s95
    %s97 = sphi 0, %s95
    %s98 = sphi 0, %s97
    %s112 = sphi 0, %s98
    %s116 = sphi 0, %s116
    %s118 = sphi 0, %s116
    %s119 = sphi 0, %s118
    %s133 = sphi 0, %s119
    %s141 = sphi 0, %s143
    %s144 = sphi 0, %s141
    %s145 = sphi 0, %s144
    %s161 = sphi 0, %s145
    %s169 = sphi 0, %s171
    %s172 = sphi 0, %s169
    %s173 = sphi 0, %s172
    %s189 = sphi 0, %s173
  $region4: #{tpu_custom_call.1} parent=0 // loop_header_branch
    %15 = sbr.rel (%p13) target = $region8
  $region5: #{tpu_custom_call.1} parent=0 // loop_body
    %s17 = ssub.s32 %s12, 1
    %s18 = ssub.s32 %s12, 2
    %s25 = sadd.s32 1, %s20
    %p26 = scmp.ge.s32.totalorder %s25, 1
    %s27 = scalar_select %p26, 0, %s25
    %s28 = sadd.s32 1, %s19
    %s29 = scalar_select %p26, %s28, %s19
    %p30 = scmp.ge.s32.totalorder %s29, 2
    %s31 = scalar_select %p30, 0, %s29
    %s33 = sadd.s32 %s32, 1
    %p36 = scmp.eq.s32.totalorder %s12, 1
    %p37 = scmp.ne.s32.totalorder %s32, %s34
    %p38 = scmp.eq.s32.totalorder %s12, 0
    %p39 = por %p37, %p38
    %p40 = scmp.ne.s32.totalorder %s32, %s34
    %p41 = scmp.eq.s32.totalorder %s17, 1
    %p42 = por %p40, %p41
    %p43 = scmp.ne.s32.totalorder %s34, %s35
    %p44 = scmp.eq.s32.totalorder %s17, 0
    %p45 = por %p43, %p44
    %p46 = scmp.ne.s32.totalorder %s34, %s35
    %p47 = scmp.eq.s32.totalorder %s18, 1
    %p48 = por %p46, %p47
    %p50 = scmp.ne.s32.totalorder %s35, %s49
    %p51 = scmp.eq.s32.totalorder %s18, 0
    %p52 = por %p50, %p51
    %s54 = sadd.s32 %s53, 1
    %p57 = scmp.eq.s32.totalorder %s12, 1
    %p58 = scmp.ne.s32.totalorder %s53, %s55
    %p59 = scmp.eq.s32.totalorder %s12, 0
    %p60 = por %p58, %p59
    %p61 = scmp.ne.s32.totalorder %s53, %s55
    %p62 = scmp.eq.s32.totalorder %s17, 1
    %p63 = por %p61, %p62
    %p64 = scmp.ne.s32.totalorder %s55, %s56
    %p65 = scmp.eq.s32.totalorder %s17, 0
    %p66 = por %p64, %p65
    %p67 = scmp.ne.s32.totalorder %s55, %s56
    %p68 = scmp.eq.s32.totalorder %s18, 1
    %p69 = por %p67, %p68
    %p71 = scmp.ne.s32.totalorder %s56, %s70
    %p72 = scmp.eq.s32.totalorder %s18, 0
    %p73 = por %p71, %p72
    %s75 = sadd.s32 %s74, 1
    %p78 = scmp.eq.s32.totalorder %s12, 1
    %p79 = scmp.ne.s32.totalorder %s74, %s76
    %p80 = scmp.eq.s32.totalorder %s12, 0
    %p81 = por %p79, %p80
    %p82 = scmp.ne.s32.totalorder %s74, %s76
    %p83 = scmp.eq.s32.totalorder %s17, 1
    %p84 = por %p82, %p83
    %p85 = scmp.ne.s32.totalorder %s76, %s77
    %p86 = scmp.eq.s32.totalorder %s17, 0
    %p87 = por %p85, %p86
    %p88 = scmp.ne.s32.totalorder %s76, %s77
    %p89 = scmp.eq.s32.totalorder %s18, 1
    %p90 = por %p88, %p89
    %p92 = scmp.ne.s32.totalorder %s77, %s91
    %p93 = scmp.eq.s32.totalorder %s18, 0
    %p94 = por %p92, %p93
    %s96 = sadd.s32 %s95, 1
    %p99 = scmp.eq.s32.totalorder %s12, 1
    %p100 = scmp.ne.s32.totalorder %s95, %s97
    %p101 = scmp.eq.s32.totalorder %s12, 0
    %p102 = por %p100, %p101
    %p103 = scmp.ne.s32.totalorder %s95, %s97
    %p104 = scmp.eq.s32.totalorder %s17, 1
    %p105 = por %p103, %p104
    %p106 = scmp.ne.s32.totalorder %s97, %s98
    %p107 = scmp.eq.s32.totalorder %s17, 0
    %p108 = por %p106, %p107
    %p109 = scmp.ne.s32.totalorder %s97, %s98
    %p110 = scmp.eq.s32.totalorder %s18, 1
    %p111 = por %p109, %p110
    %p113 = scmp.ne.s32.totalorder %s98, %s112
    %p114 = scmp.eq.s32.totalorder %s18, 0
    %p115 = por %p113, %p114
    %s117 = sadd.s32 %s116, 1
    %p120 = scmp.eq.s32.totalorder %s12, 1
    %p121 = scmp.ne.s32.totalorder %s116, %s118
    %p122 = scmp.eq.s32.totalorder %s12, 0
    %p123 = por %p121, %p122
    %p124 = scmp.ne.s32.totalorder %s116, %s118
    %p125 = scmp.eq.s32.totalorder %s17, 1
    %p126 = por %p124, %p125
    %p127 = scmp.ne.s32.totalorder %s118, %s119
    %p128 = scmp.eq.s32.totalorder %s17, 0
    %p129 = por %p127, %p128
    %p130 = scmp.ne.s32.totalorder %s118, %s119
    %p131 = scmp.eq.s32.totalorder %s18, 1
    %p132 = por %p130, %p131
    %p134 = scmp.ne.s32.totalorder %s119, %s133
    %p135 = scmp.eq.s32.totalorder %s18, 0
    %p136 = por %p134, %p135
    %s137 = ssub.s32 %s19, %s31
    %s138 = ssub.s32 %s20, %s27
    %s139 = sor.u32 %s137, %s138
    %p140 = scmp.eq.s32.totalorder %s139, 0
    %s142 = sadd.s32 %s141, 1
    %s143 = scalar_select %p140, %s141, %s142
    %p146 = pneg %p140
    %p147 = scmp.eq.s32.totalorder %s12, 1
    %p148 = por %p146, %p147
    %p149 = scmp.ne.s32.totalorder %s141, %s144
    %p150 = scmp.eq.s32.totalorder %s12, 0
    %p151 = por %p149, %p150
    %p152 = scmp.ne.s32.totalorder %s141, %s144
    %p153 = scmp.eq.s32.totalorder %s17, 1
    %p154 = por %p152, %p153
    %p155 = scmp.ne.s32.totalorder %s144, %s145
    %p156 = scmp.eq.s32.totalorder %s17, 0
    %p157 = por %p155, %p156
    %p158 = scmp.ne.s32.totalorder %s144, %s145
    %p159 = scmp.eq.s32.totalorder %s18, 1
    %p160 = por %p158, %p159
    %p162 = scmp.ne.s32.totalorder %s145, %s161
    %p163 = scmp.eq.s32.totalorder %s18, 0
    %p164 = por %p162, %p163
    %s165 = ssub.s32 %s19, %s31
    %s166 = ssub.s32 %s20, %s27
    %s167 = sor.u32 %s165, %s166
    %p168 = scmp.eq.s32.totalorder %s167, 0
    %s170 = sadd.s32 %s169, 1
    %s171 = scalar_select %p168, %s169, %s170
    %p174 = pneg %p168
    %p175 = scmp.eq.s32.totalorder %s12, 1
    %p176 = por %p174, %p175
    %p177 = scmp.ne.s32.totalorder %s169, %s172
    %p178 = scmp.eq.s32.totalorder %s12, 0
    %p179 = por %p177, %p178
    %p180 = scmp.ne.s32.totalorder %s169, %s172
    %p181 = scmp.eq.s32.totalorder %s17, 1
    %p182 = por %p180, %p181
    %p183 = scmp.ne.s32.totalorder %s172, %s173
    %p184 = scmp.eq.s32.totalorder %s17, 0
    %p185 = por %p183, %p184
    %p186 = scmp.ne.s32.totalorder %s172, %s173
    %p187 = scmp.eq.s32.totalorder %s18, 1
    %p188 = por %p186, %p187
    %p190 = scmp.ne.s32.totalorder %s173, %s189
    %p191 = scmp.eq.s32.totalorder %s18, 0
    %p192 = por %p190, %p191
    %p193 = scmp.le.s32.totalorder 1, %s12
    %p194 = scmp.lt.s32.totalorder %s12, 3
    %p195 = pnand %p193, %p194
    %p196 = pneg %p195
    // Predicated region
    $region9: #{tpu_custom_call.1} parent=5 // pred_check
      _
    $region10: #{tpu_custom_call.1} parent=5 // pred_check_branch
      %198 = sbr.rel (%p195) target = $region12
    $region11: #{tpu_custom_call.1} parent=5 // pred_region
      %s199 = ssub.s32 %s12, 1
      // Predicated region
      $region13: #{tpu_custom_call.1} parent=11 // pred_check
        %p200 = pneg %p45
      $region14: #{tpu_custom_call.1} parent=11 // pred_check_branch
        %202 = sbr.rel (%p200) target = $region16
      $region15: #{tpu_custom_call.1} parent=11 // pred_region
        _
      $region16: #{tpu_custom_call.1} parent=11 // pred_fallthru
        _
      // Predicated region
      $region17: #{tpu_custom_call.1} parent=11 // pred_check
        %p203 = pneg %p66
      $region18: #{tpu_custom_call.1} parent=11 // pred_check_branch
        %205 = sbr.rel (%p203) target = $region20
      $region19: #{tpu_custom_call.1} parent=11 // pred_region
        _
      $region20: #{tpu_custom_call.1} parent=11 // pred_fallthru
        _
      // Predicated region
      $region21: #{tpu_custom_call.1} parent=11 // pred_check
        %p206 = pneg %p87
      $region22: #{tpu_custom_call.1} parent=11 // pred_check_branch
        %208 = sbr.rel (%p206) target = $region24
      $region23: #{tpu_custom_call.1} parent=11 // pred_region
        _
      $region24: #{tpu_custom_call.1} parent=11 // pred_fallthru
        _
      // Predicated region
      $region25: #{tpu_custom_call.1} parent=11 // pred_check
        %p209 = pneg %p108
      $region26: #{tpu_custom_call.1} parent=11 // pred_check_branch
        %211 = sbr.rel (%p209) target = $region28
      $region27: #{tpu_custom_call.1} parent=11 // pred_region
        _
      $region28: #{tpu_custom_call.1} parent=11 // pred_fallthru
        _
      // Predicated region
      $region29: #{tpu_custom_call.1} parent=11 // pred_check
        %p212 = pneg %p129
      $region30: #{tpu_custom_call.1} parent=11 // pred_check_branch
        %214 = sbr.rel (%p212) target = $region32
      $region31: #{tpu_custom_call.1} parent=11 // pred_region
        _
      $region32: #{tpu_custom_call.1} parent=11 // pred_fallthru
        _
    $region12: #{tpu_custom_call.1} parent=5 // pred_fallthru
      _
    %p215 = scmp.lt.s32.totalorder %s12, 2
    // Predicated region
    $region33: #{tpu_custom_call.1} parent=5 // pred_check
      %p216 = pneg %p215
    $region34: #{tpu_custom_call.1} parent=5 // pred_check_branch
      %218 = sbr.rel (%p216) target = $region36
    $region35: #{tpu_custom_call.1} parent=5 // pred_region
      // Predicated region
      $region37: #{tpu_custom_call.1} parent=35 // pred_check
        %p219 = pneg %p151
      $region38: #{tpu_custom_call.1} parent=35 // pred_check_branch
        %221 = sbr.rel (%p219) target = $region40
      $region39: #{tpu_custom_call.1} parent=35 // pred_region
        %s222 = smul.u32 2, %s20
        %p223 = scmp.lt.s32.totalorder %s19, 1
        %s224 = scalar_select %p223, %s19, 1
        %p225 = scmp.lt.s32.totalorder %s222, 1
        %s226 = scalar_select %p225, %s222, 1
        %s227 = smul.addr %s224, 2
        %s228 = sadd.s32 %s226, %s227
        %s229 = smul.addr %s228, 4
        %s230 = scalar_lea.vmem %s5, %s229
        %s231 = smul.u32 2, %s20
      $region40: #{tpu_custom_call.1} parent=35 // pred_fallthru
        _
    $region36: #{tpu_custom_call.1} parent=5 // pred_fallthru
      _
    %p232 = scmp.le.s32.totalorder 1, %s12
    %p233 = scmp.lt.s32.totalorder %s12, 3
    %p234 = pnand %p232, %p233
    %p235 = pneg %p234
    // Predicated region
    $region41: #{tpu_custom_call.1} parent=5 // pred_check
      _
    $region42: #{tpu_custom_call.1} parent=5 // pred_check_branch
      %237 = sbr.rel (%p234) target = $region44
    $region43: #{tpu_custom_call.1} parent=5 // pred_region
      %s238 = ssub.s32 %s12, 1
      %p239 = pneg %p45
      %p240 = pneg %p42
      %p241 = pneg %p66
      %p242 = pneg %p63
      %p243 = pneg %p87
      %p244 = pneg %p84
      %p245 = pneg %p108
      %p246 = pneg %p105
      %p247 = pneg %p129
      %p248 = pneg %p126
      %s249 = smul.u32 2, %s22
      %p250 = scmp.lt.s32.totalorder %s21, 1
      %s251 = scalar_select %p250, %s21, 1
      %p252 = scmp.lt.s32.totalorder %s249, 1
      %s253 = scalar_select %p252, %s249, 1
      %s254 = smul.addr %s251, 2
      %s255 = sadd.s32 %s253, %s254
      %s256 = smul.addr %s255, 4
      %s257 = scalar_lea.vmem %s5, %s256
      %p258 = pneg %p157
      %p259 = pneg %p154
      %p260 = pneg %p185
      %p261 = pneg %p182
      %s262 = smul.u32 2, %s22
      %p263 = scmp.lt.s32.totalorder %s21, 1
      %s264 = scalar_select %p263, %s21, 1
      %p265 = scmp.lt.s32.totalorder %s262, 1
      %s266 = scalar_select %p265, %s262, 1
      %s267 = smul.addr %s264, 2
      %s268 = sadd.s32 %s266, %s267
      %s269 = smul.addr %s268, 4
      %s270 = scalar_lea.vmem %s6, %s269
      %s271 = smul.u32 2, %s22
      %p272 = scmp.lt.s32.totalorder %s21, 1
      %s273 = scalar_select %p272, %s21, 1
      %p274 = scmp.lt.s32.totalorder %s271, 1
      %s275 = scalar_select %p274, %s271, 1
      %s276 = smul.addr %s273, 2
      %s277 = sadd.s32 %s275, %s276
      %s278 = smul.addr %s277, 4
      %s279 = scalar_lea.vmem %s5, %s278
      %s280 = smul.u32 2, %s22
      %s281 = smul.u32 2, %s22
      %p282 = scmp.lt.s32.totalorder %s21, 1
      %s283 = scalar_select %p282, %s21, 1
      %p284 = scmp.lt.s32.totalorder %s281, 1
      %s285 = scalar_select %p284, %s281, 1
      %s286 = smul.addr %s283, 2
      %s287 = sadd.s32 %s285, %s286
      %s288 = smul.addr %s287, 4
      %s289 = scalar_lea.vmem %s6, %s288
      %s290 = smul.u32 2, %s22
      %v291 = vld [vmem:[%s279] sm:$0x77]
      %v292 = vmul.f32 %v291, 31.9968
      %v293 = vld [vmem:[%s2] sm:$0xff]
      %v294 = vld [vmem:[%s2 + $0x8] sm:$0xff]
      %v295 = vld [vmem:[%s2 + $0x10] sm:$0xff]
      %v296 = vld [vmem:[%s2 + $0x18] sm:$0xff]
      %v297 = vld [vmem:[%s2 + $0x20] sm:$0xff]
      %v298 = vld [vmem:[%s2 + $0x28] sm:$0xff]
      %v299 = vld [vmem:[%s2 + $0x30] sm:$0xff]
      %v300 = vld [vmem:[%s2 + $0x38] sm:$0xff]
      %v301 = vld [vmem:[%s2 + $0x40] sm:$0xff]
      %v302 = vld [vmem:[%s2 + $0x48] sm:$0xff]
      %v303 = vld [vmem:[%s2 + $0x50] sm:$0xff]
      %v304 = vld [vmem:[%s2 + $0x58] sm:$0xff]
      %v305 = vld [vmem:[%s2 + $0x60] sm:$0xff]
      %v306 = vld [vmem:[%s2 + $0x68] sm:$0xff]
      %v307 = vld [vmem:[%s2 + $0x70] sm:$0xff]
      %v308 = vld [vmem:[%s2 + $0x78] sm:$0xff]
      %v309 = vld [vmem:[%s2 + $0x80] sm:$0xff]
      %v310 = vld [vmem:[%s2 + $0x88] sm:$0xff]
      %v311 = vld [vmem:[%s2 + $0x90] sm:$0xff]
      %v312 = vld [vmem:[%s2 + $0x98] sm:$0xff]
      %v313 = vld [vmem:[%s2 + $0xa0] sm:$0xff]
      %v314 = vld [vmem:[%s2 + $0xa8] sm:$0xff]
      %v315 = vld [vmem:[%s2 + $0xb0] sm:$0xff]
      %v316 = vld [vmem:[%s2 + $0xb8] sm:$0xff]
      %v317 = vld [vmem:[%s2 + $0xc0] sm:$0xff]
      %v318 = vld [vmem:[%s2 + $0xc8] sm:$0xff]
      %v319 = vld [vmem:[%s2 + $0xd0] sm:$0xff]
      %v320 = vld [vmem:[%s2 + $0xd8] sm:$0xff]
      %v321 = vld [vmem:[%s2 + $0xe0] sm:$0xff]
      %v322 = vld [vmem:[%s2 + $0xe8] sm:$0xff]
      %v323 = vld [vmem:[%s2 + $0xf0] sm:$0xff]
      %v324 = vld [vmem:[%s2 + $0xf8] sm:$0xff]
      %v325 = vld [vmem:[%s2 + $0x100] sm:$0xff]
      %v326 = vld [vmem:[%s2 + $0x108] sm:$0xff]
      %v327 = vld [vmem:[%s2 + $0x110] sm:$0xff]
      %v328 = vld [vmem:[%s2 + $0x118] sm:$0xff]
      %v329 = vld [vmem:[%s2 + $0x120] sm:$0xff]
      %v330 = vld [vmem:[%s2 + $0x128] sm:$0xff]
      %v331 = vld [vmem:[%s2 + $0x130] sm:$0xff]
      %v332 = vld [vmem:[%s2 + $0x138] sm:$0xff]
      %v333 = vld [vmem:[%s2 + $0x140] sm:$0xff]
      %v334 = vld [vmem:[%s2 + $0x148] sm:$0xff]
      %v335 = vld [vmem:[%s2 + $0x150] sm:$0xff]
      %v336 = vld [vmem:[%s2 + $0x158] sm:$0xff]
      %v337 = vld [vmem:[%s2 + $0x160] sm:$0xff]
      %v338 = vld [vmem:[%s2 + $0x168] sm:$0xff]
      %v339 = vld [vmem:[%s2 + $0x170] sm:$0xff]
      %v340 = vld [vmem:[%s2 + $0x178] sm:$0xff]
      %v341 = vld [vmem:[%s2 + $0x180] sm:$0xff]
      %v342 = vld [vmem:[%s2 + $0x188] sm:$0xff]
      %v343 = vld [vmem:[%s2 + $0x190] sm:$0xff]
      %v344 = vld [vmem:[%s2 + $0x198] sm:$0xff]
      %v345 = vld [vmem:[%s2 + $0x1a0] sm:$0xff]
      %v346 = vld [vmem:[%s2 + $0x1a8] sm:$0xff]
      %v347 = vld [vmem:[%s2 + $0x1b0] sm:$0xff]
      %v348 = vld [vmem:[%s2 + $0x1b8] sm:$0xff]
      %v349 = vld [vmem:[%s2 + $0x1c0] sm:$0xff]
      %v350 = vld [vmem:[%s2 + $0x1c8] sm:$0xff]
      %v351 = vld [vmem:[%s2 + $0x1d0] sm:$0xff]
      %v352 = vld [vmem:[%s2 + $0x1d8] sm:$0xff]
      %v353 = vld [vmem:[%s2 + $0x1e0] sm:$0xff]
      %v354 = vld [vmem:[%s2 + $0x1e8] sm:$0xff]
      %v355 = vld [vmem:[%s2 + $0x1f0] sm:$0xff]
      %v356 = vld [vmem:[%s2 + $0x1f8] sm:$0xff]
      %v357 = vld [vmem:[%s2 + $0x200] sm:$0xff]
      %v358 = vld [vmem:[%s2 + $0x208] sm:$0xff]
      %v359 = vld [vmem:[%s2 + $0x210] sm:$0xff]
      %v360 = vld [vmem:[%s2 + $0x218] sm:$0xff]
      %v361 = vld [vmem:[%s2 + $0x220] sm:$0xff]
      %v362 = vld [vmem:[%s2 + $0x228] sm:$0xff]
      %v363 = vld [vmem:[%s2 + $0x230] sm:$0xff]
      %v364 = vld [vmem:[%s2 + $0x238] sm:$0xff]
      %v365 = vld [vmem:[%s2 + $0x240] sm:$0xff]
      %v366 = vld [vmem:[%s2 + $0x248] sm:$0xff]
      %v367 = vld [vmem:[%s2 + $0x250] sm:$0xff]
      %v368 = vld [vmem:[%s2 + $0x258] sm:$0xff]
      %v369 = vld [vmem:[%s2 + $0x260] sm:$0xff]
      %v370 = vld [vmem:[%s2 + $0x268] sm:$0xff]
      %v371 = vld [vmem:[%s2 + $0x270] sm:$0xff]
      %v372 = vld [vmem:[%s2 + $0x278] sm:$0xff]
      %v373 = vld [vmem:[%s2 + $0x280] sm:$0xff]
      %v374 = vld [vmem:[%s2 + $0x288] sm:$0xff]
      %v375 = vld [vmem:[%s2 + $0x290] sm:$0xff]
      %v376 = vld [vmem:[%s2 + $0x298] sm:$0xff]
      %v377 = vld [vmem:[%s2 + $0x2a0] sm:$0xff]
      %v378 = vld [vmem:[%s2 + $0x2a8] sm:$0xff]
      %v379 = vld [vmem:[%s2 + $0x2b0] sm:$0xff]
      %v380 = vld [vmem:[%s2 + $0x2b8] sm:$0xff]
      %v381 = vld [vmem:[%s2 + $0x2c0] sm:$0xff]
      %v382 = vld [vmem:[%s2 + $0x2c8] sm:$0xff]
      %v383 = vld [vmem:[%s2 + $0x2d0] sm:$0xff]
      %v384 = vld [vmem:[%s2 + $0x2d8] sm:$0xff]
      %v385 = vld [vmem:[%s2 + $0x2e0] sm:$0xff]
      %v386 = vld [vmem:[%s2 + $0x2e8] sm:$0xff]
      %v387 = vld [vmem:[%s2 + $0x2f0] sm:$0xff]
      %v388 = vld [vmem:[%s2 + $0x2f8] sm:$0xff]
      %v389 = vld [vmem:[%s2 + $0x300] sm:$0xff]
      %v390 = vld [vmem:[%s2 + $0x308] sm:$0xff]
      %v391 = vld [vmem:[%s2 + $0x310] sm:$0xff]
      %v392 = vld [vmem:[%s2 + $0x318] sm:$0xff]
      %v393 = vld [vmem:[%s2 + $0x320] sm:$0xff]
      %v394 = vld [vmem:[%s2 + $0x328] sm:$0xff]
      %v395 = vld [vmem:[%s2 + $0x330] sm:$0xff]
      %v396 = vld [vmem:[%s2 + $0x338] sm:$0xff]
      %v397 = vld [vmem:[%s2 + $0x340] sm:$0xff]
      %v398 = vld [vmem:[%s2 + $0x348] sm:$0xff]
      %v399 = vld [vmem:[%s2 + $0x350] sm:$0xff]
      %v400 = vld [vmem:[%s2 + $0x358] sm:$0xff]
      %v401 = vld [vmem:[%s2 + $0x360] sm:$0xff]
      %v402 = vld [vmem:[%s2 + $0x368] sm:$0xff]
      %v403 = vld [vmem:[%s2 + $0x370] sm:$0xff]
      %v404 = vld [vmem:[%s2 + $0x378] sm:$0xff]
      %v405 = vld [vmem:[%s2 + $0x380] sm:$0xff]
      %v406 = vld [vmem:[%s2 + $0x388] sm:$0xff]
      %v407 = vld [vmem:[%s2 + $0x390] sm:$0xff]
      %v408 = vld [vmem:[%s2 + $0x398] sm:$0xff]
      %v409 = vld [vmem:[%s2 + $0x3a0] sm:$0xff]
      %v410 = vld [vmem:[%s2 + $0x3a8] sm:$0xff]
      %v411 = vld [vmem:[%s2 + $0x3b0] sm:$0xff]
      %v412 = vld [vmem:[%s2 + $0x3b8] sm:$0xff]
      %v413 = vld [vmem:[%s2 + $0x3c0] sm:$0xff]
      %v414 = vld [vmem:[%s2 + $0x3c8] sm:$0xff]
      %v415 = vld [vmem:[%s2 + $0x3d0] sm:$0xff]
      %v416 = vld [vmem:[%s2 + $0x3d8] sm:$0xff]
      %v417 = vld [vmem:[%s2 + $0x3e0] sm:$0xff]
      %v418 = vld [vmem:[%s2 + $0x3e8] sm:$0xff]
      %v419 = vld [vmem:[%s2 + $0x3f0] sm:$0xff]
      %v420 = vld [vmem:[%s2 + $0x3f8] sm:$0xff]
      %v421 = vld [vmem:[%s2 + $0x400] sm:$0xff]
      %v422 = vld [vmem:[%s2 + $0x408] sm:$0xff]
      %v423 = vld [vmem:[%s2 + $0x410] sm:$0xff]
      %v424 = vld [vmem:[%s2 + $0x418] sm:$0xff]
      %v425 = vld [vmem:[%s2 + $0x420] sm:$0xff]
      %v426 = vld [vmem:[%s2 + $0x428] sm:$0xff]
      %v427 = vld [vmem:[%s2 + $0x430] sm:$0xff]
      %v428 = vld [vmem:[%s2 + $0x438] sm:$0xff]
      %v429 = vld [vmem:[%s2 + $0x440] sm:$0xff]
      %431 = vset.pattern.permute.xlu0 0
      %432 = vperm.xlu0 %431, %v293
      %v433 = vpop.permute.xlu0 %432
      %436 = vset.pattern.permute.xlu0 0
      %437 = vperm.xlu0 %436, %v294
      %v438 = vpop.permute.xlu0 %437
      %441 = vset.pattern.permute.xlu0 0
      %442 = vperm.xlu0 %441, %v295
      %v443 = vpop.permute.xlu0 %442
      %446 = vset.pattern.permute.xlu0 0
      %447 = vperm.xlu0 %446, %v296
      %v448 = vpop.permute.xlu0 %447
      %451 = vset.pattern.permute.xlu0 0
      %452 = vperm.xlu0 %451, %v297
      %v453 = vpop.permute.xlu0 %452
      %456 = vset.pattern.permute.xlu0 0
      %457 = vperm.xlu0 %456, %v298
      %v458 = vpop.permute.xlu0 %457
      %461 = vset.pattern.permute.xlu0 0
      %462 = vperm.xlu0 %461, %v299
      %v463 = vpop.permute.xlu0 %462
      %466 = vset.pattern.permute.xlu0 0
      %467 = vperm.xlu0 %466, %v300
      %v468 = vpop.permute.xlu0 %467
      %471 = vset.pattern.permute.xlu0 0
      %472 = vperm.xlu0 %471, %v301
      %v473 = vpop.permute.xlu0 %472
      %476 = vset.pattern.permute.xlu0 0
      %477 = vperm.xlu0 %476, %v302
      %v478 = vpop.permute.xlu0 %477
      %481 = vset.pattern.permute.xlu0 0
      %482 = vperm.xlu0 %481, %v303
      %v483 = vpop.permute.xlu0 %482
      %486 = vset.pattern.permute.xlu0 0
      %487 = vperm.xlu0 %486, %v304
      %v488 = vpop.permute.xlu0 %487
      %491 = vset.pattern.permute.xlu0 0
      %492 = vperm.xlu0 %491, %v305
      %v493 = vpop.permute.xlu0 %492
      %496 = vset.pattern.permute.xlu0 0
      %497 = vperm.xlu0 %496, %v306
      %v498 = vpop.permute.xlu0 %497
      %501 = vset.pattern.permute.xlu0 0
      %502 = vperm.xlu0 %501, %v307
      %v503 = vpop.permute.xlu0 %502
      %506 = vset.pattern.permute.xlu0 0
      %507 = vperm.xlu0 %506, %v308
      %v508 = vpop.permute.xlu0 %507
      %511 = vset.pattern.permute.xlu0 0
      %512 = vperm.xlu0 %511, %v309
      %v513 = vpop.permute.xlu0 %512
      %516 = vset.pattern.permute.xlu0 0
      %517 = vperm.xlu0 %516, %v310
      %v518 = vpop.permute.xlu0 %517
      %521 = vset.pattern.permute.xlu0 0
      %522 = vperm.xlu0 %521, %v311
      %v523 = vpop.permute.xlu0 %522
      %526 = vset.pattern.permute.xlu0 0
      %527 = vperm.xlu0 %526, %v312
      %v528 = vpop.permute.xlu0 %527
      %531 = vset.pattern.permute.xlu0 0
      %532 = vperm.xlu0 %531, %v313
      %v533 = vpop.permute.xlu0 %532
      %536 = vset.pattern.permute.xlu0 0
      %537 = vperm.xlu0 %536, %v314
      %v538 = vpop.permute.xlu0 %537
      %541 = vset.pattern.permute.xlu0 0
      %542 = vperm.xlu0 %541, %v315
      %v543 = vpop.permute.xlu0 %542
      %546 = vset.pattern.permute.xlu0 0
      %547 = vperm.xlu0 %546, %v316
      %v548 = vpop.permute.xlu0 %547
      %551 = vset.pattern.permute.xlu0 0
      %552 = vperm.xlu0 %551, %v317
      %v553 = vpop.permute.xlu0 %552
      %556 = vset.pattern.permute.xlu0 0
      %557 = vperm.xlu0 %556, %v318
      %v558 = vpop.permute.xlu0 %557
      %561 = vset.pattern.permute.xlu0 0
      %562 = vperm.xlu0 %561, %v319
      %v563 = vpop.permute.xlu0 %562
      %566 = vset.pattern.permute.xlu0 0
      %567 = vperm.xlu0 %566, %v320
      %v568 = vpop.permute.xlu0 %567
      %571 = vset.pattern.permute.xlu0 0
      %572 = vperm.xlu0 %571, %v321
      %v573 = vpop.permute.xlu0 %572
      %576 = vset.pattern.permute.xlu0 0
      %577 = vperm.xlu0 %576, %v322
      %v578 = vpop.permute.xlu0 %577
      %581 = vset.pattern.permute.xlu0 0
      %582 = vperm.xlu0 %581, %v323
      %v583 = vpop.permute.xlu0 %582
      %586 = vset.pattern.permute.xlu0 0
      %587 = vperm.xlu0 %586, %v324
      %v588 = vpop.permute.xlu0 %587
      %591 = vset.pattern.permute.xlu0 0
      %592 = vperm.xlu0 %591, %v325
      %v593 = vpop.permute.xlu0 %592
      %596 = vset.pattern.permute.xlu0 0
      %597 = vperm.xlu0 %596, %v326
      %v598 = vpop.permute.xlu0 %597
      %601 = vset.pattern.permute.xlu0 0
      %602 = vperm.xlu0 %601, %v327
      %v603 = vpop.permute.xlu0 %602
      %606 = vset.pattern.permute.xlu0 0
      %607 = vperm.xlu0 %606, %v328
      %v608 = vpop.permute.xlu0 %607
      %611 = vset.pattern.permute.xlu0 0
      %612 = vperm.xlu0 %611, %v329
      %v613 = vpop.permute.xlu0 %612
      %616 = vset.pattern.permute.xlu0 0
      %617 = vperm.xlu0 %616, %v330
      %v618 = vpop.permute.xlu0 %617
      %621 = vset.pattern.permute.xlu0 0
      %622 = vperm.xlu0 %621, %v331
      %v623 = vpop.permute.xlu0 %622
      %626 = vset.pattern.permute.xlu0 0
      %627 = vperm.xlu0 %626, %v332
      %v628 = vpop.permute.xlu0 %627
      %631 = vset.pattern.permute.xlu0 0
      %632 = vperm.xlu0 %631, %v333
      %v633 = vpop.permute.xlu0 %632
      %636 = vset.pattern.permute.xlu0 0
      %637 = vperm.xlu0 %636, %v334
      %v638 = vpop.permute.xlu0 %637
      %641 = vset.pattern.permute.xlu0 0
      %642 = vperm.xlu0 %641, %v335
      %v643 = vpop.permute.xlu0 %642
      %646 = vset.pattern.permute.xlu0 0
      %647 = vperm.xlu0 %646, %v336
      %v648 = vpop.permute.xlu0 %647
      %651 = vset.pattern.permute.xlu0 0
      %652 = vperm.xlu0 %651, %v337
      %v653 = vpop.permute.xlu0 %652
      %656 = vset.pattern.permute.xlu0 0
      %657 = vperm.xlu0 %656, %v338
      %v658 = vpop.permute.xlu0 %657
      %661 = vset.pattern.permute.xlu0 0
      %662 = vperm.xlu0 %661, %v339
      %v663 = vpop.permute.xlu0 %662
      %666 = vset.pattern.permute.xlu0 0
      %667 = vperm.xlu0 %666, %v340
      %v668 = vpop.permute.xlu0 %667
      %671 = vset.pattern.permute.xlu0 0
      %672 = vperm.xlu0 %671, %v341
      %v673 = vpop.permute.xlu0 %672
      %676 = vset.pattern.permute.xlu0 0
      %677 = vperm.xlu0 %676, %v342
      %v678 = vpop.permute.xlu0 %677
      %681 = vset.pattern.permute.xlu0 0
      %682 = vperm.xlu0 %681, %v343
      %v683 = vpop.permute.xlu0 %682
      %686 = vset.pattern.permute.xlu0 0
      %687 = vperm.xlu0 %686, %v344
      %v688 = vpop.permute.xlu0 %687
      %691 = vset.pattern.permute.xlu0 0
      %692 = vperm.xlu0 %691, %v345
      %v693 = vpop.permute.xlu0 %692
      %696 = vset.pattern.permute.xlu0 0
      %697 = vperm.xlu0 %696, %v346
      %v698 = vpop.permute.xlu0 %697
      %701 = vset.pattern.permute.xlu0 0
      %702 = vperm.xlu0 %701, %v347
      %v703 = vpop.permute.xlu0 %702
      %706 = vset.pattern.permute.xlu0 0
      %707 = vperm.xlu0 %706, %v348
      %v708 = vpop.permute.xlu0 %707
      %711 = vset.pattern.permute.xlu0 0
      %712 = vperm.xlu0 %711, %v349
      %v713 = vpop.permute.xlu0 %712
      %716 = vset.pattern.permute.xlu0 0
      %717 = vperm.xlu0 %716, %v350
      %v718 = vpop.permute.xlu0 %717
      %721 = vset.pattern.permute.xlu0 0
      %722 = vperm.xlu0 %721, %v351
      %v723 = vpop.permute.xlu0 %722
      %726 = vset.pattern.permute.xlu0 0
      %727 = vperm.xlu0 %726, %v352
      %v728 = vpop.permute.xlu0 %727
      %731 = vset.pattern.permute.xlu0 0
      %732 = vperm.xlu0 %731, %v353
      %v733 = vpop.permute.xlu0 %732
      %736 = vset.pattern.permute.xlu0 0
      %737 = vperm.xlu0 %736, %v354
      %v738 = vpop.permute.xlu0 %737
      %741 = vset.pattern.permute.xlu0 0
      %742 = vperm.xlu0 %741, %v355
      %v743 = vpop.permute.xlu0 %742
      %746 = vset.pattern.permute.xlu0 0
      %747 = vperm.xlu0 %746, %v356
      %v748 = vpop.permute.xlu0 %747
      %751 = vset.pattern.permute.xlu0 0
      %752 = vperm.xlu0 %751, %v357
      %v753 = vpop.permute.xlu0 %752
      %756 = vset.pattern.permute.xlu0 0
      %757 = vperm.xlu0 %756, %v358
      %v758 = vpop.permute.xlu0 %757
      %761 = vset.pattern.permute.xlu0 0
      %762 = vperm.xlu0 %761, %v359
      %v763 = vpop.permute.xlu0 %762
      %766 = vset.pattern.permute.xlu0 0
      %767 = vperm.xlu0 %766, %v360
      %v768 = vpop.permute.xlu0 %767
      %771 = vset.pattern.permute.xlu0 0
      %772 = vperm.xlu0 %771, %v361
      %v773 = vpop.permute.xlu0 %772
      %776 = vset.pattern.permute.xlu0 0
      %777 = vperm.xlu0 %776, %v362
      %v778 = vpop.permute.xlu0 %777
      %781 = vset.pattern.permute.xlu0 0
      %782 = vperm.xlu0 %781, %v363
      %v783 = vpop.permute.xlu0 %782
      %786 = vset.pattern.permute.xlu0 0
      %787 = vperm.xlu0 %786, %v364
      %v788 = vpop.permute.xlu0 %787
      %791 = vset.pattern.permute.xlu0 0
      %792 = vperm.xlu0 %791, %v365
      %v793 = vpop.permute.xlu0 %792
      %796 = vset.pattern.permute.xlu0 0
      %797 = vperm.xlu0 %796, %v366
      %v798 = vpop.permute.xlu0 %797
      %801 = vset.pattern.permute.xlu0 0
      %802 = vperm.xlu0 %801, %v367
      %v803 = vpop.permute.xlu0 %802
      %806 = vset.pattern.permute.xlu0 0
      %807 = vperm.xlu0 %806, %v368
      %v808 = vpop.permute.xlu0 %807
      %811 = vset.pattern.permute.xlu0 0
      %812 = vperm.xlu0 %811, %v369
      %v813 = vpop.permute.xlu0 %812
      %816 = vset.pattern.permute.xlu0 0
      %817 = vperm.xlu0 %816, %v370
      %v818 = vpop.permute.xlu0 %817
      %821 = vset.pattern.permute.xlu0 0
      %822 = vperm.xlu0 %821, %v371
      %v823 = vpop.permute.xlu0 %822
      %826 = vset.pattern.permute.xlu0 0
      %827 = vperm.xlu0 %826, %v372
      %v828 = vpop.permute.xlu0 %827
      %831 = vset.pattern.permute.xlu0 0
      %832 = vperm.xlu0 %831, %v373
      %v833 = vpop.permute.xlu0 %832
      %836 = vset.pattern.permute.xlu0 0
      %837 = vperm.xlu0 %836, %v374
      %v838 = vpop.permute.xlu0 %837
      %841 = vset.pattern.permute.xlu0 0
      %842 = vperm.xlu0 %841, %v375
      %v843 = vpop.permute.xlu0 %842
      %846 = vset.pattern.permute.xlu0 0
      %847 = vperm.xlu0 %846, %v376
      %v848 = vpop.permute.xlu0 %847
      %851 = vset.pattern.permute.xlu0 0
      %852 = vperm.xlu0 %851, %v377
      %v853 = vpop.permute.xlu0 %852
      %856 = vset.pattern.permute.xlu0 0
      %857 = vperm.xlu0 %856, %v378
      %v858 = vpop.permute.xlu0 %857
      %861 = vset.pattern.permute.xlu0 0
      %862 = vperm.xlu0 %861, %v379
      %v863 = vpop.permute.xlu0 %862
      %866 = vset.pattern.permute.xlu0 0
      %867 = vperm.xlu0 %866, %v380
      %v868 = vpop.permute.xlu0 %867
      %871 = vset.pattern.permute.xlu0 0
      %872 = vperm.xlu0 %871, %v381
      %v873 = vpop.permute.xlu0 %872
      %876 = vset.pattern.permute.xlu0 0
      %877 = vperm.xlu0 %876, %v382
      %v878 = vpop.permute.xlu0 %877
      %881 = vset.pattern.permute.xlu0 0
      %882 = vperm.xlu0 %881, %v383
      %v883 = vpop.permute.xlu0 %882
      %886 = vset.pattern.permute.xlu0 0
      %887 = vperm.xlu0 %886, %v384
      %v888 = vpop.permute.xlu0 %887
      %891 = vset.pattern.permute.xlu0 0
      %892 = vperm.xlu0 %891, %v385
      %v893 = vpop.permute.xlu0 %892
      %896 = vset.pattern.permute.xlu0 0
      %897 = vperm.xlu0 %896, %v386
      %v898 = vpop.permute.xlu0 %897
      %901 = vset.pattern.permute.xlu0 0
      %902 = vperm.xlu0 %901, %v387
      %v903 = vpop.permute.xlu0 %902
      %906 = vset.pattern.permute.xlu0 0
      %907 = vperm.xlu0 %906, %v388
      %v908 = vpop.permute.xlu0 %907
      %911 = vset.pattern.permute.xlu0 0
      %912 = vperm.xlu0 %911, %v389
      %v913 = vpop.permute.xlu0 %912
      %916 = vset.pattern.permute.xlu0 0
      %917 = vperm.xlu0 %916, %v390
      %v918 = vpop.permute.xlu0 %917
      %921 = vset.pattern.permute.xlu0 0
      %922 = vperm.xlu0 %921, %v391
      %v923 = vpop.permute.xlu0 %922
      %926 = vset.pattern.permute.xlu0 0
      %927 = vperm.xlu0 %926, %v392
      %v928 = vpop.permute.xlu0 %927
      %931 = vset.pattern.permute.xlu0 0
      %932 = vperm.xlu0 %931, %v393
      %v933 = vpop.permute.xlu0 %932
      %936 = vset.pattern.permute.xlu0 0
      %937 = vperm.xlu0 %936, %v394
      %v938 = vpop.permute.xlu0 %937
      %941 = vset.pattern.permute.xlu0 0
      %942 = vperm.xlu0 %941, %v395
      %v943 = vpop.permute.xlu0 %942
      %946 = vset.pattern.permute.xlu0 0
      %947 = vperm.xlu0 %946, %v396
      %v948 = vpop.permute.xlu0 %947
      %951 = vset.pattern.permute.xlu0 0
      %952 = vperm.xlu0 %951, %v397
      %v953 = vpop.permute.xlu0 %952
      %956 = vset.pattern.permute.xlu0 0
      %957 = vperm.xlu0 %956, %v398
      %v958 = vpop.permute.xlu0 %957
      %961 = vset.pattern.permute.xlu0 0
      %962 = vperm.xlu0 %961, %v399
      %v963 = vpop.permute.xlu0 %962
      %966 = vset.pattern.permute.xlu0 0
      %967 = vperm.xlu0 %966, %v400
      %v968 = vpop.permute.xlu0 %967
      %971 = vset.pattern.permute.xlu0 0
      %972 = vperm.xlu0 %971, %v401
      %v973 = vpop.permute.xlu0 %972
      %976 = vset.pattern.permute.xlu0 0
      %977 = vperm.xlu0 %976, %v402
      %v978 = vpop.permute.xlu0 %977
      %981 = vset.pattern.permute.xlu0 0
      %982 = vperm.xlu0 %981, %v403
      %v983 = vpop.permute.xlu0 %982
      %986 = vset.pattern.permute.xlu0 0
      %987 = vperm.xlu0 %986, %v404
      %v988 = vpop.permute.xlu0 %987
      %991 = vset.pattern.permute.xlu0 0
      %992 = vperm.xlu0 %991, %v405
      %v993 = vpop.permute.xlu0 %992
      %996 = vset.pattern.permute.xlu0 0
      %997 = vperm.xlu0 %996, %v406
      %v998 = vpop.permute.xlu0 %997
      %1001 = vset.pattern.permute.xlu0 0
      %1002 = vperm.xlu0 %1001, %v407
      %v1003 = vpop.permute.xlu0 %1002
      %1006 = vset.pattern.permute.xlu0 0
      %1007 = vperm.xlu0 %1006, %v408
      %v1008 = vpop.permute.xlu0 %1007
      %1011 = vset.pattern.permute.xlu0 0
      %1012 = vperm.xlu0 %1011, %v409
      %v1013 = vpop.permute.xlu0 %1012
      %1016 = vset.pattern.permute.xlu0 0
      %1017 = vperm.xlu0 %1016, %v410
      %v1018 = vpop.permute.xlu0 %1017
      %1021 = vset.pattern.permute.xlu0 0
      %1022 = vperm.xlu0 %1021, %v411
      %v1023 = vpop.permute.xlu0 %1022
      %1026 = vset.pattern.permute.xlu0 0
      %1027 = vperm.xlu0 %1026, %v412
      %v1028 = vpop.permute.xlu0 %1027
      %1031 = vset.pattern.permute.xlu0 0
      %1032 = vperm.xlu0 %1031, %v413
      %v1033 = vpop.permute.xlu0 %1032
      %1036 = vset.pattern.permute.xlu0 0
      %1037 = vperm.xlu0 %1036, %v414
      %v1038 = vpop.permute.xlu0 %1037
      %1041 = vset.pattern.permute.xlu0 0
      %1042 = vperm.xlu0 %1041, %v415
      %v1043 = vpop.permute.xlu0 %1042
      %1046 = vset.pattern.permute.xlu0 0
      %1047 = vperm.xlu0 %1046, %v416
      %v1048 = vpop.permute.xlu0 %1047
      %1051 = vset.pattern.permute.xlu0 0
      %1052 = vperm.xlu0 %1051, %v417
      %v1053 = vpop.permute.xlu0 %1052
      %1056 = vset.pattern.permute.xlu0 0
      %1057 = vperm.xlu0 %1056, %v418
      %v1058 = vpop.permute.xlu0 %1057
      %1061 = vset.pattern.permute.xlu0 0
      %1062 = vperm.xlu0 %1061, %v419
      %v1063 = vpop.permute.xlu0 %1062
      %1066 = vset.pattern.permute.xlu0 0
      %1067 = vperm.xlu0 %1066, %v420
      %v1068 = vpop.permute.xlu0 %1067
      %1071 = vset.pattern.permute.xlu0 0
      %1072 = vperm.xlu0 %1071, %v421
      %v1073 = vpop.permute.xlu0 %1072
      %1076 = vset.pattern.permute.xlu0 0
      %1077 = vperm.xlu0 %1076, %v422
      %v1078 = vpop.permute.xlu0 %1077
      %1081 = vset.pattern.permute.xlu0 0
      %1082 = vperm.xlu0 %1081, %v423
      %v1083 = vpop.permute.xlu0 %1082
      %1086 = vset.pattern.permute.xlu0 0
      %1087 = vperm.xlu0 %1086, %v424
      %v1088 = vpop.permute.xlu0 %1087
      %1091 = vset.pattern.permute.xlu0 0
      %1092 = vperm.xlu0 %1091, %v425
      %v1093 = vpop.permute.xlu0 %1092
      %1096 = vset.pattern.permute.xlu0 0
      %1097 = vperm.xlu0 %1096, %v426
      %v1098 = vpop.permute.xlu0 %1097
      %1101 = vset.pattern.permute.xlu0 0
      %1102 = vperm.xlu0 %1101, %v427
      %v1103 = vpop.permute.xlu0 %1102
      %1106 = vset.pattern.permute.xlu0 0
      %1107 = vperm.xlu0 %1106, %v428
      %v1108 = vpop.permute.xlu0 %1107
      %1111 = vset.pattern.permute.xlu0 0
      %1112 = vperm.xlu0 %1111, %v429
      %v1113 = vpop.permute.xlu0 %1112
      %v1116 = vlaneseq
      %v1117 = vshrl.u32 %v1116, 7
      %v1118 = vsub.s32 2, %v1117
      %v1119 = vrot.slane %v292, %v1118
      %v1120 = vlaneseq
      %v1121 = vshrl.u32 %v1120, 7
      %v1122 = vsub.s32 6, %v1121
      %v1123 = vrot.slane %v292, %v1122
      %v1126 = vlaneseq
      %v1127 = vshrl.u32 %v1126, 7
      %v1128 = vsub.s32 2, %v1127
      %v1129 = vrot.slane %v1119, %v1128
      %v1130 = vlaneseq
      %v1131 = vshrl.u32 %v1130, 7
      %v1132 = vsub.s32 2, %v1131
      %v1133 = vrot.slane %v1123, %v1132
      %v1134 = vsub.f32 %v433, %v1129
      %v1135 = vsub.f32 %v433, %v1133
      %v1136 = vsub.f32 %v438, %v1129
      %v1137 = vsub.f32 %v438, %v1133
      %v1138 = vsub.f32 %v443, %v1129
      %v1139 = vsub.f32 %v443, %v1133
      %v1140 = vsub.f32 %v448, %v1129
      %v1141 = vsub.f32 %v448, %v1133
      %v1142 = vsub.f32 %v453, %v1129
      %v1143 = vsub.f32 %v453, %v1133
      %v1144 = vsub.f32 %v458, %v1129
      %v1145 = vsub.f32 %v458, %v1133
      %v1146 = vsub.f32 %v463, %v1129
      %v1147 = vsub.f32 %v463, %v1133
      %v1148 = vsub.f32 %v468, %v1129
      %v1149 = vsub.f32 %v468, %v1133
      %v1150 = vsub.f32 %v473, %v1129
      %v1151 = vsub.f32 %v473, %v1133
      %v1152 = vsub.f32 %v478, %v1129
      %v1153 = vsub.f32 %v478, %v1133
      %v1154 = vsub.f32 %v483, %v1129
      %v1155 = vsub.f32 %v483, %v1133
      %v1156 = vsub.f32 %v488, %v1129
      %v1157 = vsub.f32 %v488, %v1133
      %v1158 = vsub.f32 %v493, %v1129
      %v1159 = vsub.f32 %v493, %v1133
      %v1160 = vsub.f32 %v498, %v1129
      %v1161 = vsub.f32 %v498, %v1133
      %v1162 = vsub.f32 %v503, %v1129
      %v1163 = vsub.f32 %v503, %v1133
      %v1164 = vsub.f32 %v508, %v1129
      %v1165 = vsub.f32 %v508, %v1133
      %v1166 = vsub.f32 %v513, %v1129
      %v1167 = vsub.f32 %v513, %v1133
      %v1168 = vsub.f32 %v518, %v1129
      %v1169 = vsub.f32 %v518, %v1133
      %v1170 = vsub.f32 %v523, %v1129
      %v1171 = vsub.f32 %v523, %v1133
      %v1172 = vsub.f32 %v528, %v1129
      %v1173 = vsub.f32 %v528, %v1133
      %v1174 = vsub.f32 %v533, %v1129
      %v1175 = vsub.f32 %v533, %v1133
      %v1176 = vsub.f32 %v538, %v1129
      %v1177 = vsub.f32 %v538, %v1133
      %v1178 = vsub.f32 %v543, %v1129
      %v1179 = vsub.f32 %v543, %v1133
      %v1180 = vsub.f32 %v548, %v1129
      %v1181 = vsub.f32 %v548, %v1133
      %v1182 = vsub.f32 %v553, %v1129
      %v1183 = vsub.f32 %v553, %v1133
      %v1184 = vsub.f32 %v558, %v1129
      %v1185 = vsub.f32 %v558, %v1133
      %v1186 = vsub.f32 %v563, %v1129
      %v1187 = vsub.f32 %v563, %v1133
      %v1188 = vsub.f32 %v568, %v1129
      %v1189 = vsub.f32 %v568, %v1133
      %v1190 = vsub.f32 %v573, %v1129
      %v1191 = vsub.f32 %v573, %v1133
      %v1192 = vsub.f32 %v578, %v1129
      %v1193 = vsub.f32 %v578, %v1133
      %v1194 = vsub.f32 %v583, %v1129
      %v1195 = vsub.f32 %v583, %v1133
      %v1196 = vsub.f32 %v588, %v1129
      %v1197 = vsub.f32 %v588, %v1133
      %v1198 = vsub.f32 %v593, %v1129
      %v1199 = vsub.f32 %v593, %v1133
      %v1200 = vsub.f32 %v598, %v1129
      %v1201 = vsub.f32 %v598, %v1133
      %v1202 = vsub.f32 %v603, %v1129
      %v1203 = vsub.f32 %v603, %v1133
      %v1204 = vsub.f32 %v608, %v1129
      %v1205 = vsub.f32 %v608, %v1133
      %v1206 = vsub.f32 %v613, %v1129
      %v1207 = vsub.f32 %v613, %v1133
      %v1208 = vsub.f32 %v618, %v1129
      %v1209 = vsub.f32 %v618, %v1133
      %v1210 = vsub.f32 %v623, %v1129
      %v1211 = vsub.f32 %v623, %v1133
      %v1212 = vsub.f32 %v628, %v1129
      %v1213 = vsub.f32 %v628, %v1133
      %v1214 = vsub.f32 %v633, %v1129
      %v1215 = vsub.f32 %v633, %v1133
      %v1216 = vsub.f32 %v638, %v1129
      %v1217 = vsub.f32 %v638, %v1133
      %v1218 = vsub.f32 %v643, %v1129
      %v1219 = vsub.f32 %v643, %v1133
      %v1220 = vsub.f32 %v648, %v1129
      %v1221 = vsub.f32 %v648, %v1133
      %v1222 = vsub.f32 %v653, %v1129
      %v1223 = vsub.f32 %v653, %v1133
      %v1224 = vsub.f32 %v658, %v1129
      %v1225 = vsub.f32 %v658, %v1133
      %v1226 = vsub.f32 %v663, %v1129
      %v1227 = vsub.f32 %v663, %v1133
      %v1228 = vsub.f32 %v668, %v1129
      %v1229 = vsub.f32 %v668, %v1133
      %v1230 = vsub.f32 %v673, %v1129
      %v1231 = vsub.f32 %v673, %v1133
      %v1232 = vsub.f32 %v678, %v1129
      %v1233 = vsub.f32 %v678, %v1133
      %v1234 = vsub.f32 %v683, %v1129
      %v1235 = vsub.f32 %v683, %v1133
      %v1236 = vsub.f32 %v688, %v1129
      %v1237 = vsub.f32 %v688, %v1133
      %v1238 = vsub.f32 %v693, %v1129
      %v1239 = vsub.f32 %v693, %v1133
      %v1240 = vsub.f32 %v698, %v1129
      %v1241 = vsub.f32 %v698, %v1133
      %v1242 = vsub.f32 %v703, %v1129
      %v1243 = vsub.f32 %v703, %v1133
      %v1244 = vsub.f32 %v708, %v1129
      %v1245 = vsub.f32 %v708, %v1133
      %v1246 = vsub.f32 %v713, %v1129
      %v1247 = vsub.f32 %v713, %v1133
      %v1248 = vsub.f32 %v718, %v1129
      %v1249 = vsub.f32 %v718, %v1133
      %v1250 = vsub.f32 %v723, %v1129
      %v1251 = vsub.f32 %v723, %v1133
      %v1252 = vsub.f32 %v728, %v1129
      %v1253 = vsub.f32 %v728, %v1133
      %v1254 = vsub.f32 %v733, %v1129
      %v1255 = vsub.f32 %v733, %v1133
      %v1256 = vsub.f32 %v738, %v1129
      %v1257 = vsub.f32 %v738, %v1133
      %v1258 = vsub.f32 %v743, %v1129
      %v1259 = vsub.f32 %v743, %v1133
      %v1260 = vsub.f32 %v748, %v1129
      %v1261 = vsub.f32 %v748, %v1133
      %v1262 = vsub.f32 %v753, %v1129
      %v1263 = vsub.f32 %v753, %v1133
      %v1264 = vsub.f32 %v758, %v1129
      %v1265 = vsub.f32 %v758, %v1133
      %v1266 = vsub.f32 %v763, %v1129
      %v1267 = vsub.f32 %v763, %v1133
      %v1268 = vsub.f32 %v768, %v1129
      %v1269 = vsub.f32 %v768, %v1133
      %v1270 = vsub.f32 %v773, %v1129
      %v1271 = vsub.f32 %v773, %v1133
      %v1272 = vsub.f32 %v778, %v1129
      %v1273 = vsub.f32 %v778, %v1133
      %v1274 = vsub.f32 %v783, %v1129
      %v1275 = vsub.f32 %v783, %v1133
      %v1276 = vsub.f32 %v788, %v1129
      %v1277 = vsub.f32 %v788, %v1133
      %v1278 = vsub.f32 %v793, %v1129
      %v1279 = vsub.f32 %v793, %v1133
      %v1280 = vsub.f32 %v798, %v1129
      %v1281 = vsub.f32 %v798, %v1133
      %v1282 = vsub.f32 %v803, %v1129
      %v1283 = vsub.f32 %v803, %v1133
      %v1284 = vsub.f32 %v808, %v1129
      %v1285 = vsub.f32 %v808, %v1133
      %v1286 = vsub.f32 %v813, %v1129
      %v1287 = vsub.f32 %v813, %v1133
      %v1288 = vsub.f32 %v818, %v1129
      %v1289 = vsub.f32 %v818, %v1133
      %v1290 = vsub.f32 %v823, %v1129
      %v1291 = vsub.f32 %v823, %v1133
      %v1292 = vsub.f32 %v828, %v1129
      %v1293 = vsub.f32 %v828, %v1133
      %v1294 = vsub.f32 %v833, %v1129
      %v1295 = vsub.f32 %v833, %v1133
      %v1296 = vsub.f32 %v838, %v1129
      %v1297 = vsub.f32 %v838, %v1133
      %v1298 = vsub.f32 %v843, %v1129
      %v1299 = vsub.f32 %v843, %v1133
      %v1300 = vsub.f32 %v848, %v1129
      %v1301 = vsub.f32 %v848, %v1133
      %v1302 = vsub.f32 %v853, %v1129
      %v1303 = vsub.f32 %v853, %v1133
      %v1304 = vsub.f32 %v858, %v1129
      %v1305 = vsub.f32 %v858, %v1133
      %v1306 = vsub.f32 %v863, %v1129
      %v1307 = vsub.f32 %v863, %v1133
      %v1308 = vsub.f32 %v868, %v1129
      %v1309 = vsub.f32 %v868, %v1133
      %v1310 = vsub.f32 %v873, %v1129
      %v1311 = vsub.f32 %v873, %v1133
      %v1312 = vsub.f32 %v878, %v1129
      %v1313 = vsub.f32 %v878, %v1133
      %v1314 = vsub.f32 %v883, %v1129
      %v1315 = vsub.f32 %v883, %v1133
      %v1316 = vsub.f32 %v888, %v1129
      %v1317 = vsub.f32 %v888, %v1133
      %v1318 = vsub.f32 %v893, %v1129
      %v1319 = vsub.f32 %v893, %v1133
      %v1320 = vsub.f32 %v898, %v1129
      %v1321 = vsub.f32 %v898, %v1133
      %v1322 = vsub.f32 %v903, %v1129
      %v1323 = vsub.f32 %v903, %v1133
      %v1324 = vsub.f32 %v908, %v1129
      %v1325 = vsub.f32 %v908, %v1133
      %v1326 = vsub.f32 %v913, %v1129
      %v1327 = vsub.f32 %v913, %v1133
      %v1328 = vsub.f32 %v918, %v1129
      %v1329 = vsub.f32 %v918, %v1133
      %v1330 = vsub.f32 %v923, %v1129
      %v1331 = vsub.f32 %v923, %v1133
      %v1332 = vsub.f32 %v928, %v1129
      %v1333 = vsub.f32 %v928, %v1133
      %v1334 = vsub.f32 %v933, %v1129
      %v1335 = vsub.f32 %v933, %v1133
      %v1336 = vsub.f32 %v938, %v1129
      %v1337 = vsub.f32 %v938, %v1133
      %v1338 = vsub.f32 %v943, %v1129
      %v1339 = vsub.f32 %v943, %v1133
      %v1340 = vsub.f32 %v948, %v1129
      %v1341 = vsub.f32 %v948, %v1133
      %v1342 = vsub.f32 %v953, %v1129
      %v1343 = vsub.f32 %v953, %v1133
      %v1344 = vsub.f32 %v958, %v1129
      %v1345 = vsub.f32 %v958, %v1133
      %v1346 = vsub.f32 %v963, %v1129
      %v1347 = vsub.f32 %v963, %v1133
      %v1348 = vsub.f32 %v968, %v1129
      %v1349 = vsub.f32 %v968, %v1133
      %v1350 = vsub.f32 %v973, %v1129
      %v1351 = vsub.f32 %v973, %v1133
      %v1352 = vsub.f32 %v978, %v1129
      %v1353 = vsub.f32 %v978, %v1133
      %v1354 = vsub.f32 %v983, %v1129
      %v1355 = vsub.f32 %v983, %v1133
      %v1356 = vsub.f32 %v988, %v1129
      %v1357 = vsub.f32 %v988, %v1133
      %v1358 = vsub.f32 %v993, %v1129
      %v1359 = vsub.f32 %v993, %v1133
      %v1360 = vsub.f32 %v998, %v1129
      %v1361 = vsub.f32 %v998, %v1133
      %v1362 = vsub.f32 %v1003, %v1129
      %v1363 = vsub.f32 %v1003, %v1133
      %v1364 = vsub.f32 %v1008, %v1129
      %v1365 = vsub.f32 %v1008, %v1133
      %v1366 = vsub.f32 %v1013, %v1129
      %v1367 = vsub.f32 %v1013, %v1133
      %v1368 = vsub.f32 %v1018, %v1129
      %v1369 = vsub.f32 %v1018, %v1133
      %v1370 = vsub.f32 %v1023, %v1129
      %v1371 = vsub.f32 %v1023, %v1133
      %v1372 = vsub.f32 %v1028, %v1129
      %v1373 = vsub.f32 %v1028, %v1133
      %v1374 = vsub.f32 %v1033, %v1129
      %v1375 = vsub.f32 %v1033, %v1133
      %v1376 = vsub.f32 %v1038, %v1129
      %v1377 = vsub.f32 %v1038, %v1133
      %v1378 = vsub.f32 %v1043, %v1129
      %v1379 = vsub.f32 %v1043, %v1133
      %v1380 = vsub.f32 %v1048, %v1129
      %v1381 = vsub.f32 %v1048, %v1133
      %v1382 = vsub.f32 %v1053, %v1129
      %v1383 = vsub.f32 %v1053, %v1133
      %v1384 = vsub.f32 %v1058, %v1129
      %v1385 = vsub.f32 %v1058, %v1133
      %v1386 = vsub.f32 %v1063, %v1129
      %v1387 = vsub.f32 %v1063, %v1133
      %v1388 = vsub.f32 %v1068, %v1129
      %v1389 = vsub.f32 %v1068, %v1133
      %v1390 = vsub.f32 %v1073, %v1129
      %v1391 = vsub.f32 %v1073, %v1133
      %v1392 = vsub.f32 %v1078, %v1129
      %v1393 = vsub.f32 %v1078, %v1133
      %v1394 = vsub.f32 %v1083, %v1129
      %v1395 = vsub.f32 %v1083, %v1133
      %v1396 = vsub.f32 %v1088, %v1129
      %v1397 = vsub.f32 %v1088, %v1133
      %v1398 = vsub.f32 %v1093, %v1129
      %v1399 = vsub.f32 %v1093, %v1133
      %v1400 = vsub.f32 %v1098, %v1129
      %v1401 = vsub.f32 %v1098, %v1133
      %v1402 = vsub.f32 %v1103, %v1129
      %v1403 = vsub.f32 %v1103, %v1133
      %v1404 = vsub.f32 %v1108, %v1129
      %v1405 = vsub.f32 %v1108, %v1133
      %v1406 = vsub.f32 %v1113, %v1129
      %v1407 = vsub.f32 %v1113, %v1133
      %v1408 = vand.u32 2147483647, %v1134
      %v1409 = vand.u32 2147483647, %v1135
      %v1410 = vand.u32 2147483647, %v1136
      %v1411 = vand.u32 2147483647, %v1137
      %v1412 = vand.u32 2147483647, %v1138
      %v1413 = vand.u32 2147483647, %v1139
      %v1414 = vand.u32 2147483647, %v1140
      %v1415 = vand.u32 2147483647, %v1141
      %v1416 = vand.u32 2147483647, %v1142
      %v1417 = vand.u32 2147483647, %v1143
      %v1418 = vand.u32 2147483647, %v1144
      %v1419 = vand.u32 2147483647, %v1145
      %v1420 = vand.u32 2147483647, %v1146
      %v1421 = vand.u32 2147483647, %v1147
      %v1422 = vand.u32 2147483647, %v1148
      %v1423 = vand.u32 2147483647, %v1149
      %v1424 = vand.u32 2147483647, %v1150
      %v1425 = vand.u32 2147483647, %v1151
      %v1426 = vand.u32 2147483647, %v1152
      %v1427 = vand.u32 2147483647, %v1153
      %v1428 = vand.u32 2147483647, %v1154
      %v1429 = vand.u32 2147483647, %v1155
      %v1430 = vand.u32 2147483647, %v1156
      %v1431 = vand.u32 2147483647, %v1157
      %v1432 = vand.u32 2147483647, %v1158
      %v1433 = vand.u32 2147483647, %v1159
      %v1434 = vand.u32 2147483647, %v1160
      %v1435 = vand.u32 2147483647, %v1161
      %v1436 = vand.u32 2147483647, %v1162
      %v1437 = vand.u32 2147483647, %v1163
      %v1438 = vand.u32 2147483647, %v1164
      %v1439 = vand.u32 2147483647, %v1165
      %v1440 = vand.u32 2147483647, %v1166
      %v1441 = vand.u32 2147483647, %v1167
      %v1442 = vand.u32 2147483647, %v1168
      %v1443 = vand.u32 2147483647, %v1169
      %v1444 = vand.u32 2147483647, %v1170
      %v1445 = vand.u32 2147483647, %v1171
      %v1446 = vand.u32 2147483647, %v1172
      %v1447 = vand.u32 2147483647, %v1173
      %v1448 = vand.u32 2147483647, %v1174
      %v1449 = vand.u32 2147483647, %v1175
      %v1450 = vand.u32 2147483647, %v1176
      %v1451 = vand.u32 2147483647, %v1177
      %v1452 = vand.u32 2147483647, %v1178
      %v1453 = vand.u32 2147483647, %v1179
      %v1454 = vand.u32 2147483647, %v1180
      %v1455 = vand.u32 2147483647, %v1181
      %v1456 = vand.u32 2147483647, %v1182
      %v1457 = vand.u32 2147483647, %v1183
      %v1458 = vand.u32 2147483647, %v1184
      %v1459 = vand.u32 2147483647, %v1185
      %v1460 = vand.u32 2147483647, %v1186
      %v1461 = vand.u32 2147483647, %v1187
      %v1462 = vand.u32 2147483647, %v1188
      %v1463 = vand.u32 2147483647, %v1189
      %v1464 = vand.u32 2147483647, %v1190
      %v1465 = vand.u32 2147483647, %v1191
      %v1466 = vand.u32 2147483647, %v1192
      %v1467 = vand.u32 2147483647, %v1193
      %v1468 = vand.u32 2147483647, %v1194
      %v1469 = vand.u32 2147483647, %v1195
      %v1470 = vand.u32 2147483647, %v1196
      %v1471 = vand.u32 2147483647, %v1197
      %v1472 = vand.u32 2147483647, %v1198
      %v1473 = vand.u32 2147483647, %v1199
      %v1474 = vand.u32 2147483647, %v1200
      %v1475 = vand.u32 2147483647, %v1201
      %v1476 = vand.u32 2147483647, %v1202
      %v1477 = vand.u32 2147483647, %v1203
      %v1478 = vand.u32 2147483647, %v1204
      %v1479 = vand.u32 2147483647, %v1205
      %v1480 = vand.u32 2147483647, %v1206
      %v1481 = vand.u32 2147483647, %v1207
      %v1482 = vand.u32 2147483647, %v1208
      %v1483 = vand.u32 2147483647, %v1209
      %v1484 = vand.u32 2147483647, %v1210
      %v1485 = vand.u32 2147483647, %v1211
      %v1486 = vand.u32 2147483647, %v1212
      %v1487 = vand.u32 2147483647, %v1213
      %v1488 = vand.u32 2147483647, %v1214
      %v1489 = vand.u32 2147483647, %v1215
      %v1490 = vand.u32 2147483647, %v1216
      %v1491 = vand.u32 2147483647, %v1217
      %v1492 = vand.u32 2147483647, %v1218
      %v1493 = vand.u32 2147483647, %v1219
      %v1494 = vand.u32 2147483647, %v1220
      %v1495 = vand.u32 2147483647, %v1221
      %v1496 = vand.u32 2147483647, %v1222
      %v1497 = vand.u32 2147483647, %v1223
      %v1498 = vand.u32 2147483647, %v1224
      %v1499 = vand.u32 2147483647, %v1225
      %v1500 = vand.u32 2147483647, %v1226
      %v1501 = vand.u32 2147483647, %v1227
      %v1502 = vand.u32 2147483647, %v1228
      %v1503 = vand.u32 2147483647, %v1229
      %v1504 = vand.u32 2147483647, %v1230
      %v1505 = vand.u32 2147483647, %v1231
      %v1506 = vand.u32 2147483647, %v1232
      %v1507 = vand.u32 2147483647, %v1233
      %v1508 = vand.u32 2147483647, %v1234
      %v1509 = vand.u32 2147483647, %v1235
      %v1510 = vand.u32 2147483647, %v1236
      %v1511 = vand.u32 2147483647, %v1237
      %v1512 = vand.u32 2147483647, %v1238
      %v1513 = vand.u32 2147483647, %v1239
      %v1514 = vand.u32 2147483647, %v1240
      %v1515 = vand.u32 2147483647, %v1241
      %v1516 = vand.u32 2147483647, %v1242
      %v1517 = vand.u32 2147483647, %v1243
      %v1518 = vand.u32 2147483647, %v1244
      %v1519 = vand.u32 2147483647, %v1245
      %v1520 = vand.u32 2147483647, %v1246
      %v1521 = vand.u32 2147483647, %v1247
      %v1522 = vand.u32 2147483647, %v1248
      %v1523 = vand.u32 2147483647, %v1249
      %v1524 = vand.u32 2147483647, %v1250
      %v1525 = vand.u32 2147483647, %v1251
      %v1526 = vand.u32 2147483647, %v1252
      %v1527 = vand.u32 2147483647, %v1253
      %v1528 = vand.u32 2147483647, %v1254
      %v1529 = vand.u32 2147483647, %v1255
      %v1530 = vand.u32 2147483647, %v1256
      %v1531 = vand.u32 2147483647, %v1257
      %v1532 = vand.u32 2147483647, %v1258
      %v1533 = vand.u32 2147483647, %v1259
      %v1534 = vand.u32 2147483647, %v1260
      %v1535 = vand.u32 2147483647, %v1261
      %v1536 = vand.u32 2147483647, %v1262
      %v1537 = vand.u32 2147483647, %v1263
      %v1538 = vand.u32 2147483647, %v1264
      %v1539 = vand.u32 2147483647, %v1265
      %v1540 = vand.u32 2147483647, %v1266
      %v1541 = vand.u32 2147483647, %v1267
      %v1542 = vand.u32 2147483647, %v1268
      %v1543 = vand.u32 2147483647, %v1269
      %v1544 = vand.u32 2147483647, %v1270
      %v1545 = vand.u32 2147483647, %v1271
      %v1546 = vand.u32 2147483647, %v1272
      %v1547 = vand.u32 2147483647, %v1273
      %v1548 = vand.u32 2147483647, %v1274
      %v1549 = vand.u32 2147483647, %v1275
      %v1550 = vand.u32 2147483647, %v1276
      %v1551 = vand.u32 2147483647, %v1277
      %v1552 = vand.u32 2147483647, %v1278
      %v1553 = vand.u32 2147483647, %v1279
      %v1554 = vand.u32 2147483647, %v1280
      %v1555 = vand.u32 2147483647, %v1281
      %v1556 = vand.u32 2147483647, %v1282
      %v1557 = vand.u32 2147483647, %v1283
      %v1558 = vand.u32 2147483647, %v1284
      %v1559 = vand.u32 2147483647, %v1285
      %v1560 = vand.u32 2147483647, %v1286
      %v1561 = vand.u32 2147483647, %v1287
      %v1562 = vand.u32 2147483647, %v1288
      %v1563 = vand.u32 2147483647, %v1289
      %v1564 = vand.u32 2147483647, %v1290
      %v1565 = vand.u32 2147483647, %v1291
      %v1566 = vand.u32 2147483647, %v1292
      %v1567 = vand.u32 2147483647, %v1293
      %v1568 = vand.u32 2147483647, %v1294
      %v1569 = vand.u32 2147483647, %v1295
      %v1570 = vand.u32 2147483647, %v1296
      %v1571 = vand.u32 2147483647, %v1297
      %v1572 = vand.u32 2147483647, %v1298
      %v1573 = vand.u32 2147483647, %v1299
      %v1574 = vand.u32 2147483647, %v1300
      %v1575 = vand.u32 2147483647, %v1301
      %v1576 = vand.u32 2147483647, %v1302
      %v1577 = vand.u32 2147483647, %v1303
      %v1578 = vand.u32 2147483647, %v1304
      %v1579 = vand.u32 2147483647, %v1305
      %v1580 = vand.u32 2147483647, %v1306
      %v1581 = vand.u32 2147483647, %v1307
      %v1582 = vand.u32 2147483647, %v1308
      %v1583 = vand.u32 2147483647, %v1309
      %v1584 = vand.u32 2147483647, %v1310
      %v1585 = vand.u32 2147483647, %v1311
      %v1586 = vand.u32 2147483647, %v1312
      %v1587 = vand.u32 2147483647, %v1313
      %v1588 = vand.u32 2147483647, %v1314
      %v1589 = vand.u32 2147483647, %v1315
      %v1590 = vand.u32 2147483647, %v1316
      %v1591 = vand.u32 2147483647, %v1317
      %v1592 = vand.u32 2147483647, %v1318
      %v1593 = vand.u32 2147483647, %v1319
      %v1594 = vand.u32 2147483647, %v1320
      %v1595 = vand.u32 2147483647, %v1321
      %v1596 = vand.u32 2147483647, %v1322
      %v1597 = vand.u32 2147483647, %v1323
      %v1598 = vand.u32 2147483647, %v1324
      %v1599 = vand.u32 2147483647, %v1325
      %v1600 = vand.u32 2147483647, %v1326
      %v1601 = vand.u32 2147483647, %v1327
      %v1602 = vand.u32 2147483647, %v1328
      %v1603 = vand.u32 2147483647, %v1329
      %v1604 = vand.u32 2147483647, %v1330
      %v1605 = vand.u32 2147483647, %v1331
      %v1606 = vand.u32 2147483647, %v1332
      %v1607 = vand.u32 2147483647, %v1333
      %v1608 = vand.u32 2147483647, %v1334
      %v1609 = vand.u32 2147483647, %v1335
      %v1610 = vand.u32 2147483647, %v1336
      %v1611 = vand.u32 2147483647, %v1337
      %v1612 = vand.u32 2147483647, %v1338
      %v1613 = vand.u32 2147483647, %v1339
      %v1614 = vand.u32 2147483647, %v1340
      %v1615 = vand.u32 2147483647, %v1341
      %v1616 = vand.u32 2147483647, %v1342
      %v1617 = vand.u32 2147483647, %v1343
      %v1618 = vand.u32 2147483647, %v1344
      %v1619 = vand.u32 2147483647, %v1345
      %v1620 = vand.u32 2147483647, %v1346
      %v1621 = vand.u32 2147483647, %v1347
      %v1622 = vand.u32 2147483647, %v1348
      %v1623 = vand.u32 2147483647, %v1349
      %v1624 = vand.u32 2147483647, %v1350
      %v1625 = vand.u32 2147483647, %v1351
      %v1626 = vand.u32 2147483647, %v1352
      %v1627 = vand.u32 2147483647, %v1353
      %v1628 = vand.u32 2147483647, %v1354
      %v1629 = vand.u32 2147483647, %v1355
      %v1630 = vand.u32 2147483647, %v1356
      %v1631 = vand.u32 2147483647, %v1357
      %v1632 = vand.u32 2147483647, %v1358
      %v1633 = vand.u32 2147483647, %v1359
      %v1634 = vand.u32 2147483647, %v1360
      %v1635 = vand.u32 2147483647, %v1361
      %v1636 = vand.u32 2147483647, %v1362
      %v1637 = vand.u32 2147483647, %v1363
      %v1638 = vand.u32 2147483647, %v1364
      %v1639 = vand.u32 2147483647, %v1365
      %v1640 = vand.u32 2147483647, %v1366
      %v1641 = vand.u32 2147483647, %v1367
      %v1642 = vand.u32 2147483647, %v1368
      %v1643 = vand.u32 2147483647, %v1369
      %v1644 = vand.u32 2147483647, %v1370
      %v1645 = vand.u32 2147483647, %v1371
      %v1646 = vand.u32 2147483647, %v1372
      %v1647 = vand.u32 2147483647, %v1373
      %v1648 = vand.u32 2147483647, %v1374
      %v1649 = vand.u32 2147483647, %v1375
      %v1650 = vand.u32 2147483647, %v1376
      %v1651 = vand.u32 2147483647, %v1377
      %v1652 = vand.u32 2147483647, %v1378
      %v1653 = vand.u32 2147483647, %v1379
      %v1654 = vand.u32 2147483647, %v1380
      %v1655 = vand.u32 2147483647, %v1381
      %v1656 = vand.u32 2147483647, %v1382
      %v1657 = vand.u32 2147483647, %v1383
      %v1658 = vand.u32 2147483647, %v1384
      %v1659 = vand.u32 2147483647, %v1385
      %v1660 = vand.u32 2147483647, %v1386
      %v1661 = vand.u32 2147483647, %v1387
      %v1662 = vand.u32 2147483647, %v1388
      %v1663 = vand.u32 2147483647, %v1389
      %v1664 = vand.u32 2147483647, %v1390
      %v1665 = vand.u32 2147483647, %v1391
      %v1666 = vand.u32 2147483647, %v1392
      %v1667 = vand.u32 2147483647, %v1393
      %v1668 = vand.u32 2147483647, %v1394
      %v1669 = vand.u32 2147483647, %v1395
      %v1670 = vand.u32 2147483647, %v1396
      %v1671 = vand.u32 2147483647, %v1397
      %v1672 = vand.u32 2147483647, %v1398
      %v1673 = vand.u32 2147483647, %v1399
      %v1674 = vand.u32 2147483647, %v1400
      %v1675 = vand.u32 2147483647, %v1401
      %v1676 = vand.u32 2147483647, %v1402
      %v1677 = vand.u32 2147483647, %v1403
      %v1678 = vand.u32 2147483647, %v1404
      %v1679 = vand.u32 2147483647, %v1405
      %v1680 = vand.u32 2147483647, %v1406
      %v1681 = vand.u32 2147483647, %v1407
      %v1682 = vsub.f32 1.0, %v1408
      %v1683 = vsub.f32 1.0, %v1409
      %v1684 = vsub.f32 1.0, %v1410
      %v1685 = vsub.f32 1.0, %v1411
      %v1686 = vsub.f32 1.0, %v1412
      %v1687 = vsub.f32 1.0, %v1413
      %v1688 = vsub.f32 1.0, %v1414
      %v1689 = vsub.f32 1.0, %v1415
      %v1690 = vsub.f32 1.0, %v1416
      %v1691 = vsub.f32 1.0, %v1417
      %v1692 = vsub.f32 1.0, %v1418
      %v1693 = vsub.f32 1.0, %v1419
      %v1694 = vsub.f32 1.0, %v1420
      %v1695 = vsub.f32 1.0, %v1421
      %v1696 = vsub.f32 1.0, %v1422
      %v1697 = vsub.f32 1.0, %v1423
      %v1698 = vsub.f32 1.0, %v1424
      %v1699 = vsub.f32 1.0, %v1425
      %v1700 = vsub.f32 1.0, %v1426
      %v1701 = vsub.f32 1.0, %v1427
      %v1702 = vsub.f32 1.0, %v1428
      %v1703 = vsub.f32 1.0, %v1429
      %v1704 = vsub.f32 1.0, %v1430
      %v1705 = vsub.f32 1.0, %v1431
      %v1706 = vsub.f32 1.0, %v1432
      %v1707 = vsub.f32 1.0, %v1433
      %v1708 = vsub.f32 1.0, %v1434
      %v1709 = vsub.f32 1.0, %v1435
      %v1710 = vsub.f32 1.0, %v1436
      %v1711 = vsub.f32 1.0, %v1437
      %v1712 = vsub.f32 1.0, %v1438
      %v1713 = vsub.f32 1.0, %v1439
      %v1714 = vsub.f32 1.0, %v1440
      %v1715 = vsub.f32 1.0, %v1441
      %v1716 = vsub.f32 1.0, %v1442
      %v1717 = vsub.f32 1.0, %v1443
      %v1718 = vsub.f32 1.0, %v1444
      %v1719 = vsub.f32 1.0, %v1445
      %v1720 = vsub.f32 1.0, %v1446
      %v1721 = vsub.f32 1.0, %v1447
      %v1722 = vsub.f32 1.0, %v1448
      %v1723 = vsub.f32 1.0, %v1449
      %v1724 = vsub.f32 1.0, %v1450
      %v1725 = vsub.f32 1.0, %v1451
      %v1726 = vsub.f32 1.0, %v1452
      %v1727 = vsub.f32 1.0, %v1453
      %v1728 = vsub.f32 1.0, %v1454
      %v1729 = vsub.f32 1.0, %v1455
      %v1730 = vsub.f32 1.0, %v1456
      %v1731 = vsub.f32 1.0, %v1457
      %v1732 = vsub.f32 1.0, %v1458
      %v1733 = vsub.f32 1.0, %v1459
      %v1734 = vsub.f32 1.0, %v1460
      %v1735 = vsub.f32 1.0, %v1461
      %v1736 = vsub.f32 1.0, %v1462
      %v1737 = vsub.f32 1.0, %v1463
      %v1738 = vsub.f32 1.0, %v1464
      %v1739 = vsub.f32 1.0, %v1465
      %v1740 = vsub.f32 1.0, %v1466
      %v1741 = vsub.f32 1.0, %v1467
      %v1742 = vsub.f32 1.0, %v1468
      %v1743 = vsub.f32 1.0, %v1469
      %v1744 = vsub.f32 1.0, %v1470
      %v1745 = vsub.f32 1.0, %v1471
      %v1746 = vsub.f32 1.0, %v1472
      %v1747 = vsub.f32 1.0, %v1473
      %v1748 = vsub.f32 1.0, %v1474
      %v1749 = vsub.f32 1.0, %v1475
      %v1750 = vsub.f32 1.0, %v1476
      %v1751 = vsub.f32 1.0, %v1477
      %v1752 = vsub.f32 1.0, %v1478
      %v1753 = vsub.f32 1.0, %v1479
      %v1754 = vsub.f32 1.0, %v1480
      %v1755 = vsub.f32 1.0, %v1481
      %v1756 = vsub.f32 1.0, %v1482
      %v1757 = vsub.f32 1.0, %v1483
      %v1758 = vsub.f32 1.0, %v1484
      %v1759 = vsub.f32 1.0, %v1485
      %v1760 = vsub.f32 1.0, %v1486
      %v1761 = vsub.f32 1.0, %v1487
      %v1762 = vsub.f32 1.0, %v1488
      %v1763 = vsub.f32 1.0, %v1489
      %v1764 = vsub.f32 1.0, %v1490
      %v1765 = vsub.f32 1.0, %v1491
      %v1766 = vsub.f32 1.0, %v1492
      %v1767 = vsub.f32 1.0, %v1493
      %v1768 = vsub.f32 1.0, %v1494
      %v1769 = vsub.f32 1.0, %v1495
      %v1770 = vsub.f32 1.0, %v1496
      %v1771 = vsub.f32 1.0, %v1497
      %v1772 = vsub.f32 1.0, %v1498
      %v1773 = vsub.f32 1.0, %v1499
      %v1774 = vsub.f32 1.0, %v1500
      %v1775 = vsub.f32 1.0, %v1501
      %v1776 = vsub.f32 1.0, %v1502
      %v1777 = vsub.f32 1.0, %v1503
      %v1778 = vsub.f32 1.0, %v1504
      %v1779 = vsub.f32 1.0, %v1505
      %v1780 = vsub.f32 1.0, %v1506
      %v1781 = vsub.f32 1.0, %v1507
      %v1782 = vsub.f32 1.0, %v1508
      %v1783 = vsub.f32 1.0, %v1509
      %v1784 = vsub.f32 1.0, %v1510
      %v1785 = vsub.f32 1.0, %v1511
      %v1786 = vsub.f32 1.0, %v1512
      %v1787 = vsub.f32 1.0, %v1513
      %v1788 = vsub.f32 1.0, %v1514
      %v1789 = vsub.f32 1.0, %v1515
      %v1790 = vsub.f32 1.0, %v1516
      %v1791 = vsub.f32 1.0, %v1517
      %v1792 = vsub.f32 1.0, %v1518
      %v1793 = vsub.f32 1.0, %v1519
      %v1794 = vsub.f32 1.0, %v1520
      %v1795 = vsub.f32 1.0, %v1521
      %v1796 = vsub.f32 1.0, %v1522
      %v1797 = vsub.f32 1.0, %v1523
      %v1798 = vsub.f32 1.0, %v1524
      %v1799 = vsub.f32 1.0, %v1525
      %v1800 = vsub.f32 1.0, %v1526
      %v1801 = vsub.f32 1.0, %v1527
      %v1802 = vsub.f32 1.0, %v1528
      %v1803 = vsub.f32 1.0, %v1529
      %v1804 = vsub.f32 1.0, %v1530
      %v1805 = vsub.f32 1.0, %v1531
      %v1806 = vsub.f32 1.0, %v1532
      %v1807 = vsub.f32 1.0, %v1533
      %v1808 = vsub.f32 1.0, %v1534
      %v1809 = vsub.f32 1.0, %v1535
      %v1810 = vsub.f32 1.0, %v1536
      %v1811 = vsub.f32 1.0, %v1537
      %v1812 = vsub.f32 1.0, %v1538
      %v1813 = vsub.f32 1.0, %v1539
      %v1814 = vsub.f32 1.0, %v1540
      %v1815 = vsub.f32 1.0, %v1541
      %v1816 = vsub.f32 1.0, %v1542
      %v1817 = vsub.f32 1.0, %v1543
      %v1818 = vsub.f32 1.0, %v1544
      %v1819 = vsub.f32 1.0, %v1545
      %v1820 = vsub.f32 1.0, %v1546
      %v1821 = vsub.f32 1.0, %v1547
      %v1822 = vsub.f32 1.0, %v1548
      %v1823 = vsub.f32 1.0, %v1549
      %v1824 = vsub.f32 1.0, %v1550
      %v1825 = vsub.f32 1.0, %v1551
      %v1826 = vsub.f32 1.0, %v1552
      %v1827 = vsub.f32 1.0, %v1553
      %v1828 = vsub.f32 1.0, %v1554
      %v1829 = vsub.f32 1.0, %v1555
      %v1830 = vsub.f32 1.0, %v1556
      %v1831 = vsub.f32 1.0, %v1557
      %v1832 = vsub.f32 1.0, %v1558
      %v1833 = vsub.f32 1.0, %v1559
      %v1834 = vsub.f32 1.0, %v1560
      %v1835 = vsub.f32 1.0, %v1561
      %v1836 = vsub.f32 1.0, %v1562
      %v1837 = vsub.f32 1.0, %v1563
      %v1838 = vsub.f32 1.0, %v1564
      %v1839 = vsub.f32 1.0, %v1565
      %v1840 = vsub.f32 1.0, %v1566
      %v1841 = vsub.f32 1.0, %v1567
      %v1842 = vsub.f32 1.0, %v1568
      %v1843 = vsub.f32 1.0, %v1569
      %v1844 = vsub.f32 1.0, %v1570
      %v1845 = vsub.f32 1.0, %v1571
      %v1846 = vsub.f32 1.0, %v1572
      %v1847 = vsub.f32 1.0, %v1573
      %v1848 = vsub.f32 1.0, %v1574
      %v1849 = vsub.f32 1.0, %v1575
      %v1850 = vsub.f32 1.0, %v1576
      %v1851 = vsub.f32 1.0, %v1577
      %v1852 = vsub.f32 1.0, %v1578
      %v1853 = vsub.f32 1.0, %v1579
      %v1854 = vsub.f32 1.0, %v1580
      %v1855 = vsub.f32 1.0, %v1581
      %v1856 = vsub.f32 1.0, %v1582
      %v1857 = vsub.f32 1.0, %v1583
      %v1858 = vsub.f32 1.0, %v1584
      %v1859 = vsub.f32 1.0, %v1585
      %v1860 = vsub.f32 1.0, %v1586
      %v1861 = vsub.f32 1.0, %v1587
      %v1862 = vsub.f32 1.0, %v1588
      %v1863 = vsub.f32 1.0, %v1589
      %v1864 = vsub.f32 1.0, %v1590
      %v1865 = vsub.f32 1.0, %v1591
      %v1866 = vsub.f32 1.0, %v1592
      %v1867 = vsub.f32 1.0, %v1593
      %v1868 = vsub.f32 1.0, %v1594
      %v1869 = vsub.f32 1.0, %v1595
      %v1870 = vsub.f32 1.0, %v1596
      %v1871 = vsub.f32 1.0, %v1597
      %v1872 = vsub.f32 1.0, %v1598
      %v1873 = vsub.f32 1.0, %v1599
      %v1874 = vsub.f32 1.0, %v1600
      %v1875 = vsub.f32 1.0, %v1601
      %v1876 = vsub.f32 1.0, %v1602
      %v1877 = vsub.f32 1.0, %v1603
      %v1878 = vsub.f32 1.0, %v1604
      %v1879 = vsub.f32 1.0, %v1605
      %v1880 = vsub.f32 1.0, %v1606
      %v1881 = vsub.f32 1.0, %v1607
      %v1882 = vsub.f32 1.0, %v1608
      %v1883 = vsub.f32 1.0, %v1609
      %v1884 = vsub.f32 1.0, %v1610
      %v1885 = vsub.f32 1.0, %v1611
      %v1886 = vsub.f32 1.0, %v1612
      %v1887 = vsub.f32 1.0, %v1613
      %v1888 = vsub.f32 1.0, %v1614
      %v1889 = vsub.f32 1.0, %v1615
      %v1890 = vsub.f32 1.0, %v1616
      %v1891 = vsub.f32 1.0, %v1617
      %v1892 = vsub.f32 1.0, %v1618
      %v1893 = vsub.f32 1.0, %v1619
      %v1894 = vsub.f32 1.0, %v1620
      %v1895 = vsub.f32 1.0, %v1621
      %v1896 = vsub.f32 1.0, %v1622
      %v1897 = vsub.f32 1.0, %v1623
      %v1898 = vsub.f32 1.0, %v1624
      %v1899 = vsub.f32 1.0, %v1625
      %v1900 = vsub.f32 1.0, %v1626
      %v1901 = vsub.f32 1.0, %v1627
      %v1902 = vsub.f32 1.0, %v1628
      %v1903 = vsub.f32 1.0, %v1629
      %v1904 = vsub.f32 1.0, %v1630
      %v1905 = vsub.f32 1.0, %v1631
      %v1906 = vsub.f32 1.0, %v1632
      %v1907 = vsub.f32 1.0, %v1633
      %v1908 = vsub.f32 1.0, %v1634
      %v1909 = vsub.f32 1.0, %v1635
      %v1910 = vsub.f32 1.0, %v1636
      %v1911 = vsub.f32 1.0, %v1637
      %v1912 = vsub.f32 1.0, %v1638
      %v1913 = vsub.f32 1.0, %v1639
      %v1914 = vsub.f32 1.0, %v1640
      %v1915 = vsub.f32 1.0, %v1641
      %v1916 = vsub.f32 1.0, %v1642
      %v1917 = vsub.f32 1.0, %v1643
      %v1918 = vsub.f32 1.0, %v1644
      %v1919 = vsub.f32 1.0, %v1645
      %v1920 = vsub.f32 1.0, %v1646
      %v1921 = vsub.f32 1.0, %v1647
      %v1922 = vsub.f32 1.0, %v1648
      %v1923 = vsub.f32 1.0, %v1649
      %v1924 = vsub.f32 1.0, %v1650
      %v1925 = vsub.f32 1.0, %v1651
      %v1926 = vsub.f32 1.0, %v1652
      %v1927 = vsub.f32 1.0, %v1653
      %v1928 = vsub.f32 1.0, %v1654
      %v1929 = vsub.f32 1.0, %v1655
      %v1930 = vsub.f32 1.0, %v1656
      %v1931 = vsub.f32 1.0, %v1657
      %v1932 = vsub.f32 1.0, %v1658
      %v1933 = vsub.f32 1.0, %v1659
      %v1934 = vsub.f32 1.0, %v1660
      %v1935 = vsub.f32 1.0, %v1661
      %v1936 = vsub.f32 1.0, %v1662
      %v1937 = vsub.f32 1.0, %v1663
      %v1938 = vsub.f32 1.0, %v1664
      %v1939 = vsub.f32 1.0, %v1665
      %v1940 = vsub.f32 1.0, %v1666
      %v1941 = vsub.f32 1.0, %v1667
      %v1942 = vsub.f32 1.0, %v1668
      %v1943 = vsub.f32 1.0, %v1669
      %v1944 = vsub.f32 1.0, %v1670
      %v1945 = vsub.f32 1.0, %v1671
      %v1946 = vsub.f32 1.0, %v1672
      %v1947 = vsub.f32 1.0, %v1673
      %v1948 = vsub.f32 1.0, %v1674
      %v1949 = vsub.f32 1.0, %v1675
      %v1950 = vsub.f32 1.0, %v1676
      %v1951 = vsub.f32 1.0, %v1677
      %v1952 = vsub.f32 1.0, %v1678
      %v1953 = vsub.f32 1.0, %v1679
      %v1954 = vsub.f32 1.0, %v1680
      %v1955 = vsub.f32 1.0, %v1681
      %v1956 = vmax.f32 %v1682, 0.0
      %v1957 = vmax.f32 %v1683, 0.0
      %v1958 = vmax.f32 %v1684, 0.0
      %v1959 = vmax.f32 %v1685, 0.0
      %v1960 = vmax.f32 %v1686, 0.0
      %v1961 = vmax.f32 %v1687, 0.0
      %v1962 = vmax.f32 %v1688, 0.0
      %v1963 = vmax.f32 %v1689, 0.0
      %v1964 = vmax.f32 %v1690, 0.0
      %v1965 = vmax.f32 %v1691, 0.0
      %v1966 = vmax.f32 %v1692, 0.0
      %v1967 = vmax.f32 %v1693, 0.0
      %v1968 = vmax.f32 %v1694, 0.0
      %v1969 = vmax.f32 %v1695, 0.0
      %v1970 = vmax.f32 %v1696, 0.0
      %v1971 = vmax.f32 %v1697, 0.0
      %v1972 = vmax.f32 %v1698, 0.0
      %v1973 = vmax.f32 %v1699, 0.0
      %v1974 = vmax.f32 %v1700, 0.0
      %v1975 = vmax.f32 %v1701, 0.0
      %v1976 = vmax.f32 %v1702, 0.0
      %v1977 = vmax.f32 %v1703, 0.0
      %v1978 = vmax.f32 %v1704, 0.0
      %v1979 = vmax.f32 %v1705, 0.0
      %v1980 = vmax.f32 %v1706, 0.0
      %v1981 = vmax.f32 %v1707, 0.0
      %v1982 = vmax.f32 %v1708, 0.0
      %v1983 = vmax.f32 %v1709, 0.0
      %v1984 = vmax.f32 %v1710, 0.0
      %v1985 = vmax.f32 %v1711, 0.0
      %v1986 = vmax.f32 %v1712, 0.0
      %v1987 = vmax.f32 %v1713, 0.0
      %v1988 = vmax.f32 %v1714, 0.0
      %v1989 = vmax.f32 %v1715, 0.0
      %v1990 = vmax.f32 %v1716, 0.0
      %v1991 = vmax.f32 %v1717, 0.0
      %v1992 = vmax.f32 %v1718, 0.0
      %v1993 = vmax.f32 %v1719, 0.0
      %v1994 = vmax.f32 %v1720, 0.0
      %v1995 = vmax.f32 %v1721, 0.0
      %v1996 = vmax.f32 %v1722, 0.0
      %v1997 = vmax.f32 %v1723, 0.0
      %v1998 = vmax.f32 %v1724, 0.0
      %v1999 = vmax.f32 %v1725, 0.0
      %v2000 = vmax.f32 %v1726, 0.0
      %v2001 = vmax.f32 %v1727, 0.0
      %v2002 = vmax.f32 %v1728, 0.0
      %v2003 = vmax.f32 %v1729, 0.0
      %v2004 = vmax.f32 %v1730, 0.0
      %v2005 = vmax.f32 %v1731, 0.0
      %v2006 = vmax.f32 %v1732, 0.0
      %v2007 = vmax.f32 %v1733, 0.0
      %v2008 = vmax.f32 %v1734, 0.0
      %v2009 = vmax.f32 %v1735, 0.0
      %v2010 = vmax.f32 %v1736, 0.0
      %v2011 = vmax.f32 %v1737, 0.0
      %v2012 = vmax.f32 %v1738, 0.0
      %v2013 = vmax.f32 %v1739, 0.0
      %v2014 = vmax.f32 %v1740, 0.0
      %v2015 = vmax.f32 %v1741, 0.0
      %v2016 = vmax.f32 %v1742, 0.0
      %v2017 = vmax.f32 %v1743, 0.0
      %v2018 = vmax.f32 %v1744, 0.0
      %v2019 = vmax.f32 %v1745, 0.0
      %v2020 = vmax.f32 %v1746, 0.0
      %v2021 = vmax.f32 %v1747, 0.0
      %v2022 = vmax.f32 %v1748, 0.0
      %v2023 = vmax.f32 %v1749, 0.0
      %v2024 = vmax.f32 %v1750, 0.0
      %v2025 = vmax.f32 %v1751, 0.0
      %v2026 = vmax.f32 %v1752, 0.0
      %v2027 = vmax.f32 %v1753, 0.0
      %v2028 = vmax.f32 %v1754, 0.0
      %v2029 = vmax.f32 %v1755, 0.0
      %v2030 = vmax.f32 %v1756, 0.0
      %v2031 = vmax.f32 %v1757, 0.0
      %v2032 = vmax.f32 %v1758, 0.0
      %v2033 = vmax.f32 %v1759, 0.0
      %v2034 = vmax.f32 %v1760, 0.0
      %v2035 = vmax.f32 %v1761, 0.0
      %v2036 = vmax.f32 %v1762, 0.0
      %v2037 = vmax.f32 %v1763, 0.0
      %v2038 = vmax.f32 %v1764, 0.0
      %v2039 = vmax.f32 %v1765, 0.0
      %v2040 = vmax.f32 %v1766, 0.0
      %v2041 = vmax.f32 %v1767, 0.0
      %v2042 = vmax.f32 %v1768, 0.0
      %v2043 = vmax.f32 %v1769, 0.0
      %v2044 = vmax.f32 %v1770, 0.0
      %v2045 = vmax.f32 %v1771, 0.0
      %v2046 = vmax.f32 %v1772, 0.0
      %v2047 = vmax.f32 %v1773, 0.0
      %v2048 = vmax.f32 %v1774, 0.0
      %v2049 = vmax.f32 %v1775, 0.0
      %v2050 = vmax.f32 %v1776, 0.0
      %v2051 = vmax.f32 %v1777, 0.0
      %v2052 = vmax.f32 %v1778, 0.0
      %v2053 = vmax.f32 %v1779, 0.0
      %v2054 = vmax.f32 %v1780, 0.0
      %v2055 = vmax.f32 %v1781, 0.0
      %v2056 = vmax.f32 %v1782, 0.0
      %v2057 = vmax.f32 %v1783, 0.0
      %v2058 = vmax.f32 %v1784, 0.0
      %v2059 = vmax.f32 %v1785, 0.0
      %v2060 = vmax.f32 %v1786, 0.0
      %v2061 = vmax.f32 %v1787, 0.0
      %v2062 = vmax.f32 %v1788, 0.0
      %v2063 = vmax.f32 %v1789, 0.0
      %v2064 = vmax.f32 %v1790, 0.0
      %v2065 = vmax.f32 %v1791, 0.0
      %v2066 = vmax.f32 %v1792, 0.0
      %v2067 = vmax.f32 %v1793, 0.0
      %v2068 = vmax.f32 %v1794, 0.0
      %v2069 = vmax.f32 %v1795, 0.0
      %v2070 = vmax.f32 %v1796, 0.0
      %v2071 = vmax.f32 %v1797, 0.0
      %v2072 = vmax.f32 %v1798, 0.0
      %v2073 = vmax.f32 %v1799, 0.0
      %v2074 = vmax.f32 %v1800, 0.0
      %v2075 = vmax.f32 %v1801, 0.0
      %v2076 = vmax.f32 %v1802, 0.0
      %v2077 = vmax.f32 %v1803, 0.0
      %v2078 = vmax.f32 %v1804, 0.0
      %v2079 = vmax.f32 %v1805, 0.0
      %v2080 = vmax.f32 %v1806, 0.0
      %v2081 = vmax.f32 %v1807, 0.0
      %v2082 = vmax.f32 %v1808, 0.0
      %v2083 = vmax.f32 %v1809, 0.0
      %v2084 = vmax.f32 %v1810, 0.0
      %v2085 = vmax.f32 %v1811, 0.0
      %v2086 = vmax.f32 %v1812, 0.0
      %v2087 = vmax.f32 %v1813, 0.0
      %v2088 = vmax.f32 %v1814, 0.0
      %v2089 = vmax.f32 %v1815, 0.0
      %v2090 = vmax.f32 %v1816, 0.0
      %v2091 = vmax.f32 %v1817, 0.0
      %v2092 = vmax.f32 %v1818, 0.0
      %v2093 = vmax.f32 %v1819, 0.0
      %v2094 = vmax.f32 %v1820, 0.0
      %v2095 = vmax.f32 %v1821, 0.0
      %v2096 = vmax.f32 %v1822, 0.0
      %v2097 = vmax.f32 %v1823, 0.0
      %v2098 = vmax.f32 %v1824, 0.0
      %v2099 = vmax.f32 %v1825, 0.0
      %v2100 = vmax.f32 %v1826, 0.0
      %v2101 = vmax.f32 %v1827, 0.0
      %v2102 = vmax.f32 %v1828, 0.0
      %v2103 = vmax.f32 %v1829, 0.0
      %v2104 = vmax.f32 %v1830, 0.0
      %v2105 = vmax.f32 %v1831, 0.0
      %v2106 = vmax.f32 %v1832, 0.0
      %v2107 = vmax.f32 %v1833, 0.0
      %v2108 = vmax.f32 %v1834, 0.0
      %v2109 = vmax.f32 %v1835, 0.0
      %v2110 = vmax.f32 %v1836, 0.0
      %v2111 = vmax.f32 %v1837, 0.0
      %v2112 = vmax.f32 %v1838, 0.0
      %v2113 = vmax.f32 %v1839, 0.0
      %v2114 = vmax.f32 %v1840, 0.0
      %v2115 = vmax.f32 %v1841, 0.0
      %v2116 = vmax.f32 %v1842, 0.0
      %v2117 = vmax.f32 %v1843, 0.0
      %v2118 = vmax.f32 %v1844, 0.0
      %v2119 = vmax.f32 %v1845, 0.0
      %v2120 = vmax.f32 %v1846, 0.0
      %v2121 = vmax.f32 %v1847, 0.0
      %v2122 = vmax.f32 %v1848, 0.0
      %v2123 = vmax.f32 %v1849, 0.0
      %v2124 = vmax.f32 %v1850, 0.0
      %v2125 = vmax.f32 %v1851, 0.0
      %v2126 = vmax.f32 %v1852, 0.0
      %v2127 = vmax.f32 %v1853, 0.0
      %v2128 = vmax.f32 %v1854, 0.0
      %v2129 = vmax.f32 %v1855, 0.0
      %v2130 = vmax.f32 %v1856, 0.0
      %v2131 = vmax.f32 %v1857, 0.0
      %v2132 = vmax.f32 %v1858, 0.0
      %v2133 = vmax.f32 %v1859, 0.0
      %v2134 = vmax.f32 %v1860, 0.0
      %v2135 = vmax.f32 %v1861, 0.0
      %v2136 = vmax.f32 %v1862, 0.0
      %v2137 = vmax.f32 %v1863, 0.0
      %v2138 = vmax.f32 %v1864, 0.0
      %v2139 = vmax.f32 %v1865, 0.0
      %v2140 = vmax.f32 %v1866, 0.0
      %v2141 = vmax.f32 %v1867, 0.0
      %v2142 = vmax.f32 %v1868, 0.0
      %v2143 = vmax.f32 %v1869, 0.0
      %v2144 = vmax.f32 %v1870, 0.0
      %v2145 = vmax.f32 %v1871, 0.0
      %v2146 = vmax.f32 %v1872, 0.0
      %v2147 = vmax.f32 %v1873, 0.0
      %v2148 = vmax.f32 %v1874, 0.0
      %v2149 = vmax.f32 %v1875, 0.0
      %v2150 = vmax.f32 %v1876, 0.0
      %v2151 = vmax.f32 %v1877, 0.0
      %v2152 = vmax.f32 %v1878, 0.0
      %v2153 = vmax.f32 %v1879, 0.0
      %v2154 = vmax.f32 %v1880, 0.0
      %v2155 = vmax.f32 %v1881, 0.0
      %v2156 = vmax.f32 %v1882, 0.0
      %v2157 = vmax.f32 %v1883, 0.0
      %v2158 = vmax.f32 %v1884, 0.0
      %v2159 = vmax.f32 %v1885, 0.0
      %v2160 = vmax.f32 %v1886, 0.0
      %v2161 = vmax.f32 %v1887, 0.0
      %v2162 = vmax.f32 %v1888, 0.0
      %v2163 = vmax.f32 %v1889, 0.0
      %v2164 = vmax.f32 %v1890, 0.0
      %v2165 = vmax.f32 %v1891, 0.0
      %v2166 = vmax.f32 %v1892, 0.0
      %v2167 = vmax.f32 %v1893, 0.0
      %v2168 = vmax.f32 %v1894, 0.0
      %v2169 = vmax.f32 %v1895, 0.0
      %v2170 = vmax.f32 %v1896, 0.0
      %v2171 = vmax.f32 %v1897, 0.0
      %v2172 = vmax.f32 %v1898, 0.0
      %v2173 = vmax.f32 %v1899, 0.0
      %v2174 = vmax.f32 %v1900, 0.0
      %v2175 = vmax.f32 %v1901, 0.0
      %v2176 = vmax.f32 %v1902, 0.0
      %v2177 = vmax.f32 %v1903, 0.0
      %v2178 = vmax.f32 %v1904, 0.0
      %v2179 = vmax.f32 %v1905, 0.0
      %v2180 = vmax.f32 %v1906, 0.0
      %v2181 = vmax.f32 %v1907, 0.0
      %v2182 = vmax.f32 %v1908, 0.0
      %v2183 = vmax.f32 %v1909, 0.0
      %v2184 = vmax.f32 %v1910, 0.0
      %v2185 = vmax.f32 %v1911, 0.0
      %v2186 = vmax.f32 %v1912, 0.0
      %v2187 = vmax.f32 %v1913, 0.0
      %v2188 = vmax.f32 %v1914, 0.0
      %v2189 = vmax.f32 %v1915, 0.0
      %v2190 = vmax.f32 %v1916, 0.0
      %v2191 = vmax.f32 %v1917, 0.0
      %v2192 = vmax.f32 %v1918, 0.0
      %v2193 = vmax.f32 %v1919, 0.0
      %v2194 = vmax.f32 %v1920, 0.0
      %v2195 = vmax.f32 %v1921, 0.0
      %v2196 = vmax.f32 %v1922, 0.0
      %v2197 = vmax.f32 %v1923, 0.0
      %v2198 = vmax.f32 %v1924, 0.0
      %v2199 = vmax.f32 %v1925, 0.0
      %v2200 = vmax.f32 %v1926, 0.0
      %v2201 = vmax.f32 %v1927, 0.0
      %v2202 = vmax.f32 %v1928, 0.0
      %v2203 = vmax.f32 %v1929, 0.0
      %v2204 = vmax.f32 %v1930, 0.0
      %v2205 = vmax.f32 %v1931, 0.0
      %v2206 = vmax.f32 %v1932, 0.0
      %v2207 = vmax.f32 %v1933, 0.0
      %v2208 = vmax.f32 %v1934, 0.0
      %v2209 = vmax.f32 %v1935, 0.0
      %v2210 = vmax.f32 %v1936, 0.0
      %v2211 = vmax.f32 %v1937, 0.0
      %v2212 = vmax.f32 %v1938, 0.0
      %v2213 = vmax.f32 %v1939, 0.0
      %v2214 = vmax.f32 %v1940, 0.0
      %v2215 = vmax.f32 %v1941, 0.0
      %v2216 = vmax.f32 %v1942, 0.0
      %v2217 = vmax.f32 %v1943, 0.0
      %v2218 = vmax.f32 %v1944, 0.0
      %v2219 = vmax.f32 %v1945, 0.0
      %v2220 = vmax.f32 %v1946, 0.0
      %v2221 = vmax.f32 %v1947, 0.0
      %v2222 = vmax.f32 %v1948, 0.0
      %v2223 = vmax.f32 %v1949, 0.0
      %v2224 = vmax.f32 %v1950, 0.0
      %v2225 = vmax.f32 %v1951, 0.0
      %v2226 = vmax.f32 %v1952, 0.0
      %v2227 = vmax.f32 %v1953, 0.0
      %v2228 = vmax.f32 %v1954, 0.0
      %v2229 = vmax.f32 %v1955, 0.0
      %v2230 = vld [vmem:[%s3] sm:$0xff]
      %v2231 = vld [vmem:[%s3 + $0x8] sm:$0xff]
      %v2232 = vld [vmem:[%s3 + $0x10] sm:$0xff]
      %v2233 = vld [vmem:[%s3 + $0x18] sm:$0xff]
      %v2234 = vld [vmem:[%s3 + $0x20] sm:$0xff]
      %v2235 = vld [vmem:[%s3 + $0x28] sm:$0xff]
      %v2236 = vld [vmem:[%s3 + $0x30] sm:$0xff]
      %v2237 = vld [vmem:[%s3 + $0x38] sm:$0xff]
      %v2238 = vld [vmem:[%s3 + $0x40] sm:$0xff]
      %v2239 = vld [vmem:[%s3 + $0x48] sm:$0xff]
      %v2240 = vld [vmem:[%s3 + $0x50] sm:$0xff]
      %v2241 = vld [vmem:[%s3 + $0x58] sm:$0xff]
      %v2242 = vld [vmem:[%s3 + $0x60] sm:$0xff]
      %v2243 = vld [vmem:[%s3 + $0x68] sm:$0xff]
      %v2244 = vld [vmem:[%s3 + $0x70] sm:$0xff]
      %v2245 = vld [vmem:[%s3 + $0x78] sm:$0xff]
      %v2246 = vld [vmem:[%s3 + $0x80] sm:$0xff]
      %v2247 = vld [vmem:[%s3 + $0x88] sm:$0xff]
      %v2248 = vld [vmem:[%s3 + $0x90] sm:$0xff]
      %v2249 = vld [vmem:[%s3 + $0x98] sm:$0xff]
      %v2250 = vld [vmem:[%s3 + $0xa0] sm:$0xff]
      %v2251 = vld [vmem:[%s3 + $0xa8] sm:$0xff]
      %v2252 = vld [vmem:[%s3 + $0xb0] sm:$0xff]
      %v2253 = vld [vmem:[%s3 + $0xb8] sm:$0xff]
      %v2254 = vld [vmem:[%s3 + $0xc0] sm:$0xff]
      %v2255 = vld [vmem:[%s3 + $0xc8] sm:$0xff]
      %v2256 = vld [vmem:[%s3 + $0xd0] sm:$0xff]
      %v2257 = vld [vmem:[%s3 + $0xd8] sm:$0xff]
      %v2258 = vld [vmem:[%s3 + $0xe0] sm:$0xff]
      %v2259 = vld [vmem:[%s3 + $0xe8] sm:$0xff]
      %v2260 = vld [vmem:[%s3 + $0xf0] sm:$0xff]
      %v2261 = vld [vmem:[%s3 + $0xf8] sm:$0xff]
      %v2262 = vld [vmem:[%s3 + $0x100] sm:$0xff]
      %v2263 = vld [vmem:[%s3 + $0x108] sm:$0xff]
      %v2264 = vld [vmem:[%s3 + $0x110] sm:$0xff]
      %v2265 = vld [vmem:[%s3 + $0x118] sm:$0xff]
      %v2266 = vld [vmem:[%s3 + $0x120] sm:$0xff]
      %v2267 = vld [vmem:[%s3 + $0x128] sm:$0xff]
      %v2268 = vld [vmem:[%s3 + $0x130] sm:$0xff]
      %v2269 = vld [vmem:[%s3 + $0x138] sm:$0xff]
      %v2270 = vld [vmem:[%s3 + $0x140] sm:$0xff]
      %v2271 = vld [vmem:[%s3 + $0x148] sm:$0xff]
      %v2272 = vld [vmem:[%s3 + $0x150] sm:$0xff]
      %v2273 = vld [vmem:[%s3 + $0x158] sm:$0xff]
      %v2274 = vld [vmem:[%s3 + $0x160] sm:$0xff]
      %v2275 = vld [vmem:[%s3 + $0x168] sm:$0xff]
      %v2276 = vld [vmem:[%s3 + $0x170] sm:$0xff]
      %v2277 = vld [vmem:[%s3 + $0x178] sm:$0xff]
      %v2278 = vld [vmem:[%s3 + $0x180] sm:$0xff]
      %v2279 = vld [vmem:[%s3 + $0x188] sm:$0xff]
      %v2280 = vld [vmem:[%s3 + $0x190] sm:$0xff]
      %v2281 = vld [vmem:[%s3 + $0x198] sm:$0xff]
      %v2282 = vld [vmem:[%s3 + $0x1a0] sm:$0xff]
      %v2283 = vld [vmem:[%s3 + $0x1a8] sm:$0xff]
      %v2284 = vld [vmem:[%s3 + $0x1b0] sm:$0xff]
      %v2285 = vld [vmem:[%s3 + $0x1b8] sm:$0xff]
      %v2286 = vld [vmem:[%s3 + $0x1c0] sm:$0xff]
      %v2287 = vld [vmem:[%s3 + $0x1c8] sm:$0xff]
      %v2288 = vld [vmem:[%s3 + $0x1d0] sm:$0xff]
      %v2289 = vld [vmem:[%s3 + $0x1d8] sm:$0xff]
      %v2290 = vld [vmem:[%s3 + $0x1e0] sm:$0xff]
      %v2291 = vld [vmem:[%s3 + $0x1e8] sm:$0xff]
      %v2292 = vld [vmem:[%s3 + $0x1f0] sm:$0xff]
      %v2293 = vld [vmem:[%s3 + $0x1f8] sm:$0xff]
      %v2294 = vld [vmem:[%s3 + $0x200] sm:$0xff]
      %v2295 = vld [vmem:[%s3 + $0x208] sm:$0xff]
      %v2296 = vld [vmem:[%s3 + $0x210] sm:$0xff]
      %v2297 = vld [vmem:[%s3 + $0x218] sm:$0xff]
      %v2298 = vld [vmem:[%s3 + $0x220] sm:$0xff]
      %v2299 = vld [vmem:[%s3 + $0x228] sm:$0xff]
      %v2300 = vld [vmem:[%s3 + $0x230] sm:$0xff]
      %v2301 = vld [vmem:[%s3 + $0x238] sm:$0xff]
      %v2302 = vld [vmem:[%s3 + $0x240] sm:$0xff]
      %v2303 = vld [vmem:[%s3 + $0x248] sm:$0xff]
      %v2304 = vld [vmem:[%s3 + $0x250] sm:$0xff]
      %v2305 = vld [vmem:[%s3 + $0x258] sm:$0xff]
      %v2306 = vld [vmem:[%s3 + $0x260] sm:$0xff]
      %v2307 = vld [vmem:[%s3 + $0x268] sm:$0xff]
      %v2308 = vld [vmem:[%s3 + $0x270] sm:$0xff]
      %v2309 = vld [vmem:[%s3 + $0x278] sm:$0xff]
      %v2310 = vld [vmem:[%s3 + $0x280] sm:$0xff]
      %v2311 = vld [vmem:[%s3 + $0x288] sm:$0xff]
      %v2312 = vld [vmem:[%s3 + $0x290] sm:$0xff]
      %v2313 = vld [vmem:[%s3 + $0x298] sm:$0xff]
      %v2314 = vld [vmem:[%s3 + $0x2a0] sm:$0xff]
      %v2315 = vld [vmem:[%s3 + $0x2a8] sm:$0xff]
      %v2316 = vld [vmem:[%s3 + $0x2b0] sm:$0xff]
      %v2317 = vld [vmem:[%s3 + $0x2b8] sm:$0xff]
      %v2318 = vld [vmem:[%s3 + $0x2c0] sm:$0xff]
      %v2319 = vld [vmem:[%s3 + $0x2c8] sm:$0xff]
      %v2320 = vld [vmem:[%s3 + $0x2d0] sm:$0xff]
      %v2321 = vld [vmem:[%s3 + $0x2d8] sm:$0xff]
      %v2322 = vld [vmem:[%s3 + $0x2e0] sm:$0xff]
      %v2323 = vld [vmem:[%s3 + $0x2e8] sm:$0xff]
      %v2324 = vld [vmem:[%s3 + $0x2f0] sm:$0xff]
      %v2325 = vld [vmem:[%s3 + $0x2f8] sm:$0xff]
      %v2326 = vld [vmem:[%s3 + $0x300] sm:$0xff]
      %v2327 = vld [vmem:[%s3 + $0x308] sm:$0xff]
      %v2328 = vld [vmem:[%s3 + $0x310] sm:$0xff]
      %v2329 = vld [vmem:[%s3 + $0x318] sm:$0xff]
      %v2330 = vld [vmem:[%s3 + $0x320] sm:$0xff]
      %v2331 = vld [vmem:[%s3 + $0x328] sm:$0xff]
      %v2332 = vld [vmem:[%s3 + $0x330] sm:$0xff]
      %v2333 = vld [vmem:[%s3 + $0x338] sm:$0xff]
      %v2334 = vld [vmem:[%s3 + $0x340] sm:$0xff]
      %v2335 = vld [vmem:[%s3 + $0x348] sm:$0xff]
      %v2336 = vld [vmem:[%s3 + $0x350] sm:$0xff]
      %v2337 = vld [vmem:[%s3 + $0x358] sm:$0xff]
      %v2338 = vld [vmem:[%s3 + $0x360] sm:$0xff]
      %v2339 = vld [vmem:[%s3 + $0x368] sm:$0xff]
      %v2340 = vld [vmem:[%s3 + $0x370] sm:$0xff]
      %v2341 = vld [vmem:[%s3 + $0x378] sm:$0xff]
      %v2342 = vld [vmem:[%s3 + $0x380] sm:$0xff]
      %v2343 = vld [vmem:[%s3 + $0x388] sm:$0xff]
      %v2344 = vld [vmem:[%s3 + $0x390] sm:$0xff]
      %v2345 = vld [vmem:[%s3 + $0x398] sm:$0xff]
      %v2346 = vld [vmem:[%s3 + $0x3a0] sm:$0xff]
      %v2347 = vld [vmem:[%s3 + $0x3a8] sm:$0xff]
      %v2348 = vld [vmem:[%s3 + $0x3b0] sm:$0xff]
      %v2349 = vld [vmem:[%s3 + $0x3b8] sm:$0xff]
      %v2350 = vld [vmem:[%s3 + $0x3c0] sm:$0xff]
      %v2351 = vld [vmem:[%s3 + $0x3c8] sm:$0xff]
      %v2352 = vld [vmem:[%s3 + $0x3d0] sm:$0xff]
      %v2353 = vld [vmem:[%s3 + $0x3d8] sm:$0xff]
      %v2354 = vld [vmem:[%s3 + $0x3e0] sm:$0xff]
      %v2355 = vld [vmem:[%s3 + $0x3e8] sm:$0xff]
      %v2356 = vld [vmem:[%s3 + $0x3f0] sm:$0xff]
      %v2357 = vld [vmem:[%s3 + $0x3f8] sm:$0xff]
      %v2358 = vld [vmem:[%s3 + $0x400] sm:$0xff]
      %v2359 = vld [vmem:[%s3 + $0x408] sm:$0xff]
      %v2360 = vld [vmem:[%s3 + $0x410] sm:$0xff]
      %v2361 = vld [vmem:[%s3 + $0x418] sm:$0xff]
      %v2362 = vld [vmem:[%s3 + $0x420] sm:$0xff]
      %v2363 = vld [vmem:[%s3 + $0x428] sm:$0xff]
      %v2364 = vld [vmem:[%s3 + $0x430] sm:$0xff]
      %v2365 = vld [vmem:[%s3 + $0x438] sm:$0xff]
      %v2366 = vld [vmem:[%s3 + $0x440] sm:$0xff]
      %2368 = vset.pattern.permute.xlu0 0
      %2369 = vperm.xlu0 %2368, %v2230
      %v2370 = vpop.permute.xlu0 %2369
      %2373 = vset.pattern.permute.xlu0 0
      %2374 = vperm.xlu0 %2373, %v2231
      %v2375 = vpop.permute.xlu0 %2374
      %2378 = vset.pattern.permute.xlu0 0
      %2379 = vperm.xlu0 %2378, %v2232
      %v2380 = vpop.permute.xlu0 %2379
      %2383 = vset.pattern.permute.xlu0 0
      %2384 = vperm.xlu0 %2383, %v2233
      %v2385 = vpop.permute.xlu0 %2384
      %2388 = vset.pattern.permute.xlu0 0
      %2389 = vperm.xlu0 %2388, %v2234
      %v2390 = vpop.permute.xlu0 %2389
      %2393 = vset.pattern.permute.xlu0 0
      %2394 = vperm.xlu0 %2393, %v2235
      %v2395 = vpop.permute.xlu0 %2394
      %2398 = vset.pattern.permute.xlu0 0
      %2399 = vperm.xlu0 %2398, %v2236
      %v2400 = vpop.permute.xlu0 %2399
      %2403 = vset.pattern.permute.xlu0 0
      %2404 = vperm.xlu0 %2403, %v2237
      %v2405 = vpop.permute.xlu0 %2404
      %2408 = vset.pattern.permute.xlu0 0
      %2409 = vperm.xlu0 %2408, %v2238
      %v2410 = vpop.permute.xlu0 %2409
      %2413 = vset.pattern.permute.xlu0 0
      %2414 = vperm.xlu0 %2413, %v2239
      %v2415 = vpop.permute.xlu0 %2414
      %2418 = vset.pattern.permute.xlu0 0
      %2419 = vperm.xlu0 %2418, %v2240
      %v2420 = vpop.permute.xlu0 %2419
      %2423 = vset.pattern.permute.xlu0 0
      %2424 = vperm.xlu0 %2423, %v2241
      %v2425 = vpop.permute.xlu0 %2424
      %2428 = vset.pattern.permute.xlu0 0
      %2429 = vperm.xlu0 %2428, %v2242
      %v2430 = vpop.permute.xlu0 %2429
      %2433 = vset.pattern.permute.xlu0 0
      %2434 = vperm.xlu0 %2433, %v2243
      %v2435 = vpop.permute.xlu0 %2434
      %2438 = vset.pattern.permute.xlu0 0
      %2439 = vperm.xlu0 %2438, %v2244
      %v2440 = vpop.permute.xlu0 %2439
      %2443 = vset.pattern.permute.xlu0 0
      %2444 = vperm.xlu0 %2443, %v2245
      %v2445 = vpop.permute.xlu0 %2444
      %2448 = vset.pattern.permute.xlu0 0
      %2449 = vperm.xlu0 %2448, %v2246
      %v2450 = vpop.permute.xlu0 %2449
      %2453 = vset.pattern.permute.xlu0 0
      %2454 = vperm.xlu0 %2453, %v2247
      %v2455 = vpop.permute.xlu0 %2454
      %2458 = vset.pattern.permute.xlu0 0
      %2459 = vperm.xlu0 %2458, %v2248
      %v2460 = vpop.permute.xlu0 %2459
      %2463 = vset.pattern.permute.xlu0 0
      %2464 = vperm.xlu0 %2463, %v2249
      %v2465 = vpop.permute.xlu0 %2464
      %2468 = vset.pattern.permute.xlu0 0
      %2469 = vperm.xlu0 %2468, %v2250
      %v2470 = vpop.permute.xlu0 %2469
      %2473 = vset.pattern.permute.xlu0 0
      %2474 = vperm.xlu0 %2473, %v2251
      %v2475 = vpop.permute.xlu0 %2474
      %2478 = vset.pattern.permute.xlu0 0
      %2479 = vperm.xlu0 %2478, %v2252
      %v2480 = vpop.permute.xlu0 %2479
      %2483 = vset.pattern.permute.xlu0 0
      %2484 = vperm.xlu0 %2483, %v2253
      %v2485 = vpop.permute.xlu0 %2484
      %2488 = vset.pattern.permute.xlu0 0
      %2489 = vperm.xlu0 %2488, %v2254
      %v2490 = vpop.permute.xlu0 %2489
      %2493 = vset.pattern.permute.xlu0 0
      %2494 = vperm.xlu0 %2493, %v2255
      %v2495 = vpop.permute.xlu0 %2494
      %2498 = vset.pattern.permute.xlu0 0
      %2499 = vperm.xlu0 %2498, %v2256
      %v2500 = vpop.permute.xlu0 %2499
      %2503 = vset.pattern.permute.xlu0 0
      %2504 = vperm.xlu0 %2503, %v2257
      %v2505 = vpop.permute.xlu0 %2504
      %2508 = vset.pattern.permute.xlu0 0
      %2509 = vperm.xlu0 %2508, %v2258
      %v2510 = vpop.permute.xlu0 %2509
      %2513 = vset.pattern.permute.xlu0 0
      %2514 = vperm.xlu0 %2513, %v2259
      %v2515 = vpop.permute.xlu0 %2514
      %2518 = vset.pattern.permute.xlu0 0
      %2519 = vperm.xlu0 %2518, %v2260
      %v2520 = vpop.permute.xlu0 %2519
      %2523 = vset.pattern.permute.xlu0 0
      %2524 = vperm.xlu0 %2523, %v2261
      %v2525 = vpop.permute.xlu0 %2524
      %2528 = vset.pattern.permute.xlu0 0
      %2529 = vperm.xlu0 %2528, %v2262
      %v2530 = vpop.permute.xlu0 %2529
      %2533 = vset.pattern.permute.xlu0 0
      %2534 = vperm.xlu0 %2533, %v2263
      %v2535 = vpop.permute.xlu0 %2534
      %2538 = vset.pattern.permute.xlu0 0
      %2539 = vperm.xlu0 %2538, %v2264
      %v2540 = vpop.permute.xlu0 %2539
      %2543 = vset.pattern.permute.xlu0 0
      %2544 = vperm.xlu0 %2543, %v2265
      %v2545 = vpop.permute.xlu0 %2544
      %2548 = vset.pattern.permute.xlu0 0
      %2549 = vperm.xlu0 %2548, %v2266
      %v2550 = vpop.permute.xlu0 %2549
      %2553 = vset.pattern.permute.xlu0 0
      %2554 = vperm.xlu0 %2553, %v2267
      %v2555 = vpop.permute.xlu0 %2554
      %2558 = vset.pattern.permute.xlu0 0
      %2559 = vperm.xlu0 %2558, %v2268
      %v2560 = vpop.permute.xlu0 %2559
      %2563 = vset.pattern.permute.xlu0 0
      %2564 = vperm.xlu0 %2563, %v2269
      %v2565 = vpop.permute.xlu0 %2564
      %2568 = vset.pattern.permute.xlu0 0
      %2569 = vperm.xlu0 %2568, %v2270
      %v2570 = vpop.permute.xlu0 %2569
      %2573 = vset.pattern.permute.xlu0 0
      %2574 = vperm.xlu0 %2573, %v2271
      %v2575 = vpop.permute.xlu0 %2574
      %2578 = vset.pattern.permute.xlu0 0
      %2579 = vperm.xlu0 %2578, %v2272
      %v2580 = vpop.permute.xlu0 %2579
      %2583 = vset.pattern.permute.xlu0 0
      %2584 = vperm.xlu0 %2583, %v2273
      %v2585 = vpop.permute.xlu0 %2584
      %2588 = vset.pattern.permute.xlu0 0
      %2589 = vperm.xlu0 %2588, %v2274
      %v2590 = vpop.permute.xlu0 %2589
      %2593 = vset.pattern.permute.xlu0 0
      %2594 = vperm.xlu0 %2593, %v2275
      %v2595 = vpop.permute.xlu0 %2594
      %2598 = vset.pattern.permute.xlu0 0
      %2599 = vperm.xlu0 %2598, %v2276
      %v2600 = vpop.permute.xlu0 %2599
      %2603 = vset.pattern.permute.xlu0 0
      %2604 = vperm.xlu0 %2603, %v2277
      %v2605 = vpop.permute.xlu0 %2604
      %2608 = vset.pattern.permute.xlu0 0
      %2609 = vperm.xlu0 %2608, %v2278
      %v2610 = vpop.permute.xlu0 %2609
      %2613 = vset.pattern.permute.xlu0 0
      %2614 = vperm.xlu0 %2613, %v2279
      %v2615 = vpop.permute.xlu0 %2614
      %2618 = vset.pattern.permute.xlu0 0
      %2619 = vperm.xlu0 %2618, %v2280
      %v2620 = vpop.permute.xlu0 %2619
      %2623 = vset.pattern.permute.xlu0 0
      %2624 = vperm.xlu0 %2623, %v2281
      %v2625 = vpop.permute.xlu0 %2624
      %2628 = vset.pattern.permute.xlu0 0
      %2629 = vperm.xlu0 %2628, %v2282
      %v2630 = vpop.permute.xlu0 %2629
      %2633 = vset.pattern.permute.xlu0 0
      %2634 = vperm.xlu0 %2633, %v2283
      %v2635 = vpop.permute.xlu0 %2634
      %2638 = vset.pattern.permute.xlu0 0
      %2639 = vperm.xlu0 %2638, %v2284
      %v2640 = vpop.permute.xlu0 %2639
      %2643 = vset.pattern.permute.xlu0 0
      %2644 = vperm.xlu0 %2643, %v2285
      %v2645 = vpop.permute.xlu0 %2644
      %2648 = vset.pattern.permute.xlu0 0
      %2649 = vperm.xlu0 %2648, %v2286
      %v2650 = vpop.permute.xlu0 %2649
      %2653 = vset.pattern.permute.xlu0 0
      %2654 = vperm.xlu0 %2653, %v2287
      %v2655 = vpop.permute.xlu0 %2654
      %2658 = vset.pattern.permute.xlu0 0
      %2659 = vperm.xlu0 %2658, %v2288
      %v2660 = vpop.permute.xlu0 %2659
      %2663 = vset.pattern.permute.xlu0 0
      %2664 = vperm.xlu0 %2663, %v2289
      %v2665 = vpop.permute.xlu0 %2664
      %2668 = vset.pattern.permute.xlu0 0
      %2669 = vperm.xlu0 %2668, %v2290
      %v2670 = vpop.permute.xlu0 %2669
      %2673 = vset.pattern.permute.xlu0 0
      %2674 = vperm.xlu0 %2673, %v2291
      %v2675 = vpop.permute.xlu0 %2674
      %2678 = vset.pattern.permute.xlu0 0
      %2679 = vperm.xlu0 %2678, %v2292
      %v2680 = vpop.permute.xlu0 %2679
      %2683 = vset.pattern.permute.xlu0 0
      %2684 = vperm.xlu0 %2683, %v2293
      %v2685 = vpop.permute.xlu0 %2684
      %2688 = vset.pattern.permute.xlu0 0
      %2689 = vperm.xlu0 %2688, %v2294
      %v2690 = vpop.permute.xlu0 %2689
      %2693 = vset.pattern.permute.xlu0 0
      %2694 = vperm.xlu0 %2693, %v2295
      %v2695 = vpop.permute.xlu0 %2694
      %2698 = vset.pattern.permute.xlu0 0
      %2699 = vperm.xlu0 %2698, %v2296
      %v2700 = vpop.permute.xlu0 %2699
      %2703 = vset.pattern.permute.xlu0 0
      %2704 = vperm.xlu0 %2703, %v2297
      %v2705 = vpop.permute.xlu0 %2704
      %2708 = vset.pattern.permute.xlu0 0
      %2709 = vperm.xlu0 %2708, %v2298
      %v2710 = vpop.permute.xlu0 %2709
      %2713 = vset.pattern.permute.xlu0 0
      %2714 = vperm.xlu0 %2713, %v2299
      %v2715 = vpop.permute.xlu0 %2714
      %2718 = vset.pattern.permute.xlu0 0
      %2719 = vperm.xlu0 %2718, %v2300
      %v2720 = vpop.permute.xlu0 %2719
      %2723 = vset.pattern.permute.xlu0 0
      %2724 = vperm.xlu0 %2723, %v2301
      %v2725 = vpop.permute.xlu0 %2724
      %2728 = vset.pattern.permute.xlu0 0
      %2729 = vperm.xlu0 %2728, %v2302
      %v2730 = vpop.permute.xlu0 %2729
      %2733 = vset.pattern.permute.xlu0 0
      %2734 = vperm.xlu0 %2733, %v2303
      %v2735 = vpop.permute.xlu0 %2734
      %2738 = vset.pattern.permute.xlu0 0
      %2739 = vperm.xlu0 %2738, %v2304
      %v2740 = vpop.permute.xlu0 %2739
      %2743 = vset.pattern.permute.xlu0 0
      %2744 = vperm.xlu0 %2743, %v2305
      %v2745 = vpop.permute.xlu0 %2744
      %2748 = vset.pattern.permute.xlu0 0
      %2749 = vperm.xlu0 %2748, %v2306
      %v2750 = vpop.permute.xlu0 %2749
      %2753 = vset.pattern.permute.xlu0 0
      %2754 = vperm.xlu0 %2753, %v2307
      %v2755 = vpop.permute.xlu0 %2754
      %2758 = vset.pattern.permute.xlu0 0
      %2759 = vperm.xlu0 %2758, %v2308
      %v2760 = vpop.permute.xlu0 %2759
      %2763 = vset.pattern.permute.xlu0 0
      %2764 = vperm.xlu0 %2763, %v2309
      %v2765 = vpop.permute.xlu0 %2764
      %2768 = vset.pattern.permute.xlu0 0
      %2769 = vperm.xlu0 %2768, %v2310
      %v2770 = vpop.permute.xlu0 %2769
      %2773 = vset.pattern.permute.xlu0 0
      %2774 = vperm.xlu0 %2773, %v2311
      %v2775 = vpop.permute.xlu0 %2774
      %2778 = vset.pattern.permute.xlu0 0
      %2779 = vperm.xlu0 %2778, %v2312
      %v2780 = vpop.permute.xlu0 %2779
      %2783 = vset.pattern.permute.xlu0 0
      %2784 = vperm.xlu0 %2783, %v2313
      %v2785 = vpop.permute.xlu0 %2784
      %2788 = vset.pattern.permute.xlu0 0
      %2789 = vperm.xlu0 %2788, %v2314
      %v2790 = vpop.permute.xlu0 %2789
      %2793 = vset.pattern.permute.xlu0 0
      %2794 = vperm.xlu0 %2793, %v2315
      %v2795 = vpop.permute.xlu0 %2794
      %2798 = vset.pattern.permute.xlu0 0
      %2799 = vperm.xlu0 %2798, %v2316
      %v2800 = vpop.permute.xlu0 %2799
      %2803 = vset.pattern.permute.xlu0 0
      %2804 = vperm.xlu0 %2803, %v2317
      %v2805 = vpop.permute.xlu0 %2804
      %2808 = vset.pattern.permute.xlu0 0
      %2809 = vperm.xlu0 %2808, %v2318
      %v2810 = vpop.permute.xlu0 %2809
      %2813 = vset.pattern.permute.xlu0 0
      %2814 = vperm.xlu0 %2813, %v2319
      %v2815 = vpop.permute.xlu0 %2814
      %2818 = vset.pattern.permute.xlu0 0
      %2819 = vperm.xlu0 %2818, %v2320
      %v2820 = vpop.permute.xlu0 %2819
      %2823 = vset.pattern.permute.xlu0 0
      %2824 = vperm.xlu0 %2823, %v2321
      %v2825 = vpop.permute.xlu0 %2824
      %2828 = vset.pattern.permute.xlu0 0
      %2829 = vperm.xlu0 %2828, %v2322
      %v2830 = vpop.permute.xlu0 %2829
      %2833 = vset.pattern.permute.xlu0 0
      %2834 = vperm.xlu0 %2833, %v2323
      %v2835 = vpop.permute.xlu0 %2834
      %2838 = vset.pattern.permute.xlu0 0
      %2839 = vperm.xlu0 %2838, %v2324
      %v2840 = vpop.permute.xlu0 %2839
      %2843 = vset.pattern.permute.xlu0 0
      %2844 = vperm.xlu0 %2843, %v2325
      %v2845 = vpop.permute.xlu0 %2844
      %2848 = vset.pattern.permute.xlu0 0
      %2849 = vperm.xlu0 %2848, %v2326
      %v2850 = vpop.permute.xlu0 %2849
      %2853 = vset.pattern.permute.xlu0 0
      %2854 = vperm.xlu0 %2853, %v2327
      %v2855 = vpop.permute.xlu0 %2854
      %2858 = vset.pattern.permute.xlu0 0
      %2859 = vperm.xlu0 %2858, %v2328
      %v2860 = vpop.permute.xlu0 %2859
      %2863 = vset.pattern.permute.xlu0 0
      %2864 = vperm.xlu0 %2863, %v2329
      %v2865 = vpop.permute.xlu0 %2864
      %2868 = vset.pattern.permute.xlu0 0
      %2869 = vperm.xlu0 %2868, %v2330
      %v2870 = vpop.permute.xlu0 %2869
      %2873 = vset.pattern.permute.xlu0 0
      %2874 = vperm.xlu0 %2873, %v2331
      %v2875 = vpop.permute.xlu0 %2874
      %2878 = vset.pattern.permute.xlu0 0
      %2879 = vperm.xlu0 %2878, %v2332
      %v2880 = vpop.permute.xlu0 %2879
      %2883 = vset.pattern.permute.xlu0 0
      %2884 = vperm.xlu0 %2883, %v2333
      %v2885 = vpop.permute.xlu0 %2884
      %2888 = vset.pattern.permute.xlu0 0
      %2889 = vperm.xlu0 %2888, %v2334
      %v2890 = vpop.permute.xlu0 %2889
      %2893 = vset.pattern.permute.xlu0 0
      %2894 = vperm.xlu0 %2893, %v2335
      %v2895 = vpop.permute.xlu0 %2894
      %2898 = vset.pattern.permute.xlu0 0
      %2899 = vperm.xlu0 %2898, %v2336
      %v2900 = vpop.permute.xlu0 %2899
      %2903 = vset.pattern.permute.xlu0 0
      %2904 = vperm.xlu0 %2903, %v2337
      %v2905 = vpop.permute.xlu0 %2904
      %2908 = vset.pattern.permute.xlu0 0
      %2909 = vperm.xlu0 %2908, %v2338
      %v2910 = vpop.permute.xlu0 %2909
      %2913 = vset.pattern.permute.xlu0 0
      %2914 = vperm.xlu0 %2913, %v2339
      %v2915 = vpop.permute.xlu0 %2914
      %2918 = vset.pattern.permute.xlu0 0
      %2919 = vperm.xlu0 %2918, %v2340
      %v2920 = vpop.permute.xlu0 %2919
      %2923 = vset.pattern.permute.xlu0 0
      %2924 = vperm.xlu0 %2923, %v2341
      %v2925 = vpop.permute.xlu0 %2924
      %2928 = vset.pattern.permute.xlu0 0
      %2929 = vperm.xlu0 %2928, %v2342
      %v2930 = vpop.permute.xlu0 %2929
      %2933 = vset.pattern.permute.xlu0 0
      %2934 = vperm.xlu0 %2933, %v2343
      %v2935 = vpop.permute.xlu0 %2934
      %2938 = vset.pattern.permute.xlu0 0
      %2939 = vperm.xlu0 %2938, %v2344
      %v2940 = vpop.permute.xlu0 %2939
      %2943 = vset.pattern.permute.xlu0 0
      %2944 = vperm.xlu0 %2943, %v2345
      %v2945 = vpop.permute.xlu0 %2944
      %2948 = vset.pattern.permute.xlu0 0
      %2949 = vperm.xlu0 %2948, %v2346
      %v2950 = vpop.permute.xlu0 %2949
      %2953 = vset.pattern.permute.xlu0 0
      %2954 = vperm.xlu0 %2953, %v2347
      %v2955 = vpop.permute.xlu0 %2954
      %2958 = vset.pattern.permute.xlu0 0
      %2959 = vperm.xlu0 %2958, %v2348
      %v2960 = vpop.permute.xlu0 %2959
      %2963 = vset.pattern.permute.xlu0 0
      %2964 = vperm.xlu0 %2963, %v2349
      %v2965 = vpop.permute.xlu0 %2964
      %2968 = vset.pattern.permute.xlu0 0
      %2969 = vperm.xlu0 %2968, %v2350
      %v2970 = vpop.permute.xlu0 %2969
      %2973 = vset.pattern.permute.xlu0 0
      %2974 = vperm.xlu0 %2973, %v2351
      %v2975 = vpop.permute.xlu0 %2974
      %2978 = vset.pattern.permute.xlu0 0
      %2979 = vperm.xlu0 %2978, %v2352
      %v2980 = vpop.permute.xlu0 %2979
      %2983 = vset.pattern.permute.xlu0 0
      %2984 = vperm.xlu0 %2983, %v2353
      %v2985 = vpop.permute.xlu0 %2984
      %2988 = vset.pattern.permute.xlu0 0
      %2989 = vperm.xlu0 %2988, %v2354
      %v2990 = vpop.permute.xlu0 %2989
      %2993 = vset.pattern.permute.xlu0 0
      %2994 = vperm.xlu0 %2993, %v2355
      %v2995 = vpop.permute.xlu0 %2994
      %2998 = vset.pattern.permute.xlu0 0
      %2999 = vperm.xlu0 %2998, %v2356
      %v3000 = vpop.permute.xlu0 %2999
      %3003 = vset.pattern.permute.xlu0 0
      %3004 = vperm.xlu0 %3003, %v2357
      %v3005 = vpop.permute.xlu0 %3004
      %3008 = vset.pattern.permute.xlu0 0
      %3009 = vperm.xlu0 %3008, %v2358
      %v3010 = vpop.permute.xlu0 %3009
      %3013 = vset.pattern.permute.xlu0 0
      %3014 = vperm.xlu0 %3013, %v2359
      %v3015 = vpop.permute.xlu0 %3014
      %3018 = vset.pattern.permute.xlu0 0
      %3019 = vperm.xlu0 %3018, %v2360
      %v3020 = vpop.permute.xlu0 %3019
      %3023 = vset.pattern.permute.xlu0 0
      %3024 = vperm.xlu0 %3023, %v2361
      %v3025 = vpop.permute.xlu0 %3024
      %3028 = vset.pattern.permute.xlu0 0
      %3029 = vperm.xlu0 %3028, %v2362
      %v3030 = vpop.permute.xlu0 %3029
      %3033 = vset.pattern.permute.xlu0 0
      %3034 = vperm.xlu0 %3033, %v2363
      %v3035 = vpop.permute.xlu0 %3034
      %3038 = vset.pattern.permute.xlu0 0
      %3039 = vperm.xlu0 %3038, %v2364
      %v3040 = vpop.permute.xlu0 %3039
      %3043 = vset.pattern.permute.xlu0 0
      %3044 = vperm.xlu0 %3043, %v2365
      %v3045 = vpop.permute.xlu0 %3044
      %3048 = vset.pattern.permute.xlu0 0
      %3049 = vperm.xlu0 %3048, %v2366
      %v3050 = vpop.permute.xlu0 %3049
      %v3052 = vlaneseq
      %v3053 = vshrl.u32 %v3052, 7
      %v3054 = vsub.s32 1, %v3053
      %v3055 = vrot.slane %v292, %v3054
      %v3056 = vlaneseq
      %v3057 = vshrl.u32 %v3056, 7
      %v3058 = vsub.s32 5, %v3057
      %v3059 = vrot.slane %v292, %v3058
      %v3062 = vlaneseq
      %v3063 = vshrl.u32 %v3062, 7
      %v3064 = vsub.s32 1, %v3063
      %v3065 = vrot.slane %v3055, %v3064
      %v3066 = vlaneseq
      %v3067 = vshrl.u32 %v3066, 7
      %v3068 = vsub.s32 1, %v3067
      %v3069 = vrot.slane %v3059, %v3068
      %v3070 = vsub.f32 %v2370, %v3065
      %v3071 = vsub.f32 %v2370, %v3069
      %v3072 = vsub.f32 %v2375, %v3065
      %v3073 = vsub.f32 %v2375, %v3069
      %v3074 = vsub.f32 %v2380, %v3065
      %v3075 = vsub.f32 %v2380, %v3069
      %v3076 = vsub.f32 %v2385, %v3065
      %v3077 = vsub.f32 %v2385, %v3069
      %v3078 = vsub.f32 %v2390, %v3065
      %v3079 = vsub.f32 %v2390, %v3069
      %v3080 = vsub.f32 %v2395, %v3065
      %v3081 = vsub.f32 %v2395, %v3069
      %v3082 = vsub.f32 %v2400, %v3065
      %v3083 = vsub.f32 %v2400, %v3069
      %v3084 = vsub.f32 %v2405, %v3065
      %v3085 = vsub.f32 %v2405, %v3069
      %v3086 = vsub.f32 %v2410, %v3065
      %v3087 = vsub.f32 %v2410, %v3069
      %v3088 = vsub.f32 %v2415, %v3065
      %v3089 = vsub.f32 %v2415, %v3069
      %v3090 = vsub.f32 %v2420, %v3065
      %v3091 = vsub.f32 %v2420, %v3069
      %v3092 = vsub.f32 %v2425, %v3065
      %v3093 = vsub.f32 %v2425, %v3069
      %v3094 = vsub.f32 %v2430, %v3065
      %v3095 = vsub.f32 %v2430, %v3069
      %v3096 = vsub.f32 %v2435, %v3065
      %v3097 = vsub.f32 %v2435, %v3069
      %v3098 = vsub.f32 %v2440, %v3065
      %v3099 = vsub.f32 %v2440, %v3069
      %v3100 = vsub.f32 %v2445, %v3065
      %v3101 = vsub.f32 %v2445, %v3069
      %v3102 = vsub.f32 %v2450, %v3065
      %v3103 = vsub.f32 %v2450, %v3069
      %v3104 = vsub.f32 %v2455, %v3065
      %v3105 = vsub.f32 %v2455, %v3069
      %v3106 = vsub.f32 %v2460, %v3065
      %v3107 = vsub.f32 %v2460, %v3069
      %v3108 = vsub.f32 %v2465, %v3065
      %v3109 = vsub.f32 %v2465, %v3069
      %v3110 = vsub.f32 %v2470, %v3065
      %v3111 = vsub.f32 %v2470, %v3069
      %v3112 = vsub.f32 %v2475, %v3065
      %v3113 = vsub.f32 %v2475, %v3069
      %v3114 = vsub.f32 %v2480, %v3065
      %v3115 = vsub.f32 %v2480, %v3069
      %v3116 = vsub.f32 %v2485, %v3065
      %v3117 = vsub.f32 %v2485, %v3069
      %v3118 = vsub.f32 %v2490, %v3065
      %v3119 = vsub.f32 %v2490, %v3069
      %v3120 = vsub.f32 %v2495, %v3065
      %v3121 = vsub.f32 %v2495, %v3069
      %v3122 = vsub.f32 %v2500, %v3065
      %v3123 = vsub.f32 %v2500, %v3069
      %v3124 = vsub.f32 %v2505, %v3065
      %v3125 = vsub.f32 %v2505, %v3069
      %v3126 = vsub.f32 %v2510, %v3065
      %v3127 = vsub.f32 %v2510, %v3069
      %v3128 = vsub.f32 %v2515, %v3065
      %v3129 = vsub.f32 %v2515, %v3069
      %v3130 = vsub.f32 %v2520, %v3065
      %v3131 = vsub.f32 %v2520, %v3069
      %v3132 = vsub.f32 %v2525, %v3065
      %v3133 = vsub.f32 %v2525, %v3069
      %v3134 = vsub.f32 %v2530, %v3065
      %v3135 = vsub.f32 %v2530, %v3069
      %v3136 = vsub.f32 %v2535, %v3065
      %v3137 = vsub.f32 %v2535, %v3069
      %v3138 = vsub.f32 %v2540, %v3065
      %v3139 = vsub.f32 %v2540, %v3069
      %v3140 = vsub.f32 %v2545, %v3065
      %v3141 = vsub.f32 %v2545, %v3069
      %v3142 = vsub.f32 %v2550, %v3065
      %v3143 = vsub.f32 %v2550, %v3069
      %v3144 = vsub.f32 %v2555, %v3065
      %v3145 = vsub.f32 %v2555, %v3069
      %v3146 = vsub.f32 %v2560, %v3065
      %v3147 = vsub.f32 %v2560, %v3069
      %v3148 = vsub.f32 %v2565, %v3065
      %v3149 = vsub.f32 %v2565, %v3069
      %v3150 = vsub.f32 %v2570, %v3065
      %v3151 = vsub.f32 %v2570, %v3069
      %v3152 = vsub.f32 %v2575, %v3065
      %v3153 = vsub.f32 %v2575, %v3069
      %v3154 = vsub.f32 %v2580, %v3065
      %v3155 = vsub.f32 %v2580, %v3069
      %v3156 = vsub.f32 %v2585, %v3065
      %v3157 = vsub.f32 %v2585, %v3069
      %v3158 = vsub.f32 %v2590, %v3065
      %v3159 = vsub.f32 %v2590, %v3069
      %v3160 = vsub.f32 %v2595, %v3065
      %v3161 = vsub.f32 %v2595, %v3069
      %v3162 = vsub.f32 %v2600, %v3065
      %v3163 = vsub.f32 %v2600, %v3069
      %v3164 = vsub.f32 %v2605, %v3065
      %v3165 = vsub.f32 %v2605, %v3069
      %v3166 = vsub.f32 %v2610, %v3065
      %v3167 = vsub.f32 %v2610, %v3069
      %v3168 = vsub.f32 %v2615, %v3065
      %v3169 = vsub.f32 %v2615, %v3069
      %v3170 = vsub.f32 %v2620, %v3065
      %v3171 = vsub.f32 %v2620, %v3069
      %v3172 = vsub.f32 %v2625, %v3065
      %v3173 = vsub.f32 %v2625, %v3069
      %v3174 = vsub.f32 %v2630, %v3065
      %v3175 = vsub.f32 %v2630, %v3069
      %v3176 = vsub.f32 %v2635, %v3065
      %v3177 = vsub.f32 %v2635, %v3069
      %v3178 = vsub.f32 %v2640, %v3065
      %v3179 = vsub.f32 %v2640, %v3069
      %v3180 = vsub.f32 %v2645, %v3065
      %v3181 = vsub.f32 %v2645, %v3069
      %v3182 = vsub.f32 %v2650, %v3065
      %v3183 = vsub.f32 %v2650, %v3069
      %v3184 = vsub.f32 %v2655, %v3065
      %v3185 = vsub.f32 %v2655, %v3069
      %v3186 = vsub.f32 %v2660, %v3065
      %v3187 = vsub.f32 %v2660, %v3069
      %v3188 = vsub.f32 %v2665, %v3065
      %v3189 = vsub.f32 %v2665, %v3069
      %v3190 = vsub.f32 %v2670, %v3065
      %v3191 = vsub.f32 %v2670, %v3069
      %v3192 = vsub.f32 %v2675, %v3065
      %v3193 = vsub.f32 %v2675, %v3069
      %v3194 = vsub.f32 %v2680, %v3065
      %v3195 = vsub.f32 %v2680, %v3069
      %v3196 = vsub.f32 %v2685, %v3065
      %v3197 = vsub.f32 %v2685, %v3069
      %v3198 = vsub.f32 %v2690, %v3065
      %v3199 = vsub.f32 %v2690, %v3069
      %v3200 = vsub.f32 %v2695, %v3065
      %v3201 = vsub.f32 %v2695, %v3069
      %v3202 = vsub.f32 %v2700, %v3065
      %v3203 = vsub.f32 %v2700, %v3069
      %v3204 = vsub.f32 %v2705, %v3065
      %v3205 = vsub.f32 %v2705, %v3069
      %v3206 = vsub.f32 %v2710, %v3065
      %v3207 = vsub.f32 %v2710, %v3069
      %v3208 = vsub.f32 %v2715, %v3065
      %v3209 = vsub.f32 %v2715, %v3069
      %v3210 = vsub.f32 %v2720, %v3065
      %v3211 = vsub.f32 %v2720, %v3069
      %v3212 = vsub.f32 %v2725, %v3065
      %v3213 = vsub.f32 %v2725, %v3069
      %v3214 = vsub.f32 %v2730, %v3065
      %v3215 = vsub.f32 %v2730, %v3069
      %v3216 = vsub.f32 %v2735, %v3065
      %v3217 = vsub.f32 %v2735, %v3069
      %v3218 = vsub.f32 %v2740, %v3065
      %v3219 = vsub.f32 %v2740, %v3069
      %v3220 = vsub.f32 %v2745, %v3065
      %v3221 = vsub.f32 %v2745, %v3069
      %v3222 = vsub.f32 %v2750, %v3065
      %v3223 = vsub.f32 %v2750, %v3069
      %v3224 = vsub.f32 %v2755, %v3065
      %v3225 = vsub.f32 %v2755, %v3069
      %v3226 = vsub.f32 %v2760, %v3065
      %v3227 = vsub.f32 %v2760, %v3069
      %v3228 = vsub.f32 %v2765, %v3065
      %v3229 = vsub.f32 %v2765, %v3069
      %v3230 = vsub.f32 %v2770, %v3065
      %v3231 = vsub.f32 %v2770, %v3069
      %v3232 = vsub.f32 %v2775, %v3065
      %v3233 = vsub.f32 %v2775, %v3069
      %v3234 = vsub.f32 %v2780, %v3065
      %v3235 = vsub.f32 %v2780, %v3069
      %v3236 = vsub.f32 %v2785, %v3065
      %v3237 = vsub.f32 %v2785, %v3069
      %v3238 = vsub.f32 %v2790, %v3065
      %v3239 = vsub.f32 %v2790, %v3069
      %v3240 = vsub.f32 %v2795, %v3065
      %v3241 = vsub.f32 %v2795, %v3069
      %v3242 = vsub.f32 %v2800, %v3065
      %v3243 = vsub.f32 %v2800, %v3069
      %v3244 = vsub.f32 %v2805, %v3065
      %v3245 = vsub.f32 %v2805, %v3069
      %v3246 = vsub.f32 %v2810, %v3065
      %v3247 = vsub.f32 %v2810, %v3069
      %v3248 = vsub.f32 %v2815, %v3065
      %v3249 = vsub.f32 %v2815, %v3069
      %v3250 = vsub.f32 %v2820, %v3065
      %v3251 = vsub.f32 %v2820, %v3069
      %v3252 = vsub.f32 %v2825, %v3065
      %v3253 = vsub.f32 %v2825, %v3069
      %v3254 = vsub.f32 %v2830, %v3065
      %v3255 = vsub.f32 %v2830, %v3069
      %v3256 = vsub.f32 %v2835, %v3065
      %v3257 = vsub.f32 %v2835, %v3069
      %v3258 = vsub.f32 %v2840, %v3065
      %v3259 = vsub.f32 %v2840, %v3069
      %v3260 = vsub.f32 %v2845, %v3065
      %v3261 = vsub.f32 %v2845, %v3069
      %v3262 = vsub.f32 %v2850, %v3065
      %v3263 = vsub.f32 %v2850, %v3069
      %v3264 = vsub.f32 %v2855, %v3065
      %v3265 = vsub.f32 %v2855, %v3069
      %v3266 = vsub.f32 %v2860, %v3065
      %v3267 = vsub.f32 %v2860, %v3069
      %v3268 = vsub.f32 %v2865, %v3065
      %v3269 = vsub.f32 %v2865, %v3069
      %v3270 = vsub.f32 %v2870, %v3065
      %v3271 = vsub.f32 %v2870, %v3069
      %v3272 = vsub.f32 %v2875, %v3065
      %v3273 = vsub.f32 %v2875, %v3069
      %v3274 = vsub.f32 %v2880, %v3065
      %v3275 = vsub.f32 %v2880, %v3069
      %v3276 = vsub.f32 %v2885, %v3065
      %v3277 = vsub.f32 %v2885, %v3069
      %v3278 = vsub.f32 %v2890, %v3065
      %v3279 = vsub.f32 %v2890, %v3069
      %v3280 = vsub.f32 %v2895, %v3065
      %v3281 = vsub.f32 %v2895, %v3069
      %v3282 = vsub.f32 %v2900, %v3065
      %v3283 = vsub.f32 %v2900, %v3069
      %v3284 = vsub.f32 %v2905, %v3065
      %v3285 = vsub.f32 %v2905, %v3069
      %v3286 = vsub.f32 %v2910, %v3065
      %v3287 = vsub.f32 %v2910, %v3069
      %v3288 = vsub.f32 %v2915, %v3065
      %v3289 = vsub.f32 %v2915, %v3069
      %v3290 = vsub.f32 %v2920, %v3065
      %v3291 = vsub.f32 %v2920, %v3069
      %v3292 = vsub.f32 %v2925, %v3065
      %v3293 = vsub.f32 %v2925, %v3069
      %v3294 = vsub.f32 %v2930, %v3065
      %v3295 = vsub.f32 %v2930, %v3069
      %v3296 = vsub.f32 %v2935, %v3065
      %v3297 = vsub.f32 %v2935, %v3069
      %v3298 = vsub.f32 %v2940, %v3065
      %v3299 = vsub.f32 %v2940, %v3069
      %v3300 = vsub.f32 %v2945, %v3065
      %v3301 = vsub.f32 %v2945, %v3069
      %v3302 = vsub.f32 %v2950, %v3065
      %v3303 = vsub.f32 %v2950, %v3069
      %v3304 = vsub.f32 %v2955, %v3065
      %v3305 = vsub.f32 %v2955, %v3069
      %v3306 = vsub.f32 %v2960, %v3065
      %v3307 = vsub.f32 %v2960, %v3069
      %v3308 = vsub.f32 %v2965, %v3065
      %v3309 = vsub.f32 %v2965, %v3069
      %v3310 = vsub.f32 %v2970, %v3065
      %v3311 = vsub.f32 %v2970, %v3069
      %v3312 = vsub.f32 %v2975, %v3065
      %v3313 = vsub.f32 %v2975, %v3069
      %v3314 = vsub.f32 %v2980, %v3065
      %v3315 = vsub.f32 %v2980, %v3069
      %v3316 = vsub.f32 %v2985, %v3065
      %v3317 = vsub.f32 %v2985, %v3069
      %v3318 = vsub.f32 %v2990, %v3065
      %v3319 = vsub.f32 %v2990, %v3069
      %v3320 = vsub.f32 %v2995, %v3065
      %v3321 = vsub.f32 %v2995, %v3069
      %v3322 = vsub.f32 %v3000, %v3065
      %v3323 = vsub.f32 %v3000, %v3069
      %v3324 = vsub.f32 %v3005, %v3065
      %v3325 = vsub.f32 %v3005, %v3069
      %v3326 = vsub.f32 %v3010, %v3065
      %v3327 = vsub.f32 %v3010, %v3069
      %v3328 = vsub.f32 %v3015, %v3065
      %v3329 = vsub.f32 %v3015, %v3069
      %v3330 = vsub.f32 %v3020, %v3065
      %v3331 = vsub.f32 %v3020, %v3069
      %v3332 = vsub.f32 %v3025, %v3065
      %v3333 = vsub.f32 %v3025, %v3069
      %v3334 = vsub.f32 %v3030, %v3065
      %v3335 = vsub.f32 %v3030, %v3069
      %v3336 = vsub.f32 %v3035, %v3065
      %v3337 = vsub.f32 %v3035, %v3069
      %v3338 = vsub.f32 %v3040, %v3065
      %v3339 = vsub.f32 %v3040, %v3069
      %v3340 = vsub.f32 %v3045, %v3065
      %v3341 = vsub.f32 %v3045, %v3069
      %v3342 = vsub.f32 %v3050, %v3065
      %v3343 = vsub.f32 %v3050, %v3069
      %v3344 = vand.u32 2147483647, %v3070
      %v3345 = vand.u32 2147483647, %v3071
      %v3346 = vand.u32 2147483647, %v3072
      %v3347 = vand.u32 2147483647, %v3073
      %v3348 = vand.u32 2147483647, %v3074
      %v3349 = vand.u32 2147483647, %v3075
      %v3350 = vand.u32 2147483647, %v3076
      %v3351 = vand.u32 2147483647, %v3077
      %v3352 = vand.u32 2147483647, %v3078
      %v3353 = vand.u32 2147483647, %v3079
      %v3354 = vand.u32 2147483647, %v3080
      %v3355 = vand.u32 2147483647, %v3081
      %v3356 = vand.u32 2147483647, %v3082
      %v3357 = vand.u32 2147483647, %v3083
      %v3358 = vand.u32 2147483647, %v3084
      %v3359 = vand.u32 2147483647, %v3085
      %v3360 = vand.u32 2147483647, %v3086
      %v3361 = vand.u32 2147483647, %v3087
      %v3362 = vand.u32 2147483647, %v3088
      %v3363 = vand.u32 2147483647, %v3089
      %v3364 = vand.u32 2147483647, %v3090
      %v3365 = vand.u32 2147483647, %v3091
      %v3366 = vand.u32 2147483647, %v3092
      %v3367 = vand.u32 2147483647, %v3093
      %v3368 = vand.u32 2147483647, %v3094
      %v3369 = vand.u32 2147483647, %v3095
      %v3370 = vand.u32 2147483647, %v3096
      %v3371 = vand.u32 2147483647, %v3097
      %v3372 = vand.u32 2147483647, %v3098
      %v3373 = vand.u32 2147483647, %v3099
      %v3374 = vand.u32 2147483647, %v3100
      %v3375 = vand.u32 2147483647, %v3101
      %v3376 = vand.u32 2147483647, %v3102
      %v3377 = vand.u32 2147483647, %v3103
      %v3378 = vand.u32 2147483647, %v3104
      %v3379 = vand.u32 2147483647, %v3105
      %v3380 = vand.u32 2147483647, %v3106
      %v3381 = vand.u32 2147483647, %v3107
      %v3382 = vand.u32 2147483647, %v3108
      %v3383 = vand.u32 2147483647, %v3109
      %v3384 = vand.u32 2147483647, %v3110
      %v3385 = vand.u32 2147483647, %v3111
      %v3386 = vand.u32 2147483647, %v3112
      %v3387 = vand.u32 2147483647, %v3113
      %v3388 = vand.u32 2147483647, %v3114
      %v3389 = vand.u32 2147483647, %v3115
      %v3390 = vand.u32 2147483647, %v3116
      %v3391 = vand.u32 2147483647, %v3117
      %v3392 = vand.u32 2147483647, %v3118
      %v3393 = vand.u32 2147483647, %v3119
      %v3394 = vand.u32 2147483647, %v3120
      %v3395 = vand.u32 2147483647, %v3121
      %v3396 = vand.u32 2147483647, %v3122
      %v3397 = vand.u32 2147483647, %v3123
      %v3398 = vand.u32 2147483647, %v3124
      %v3399 = vand.u32 2147483647, %v3125
      %v3400 = vand.u32 2147483647, %v3126
      %v3401 = vand.u32 2147483647, %v3127
      %v3402 = vand.u32 2147483647, %v3128
      %v3403 = vand.u32 2147483647, %v3129
      %v3404 = vand.u32 2147483647, %v3130
      %v3405 = vand.u32 2147483647, %v3131
      %v3406 = vand.u32 2147483647, %v3132
      %v3407 = vand.u32 2147483647, %v3133
      %v3408 = vand.u32 2147483647, %v3134
      %v3409 = vand.u32 2147483647, %v3135
      %v3410 = vand.u32 2147483647, %v3136
      %v3411 = vand.u32 2147483647, %v3137
      %v3412 = vand.u32 2147483647, %v3138
      %v3413 = vand.u32 2147483647, %v3139
      %v3414 = vand.u32 2147483647, %v3140
      %v3415 = vand.u32 2147483647, %v3141
      %v3416 = vand.u32 2147483647, %v3142
      %v3417 = vand.u32 2147483647, %v3143
      %v3418 = vand.u32 2147483647, %v3144
      %v3419 = vand.u32 2147483647, %v3145
      %v3420 = vand.u32 2147483647, %v3146
      %v3421 = vand.u32 2147483647, %v3147
      %v3422 = vand.u32 2147483647, %v3148
      %v3423 = vand.u32 2147483647, %v3149
      %v3424 = vand.u32 2147483647, %v3150
      %v3425 = vand.u32 2147483647, %v3151
      %v3426 = vand.u32 2147483647, %v3152
      %v3427 = vand.u32 2147483647, %v3153
      %v3428 = vand.u32 2147483647, %v3154
      %v3429 = vand.u32 2147483647, %v3155
      %v3430 = vand.u32 2147483647, %v3156
      %v3431 = vand.u32 2147483647, %v3157
      %v3432 = vand.u32 2147483647, %v3158
      %v3433 = vand.u32 2147483647, %v3159
      %v3434 = vand.u32 2147483647, %v3160
      %v3435 = vand.u32 2147483647, %v3161
      %v3436 = vand.u32 2147483647, %v3162
      %v3437 = vand.u32 2147483647, %v3163
      %v3438 = vand.u32 2147483647, %v3164
      %v3439 = vand.u32 2147483647, %v3165
      %v3440 = vand.u32 2147483647, %v3166
      %v3441 = vand.u32 2147483647, %v3167
      %v3442 = vand.u32 2147483647, %v3168
      %v3443 = vand.u32 2147483647, %v3169
      %v3444 = vand.u32 2147483647, %v3170
      %v3445 = vand.u32 2147483647, %v3171
      %v3446 = vand.u32 2147483647, %v3172
      %v3447 = vand.u32 2147483647, %v3173
      %v3448 = vand.u32 2147483647, %v3174
      %v3449 = vand.u32 2147483647, %v3175
      %v3450 = vand.u32 2147483647, %v3176
      %v3451 = vand.u32 2147483647, %v3177
      %v3452 = vand.u32 2147483647, %v3178
      %v3453 = vand.u32 2147483647, %v3179
      %v3454 = vand.u32 2147483647, %v3180
      %v3455 = vand.u32 2147483647, %v3181
      %v3456 = vand.u32 2147483647, %v3182
      %v3457 = vand.u32 2147483647, %v3183
      %v3458 = vand.u32 2147483647, %v3184
      %v3459 = vand.u32 2147483647, %v3185
      %v3460 = vand.u32 2147483647, %v3186
      %v3461 = vand.u32 2147483647, %v3187
      %v3462 = vand.u32 2147483647, %v3188
      %v3463 = vand.u32 2147483647, %v3189
      %v3464 = vand.u32 2147483647, %v3190
      %v3465 = vand.u32 2147483647, %v3191
      %v3466 = vand.u32 2147483647, %v3192
      %v3467 = vand.u32 2147483647, %v3193
      %v3468 = vand.u32 2147483647, %v3194
      %v3469 = vand.u32 2147483647, %v3195
      %v3470 = vand.u32 2147483647, %v3196
      %v3471 = vand.u32 2147483647, %v3197
      %v3472 = vand.u32 2147483647, %v3198
      %v3473 = vand.u32 2147483647, %v3199
      %v3474 = vand.u32 2147483647, %v3200
      %v3475 = vand.u32 2147483647, %v3201
      %v3476 = vand.u32 2147483647, %v3202
      %v3477 = vand.u32 2147483647, %v3203
      %v3478 = vand.u32 2147483647, %v3204
      %v3479 = vand.u32 2147483647, %v3205
      %v3480 = vand.u32 2147483647, %v3206
      %v3481 = vand.u32 2147483647, %v3207
      %v3482 = vand.u32 2147483647, %v3208
      %v3483 = vand.u32 2147483647, %v3209
      %v3484 = vand.u32 2147483647, %v3210
      %v3485 = vand.u32 2147483647, %v3211
      %v3486 = vand.u32 2147483647, %v3212
      %v3487 = vand.u32 2147483647, %v3213
      %v3488 = vand.u32 2147483647, %v3214
      %v3489 = vand.u32 2147483647, %v3215
      %v3490 = vand.u32 2147483647, %v3216
      %v3491 = vand.u32 2147483647, %v3217
      %v3492 = vand.u32 2147483647, %v3218
      %v3493 = vand.u32 2147483647, %v3219
      %v3494 = vand.u32 2147483647, %v3220
      %v3495 = vand.u32 2147483647, %v3221
      %v3496 = vand.u32 2147483647, %v3222
      %v3497 = vand.u32 2147483647, %v3223
      %v3498 = vand.u32 2147483647, %v3224
      %v3499 = vand.u32 2147483647, %v3225
      %v3500 = vand.u32 2147483647, %v3226
      %v3501 = vand.u32 2147483647, %v3227
      %v3502 = vand.u32 2147483647, %v3228
      %v3503 = vand.u32 2147483647, %v3229
      %v3504 = vand.u32 2147483647, %v3230
      %v3505 = vand.u32 2147483647, %v3231
      %v3506 = vand.u32 2147483647, %v3232
      %v3507 = vand.u32 2147483647, %v3233
      %v3508 = vand.u32 2147483647, %v3234
      %v3509 = vand.u32 2147483647, %v3235
      %v3510 = vand.u32 2147483647, %v3236
      %v3511 = vand.u32 2147483647, %v3237
      %v3512 = vand.u32 2147483647, %v3238
      %v3513 = vand.u32 2147483647, %v3239
      %v3514 = vand.u32 2147483647, %v3240
      %v3515 = vand.u32 2147483647, %v3241
      %v3516 = vand.u32 2147483647, %v3242
      %v3517 = vand.u32 2147483647, %v3243
      %v3518 = vand.u32 2147483647, %v3244
      %v3519 = vand.u32 2147483647, %v3245
      %v3520 = vand.u32 2147483647, %v3246
      %v3521 = vand.u32 2147483647, %v3247
      %v3522 = vand.u32 2147483647, %v3248
      %v3523 = vand.u32 2147483647, %v3249
      %v3524 = vand.u32 2147483647, %v3250
      %v3525 = vand.u32 2147483647, %v3251
      %v3526 = vand.u32 2147483647, %v3252
      %v3527 = vand.u32 2147483647, %v3253
      %v3528 = vand.u32 2147483647, %v3254
      %v3529 = vand.u32 2147483647, %v3255
      %v3530 = vand.u32 2147483647, %v3256
      %v3531 = vand.u32 2147483647, %v3257
      %v3532 = vand.u32 2147483647, %v3258
      %v3533 = vand.u32 2147483647, %v3259
      %v3534 = vand.u32 2147483647, %v3260
      %v3535 = vand.u32 2147483647, %v3261
      %v3536 = vand.u32 2147483647, %v3262
      %v3537 = vand.u32 2147483647, %v3263
      %v3538 = vand.u32 2147483647, %v3264
      %v3539 = vand.u32 2147483647, %v3265
      %v3540 = vand.u32 2147483647, %v3266
      %v3541 = vand.u32 2147483647, %v3267
      %v3542 = vand.u32 2147483647, %v3268
      %v3543 = vand.u32 2147483647, %v3269
      %v3544 = vand.u32 2147483647, %v3270
      %v3545 = vand.u32 2147483647, %v3271
      %v3546 = vand.u32 2147483647, %v3272
      %v3547 = vand.u32 2147483647, %v3273
      %v3548 = vand.u32 2147483647, %v3274
      %v3549 = vand.u32 2147483647, %v3275
      %v3550 = vand.u32 2147483647, %v3276
      %v3551 = vand.u32 2147483647, %v3277
      %v3552 = vand.u32 2147483647, %v3278
      %v3553 = vand.u32 2147483647, %v3279
      %v3554 = vand.u32 2147483647, %v3280
      %v3555 = vand.u32 2147483647, %v3281
      %v3556 = vand.u32 2147483647, %v3282
      %v3557 = vand.u32 2147483647, %v3283
      %v3558 = vand.u32 2147483647, %v3284
      %v3559 = vand.u32 2147483647, %v3285
      %v3560 = vand.u32 2147483647, %v3286
      %v3561 = vand.u32 2147483647, %v3287
      %v3562 = vand.u32 2147483647, %v3288
      %v3563 = vand.u32 2147483647, %v3289
      %v3564 = vand.u32 2147483647, %v3290
      %v3565 = vand.u32 2147483647, %v3291
      %v3566 = vand.u32 2147483647, %v3292
      %v3567 = vand.u32 2147483647, %v3293
      %v3568 = vand.u32 2147483647, %v3294
      %v3569 = vand.u32 2147483647, %v3295
      %v3570 = vand.u32 2147483647, %v3296
      %v3571 = vand.u32 2147483647, %v3297
      %v3572 = vand.u32 2147483647, %v3298
      %v3573 = vand.u32 2147483647, %v3299
      %v3574 = vand.u32 2147483647, %v3300
      %v3575 = vand.u32 2147483647, %v3301
      %v3576 = vand.u32 2147483647, %v3302
      %v3577 = vand.u32 2147483647, %v3303
      %v3578 = vand.u32 2147483647, %v3304
      %v3579 = vand.u32 2147483647, %v3305
      %v3580 = vand.u32 2147483647, %v3306
      %v3581 = vand.u32 2147483647, %v3307
      %v3582 = vand.u32 2147483647, %v3308
      %v3583 = vand.u32 2147483647, %v3309
      %v3584 = vand.u32 2147483647, %v3310
      %v3585 = vand.u32 2147483647, %v3311
      %v3586 = vand.u32 2147483647, %v3312
      %v3587 = vand.u32 2147483647, %v3313
      %v3588 = vand.u32 2147483647, %v3314
      %v3589 = vand.u32 2147483647, %v3315
      %v3590 = vand.u32 2147483647, %v3316
      %v3591 = vand.u32 2147483647, %v3317
      %v3592 = vand.u32 2147483647, %v3318
      %v3593 = vand.u32 2147483647, %v3319
      %v3594 = vand.u32 2147483647, %v3320
      %v3595 = vand.u32 2147483647, %v3321
      %v3596 = vand.u32 2147483647, %v3322
      %v3597 = vand.u32 2147483647, %v3323
      %v3598 = vand.u32 2147483647, %v3324
      %v3599 = vand.u32 2147483647, %v3325
      %v3600 = vand.u32 2147483647, %v3326
      %v3601 = vand.u32 2147483647, %v3327
      %v3602 = vand.u32 2147483647, %v3328
      %v3603 = vand.u32 2147483647, %v3329
      %v3604 = vand.u32 2147483647, %v3330
      %v3605 = vand.u32 2147483647, %v3331
      %v3606 = vand.u32 2147483647, %v3332
      %v3607 = vand.u32 2147483647, %v3333
      %v3608 = vand.u32 2147483647, %v3334
      %v3609 = vand.u32 2147483647, %v3335
      %v3610 = vand.u32 2147483647, %v3336
      %v3611 = vand.u32 2147483647, %v3337
      %v3612 = vand.u32 2147483647, %v3338
      %v3613 = vand.u32 2147483647, %v3339
      %v3614 = vand.u32 2147483647, %v3340
      %v3615 = vand.u32 2147483647, %v3341
      %v3616 = vand.u32 2147483647, %v3342
      %v3617 = vand.u32 2147483647, %v3343
      %v3618 = vsub.f32 1.0, %v3344
      %v3619 = vsub.f32 1.0, %v3345
      %v3620 = vsub.f32 1.0, %v3346
      %v3621 = vsub.f32 1.0, %v3347
      %v3622 = vsub.f32 1.0, %v3348
      %v3623 = vsub.f32 1.0, %v3349
      %v3624 = vsub.f32 1.0, %v3350
      %v3625 = vsub.f32 1.0, %v3351
      %v3626 = vsub.f32 1.0, %v3352
      %v3627 = vsub.f32 1.0, %v3353
      %v3628 = vsub.f32 1.0, %v3354
      %v3629 = vsub.f32 1.0, %v3355
      %v3630 = vsub.f32 1.0, %v3356
      %v3631 = vsub.f32 1.0, %v3357
      %v3632 = vsub.f32 1.0, %v3358
      %v3633 = vsub.f32 1.0, %v3359
      %v3634 = vsub.f32 1.0, %v3360
      %v3635 = vsub.f32 1.0, %v3361
      %v3636 = vsub.f32 1.0, %v3362
      %v3637 = vsub.f32 1.0, %v3363
      %v3638 = vsub.f32 1.0, %v3364
      %v3639 = vsub.f32 1.0, %v3365
      %v3640 = vsub.f32 1.0, %v3366
      %v3641 = vsub.f32 1.0, %v3367
      %v3642 = vsub.f32 1.0, %v3368
      %v3643 = vsub.f32 1.0, %v3369
      %v3644 = vsub.f32 1.0, %v3370
      %v3645 = vsub.f32 1.0, %v3371
      %v3646 = vsub.f32 1.0, %v3372
      %v3647 = vsub.f32 1.0, %v3373
      %v3648 = vsub.f32 1.0, %v3374
      %v3649 = vsub.f32 1.0, %v3375
      %v3650 = vsub.f32 1.0, %v3376
      %v3651 = vsub.f32 1.0, %v3377
      %v3652 = vsub.f32 1.0, %v3378
      %v3653 = vsub.f32 1.0, %v3379
      %v3654 = vsub.f32 1.0, %v3380
      %v3655 = vsub.f32 1.0, %v3381
      %v3656 = vsub.f32 1.0, %v3382
      %v3657 = vsub.f32 1.0, %v3383
      %v3658 = vsub.f32 1.0, %v3384
      %v3659 = vsub.f32 1.0, %v3385
      %v3660 = vsub.f32 1.0, %v3386
      %v3661 = vsub.f32 1.0, %v3387
      %v3662 = vsub.f32 1.0, %v3388
      %v3663 = vsub.f32 1.0, %v3389
      %v3664 = vsub.f32 1.0, %v3390
      %v3665 = vsub.f32 1.0, %v3391
      %v3666 = vsub.f32 1.0, %v3392
      %v3667 = vsub.f32 1.0, %v3393
      %v3668 = vsub.f32 1.0, %v3394
      %v3669 = vsub.f32 1.0, %v3395
      %v3670 = vsub.f32 1.0, %v3396
      %v3671 = vsub.f32 1.0, %v3397
      %v3672 = vsub.f32 1.0, %v3398
      %v3673 = vsub.f32 1.0, %v3399
      %v3674 = vsub.f32 1.0, %v3400
      %v3675 = vsub.f32 1.0, %v3401
      %v3676 = vsub.f32 1.0, %v3402
      %v3677 = vsub.f32 1.0, %v3403
      %v3678 = vsub.f32 1.0, %v3404
      %v3679 = vsub.f32 1.0, %v3405
      %v3680 = vsub.f32 1.0, %v3406
      %v3681 = vsub.f32 1.0, %v3407
      %v3682 = vsub.f32 1.0, %v3408
      %v3683 = vsub.f32 1.0, %v3409
      %v3684 = vsub.f32 1.0, %v3410
      %v3685 = vsub.f32 1.0, %v3411
      %v3686 = vsub.f32 1.0, %v3412
      %v3687 = vsub.f32 1.0, %v3413
      %v3688 = vsub.f32 1.0, %v3414
      %v3689 = vsub.f32 1.0, %v3415
      %v3690 = vsub.f32 1.0, %v3416
      %v3691 = vsub.f32 1.0, %v3417
      %v3692 = vsub.f32 1.0, %v3418
      %v3693 = vsub.f32 1.0, %v3419
      %v3694 = vsub.f32 1.0, %v3420
      %v3695 = vsub.f32 1.0, %v3421
      %v3696 = vsub.f32 1.0, %v3422
      %v3697 = vsub.f32 1.0, %v3423
      %v3698 = vsub.f32 1.0, %v3424
      %v3699 = vsub.f32 1.0, %v3425
      %v3700 = vsub.f32 1.0, %v3426
      %v3701 = vsub.f32 1.0, %v3427
      %v3702 = vsub.f32 1.0, %v3428
      %v3703 = vsub.f32 1.0, %v3429
      %v3704 = vsub.f32 1.0, %v3430
      %v3705 = vsub.f32 1.0, %v3431
      %v3706 = vsub.f32 1.0, %v3432
      %v3707 = vsub.f32 1.0, %v3433
      %v3708 = vsub.f32 1.0, %v3434
      %v3709 = vsub.f32 1.0, %v3435
      %v3710 = vsub.f32 1.0, %v3436
      %v3711 = vsub.f32 1.0, %v3437
      %v3712 = vsub.f32 1.0, %v3438
      %v3713 = vsub.f32 1.0, %v3439
      %v3714 = vsub.f32 1.0, %v3440
      %v3715 = vsub.f32 1.0, %v3441
      %v3716 = vsub.f32 1.0, %v3442
      %v3717 = vsub.f32 1.0, %v3443
      %v3718 = vsub.f32 1.0, %v3444
      %v3719 = vsub.f32 1.0, %v3445
      %v3720 = vsub.f32 1.0, %v3446
      %v3721 = vsub.f32 1.0, %v3447
      %v3722 = vsub.f32 1.0, %v3448
      %v3723 = vsub.f32 1.0, %v3449
      %v3724 = vsub.f32 1.0, %v3450
      %v3725 = vsub.f32 1.0, %v3451
      %v3726 = vsub.f32 1.0, %v3452
      %v3727 = vsub.f32 1.0, %v3453
      %v3728 = vsub.f32 1.0, %v3454
      %v3729 = vsub.f32 1.0, %v3455
      %v3730 = vsub.f32 1.0, %v3456
      %v3731 = vsub.f32 1.0, %v3457
      %v3732 = vsub.f32 1.0, %v3458
      %v3733 = vsub.f32 1.0, %v3459
      %v3734 = vsub.f32 1.0, %v3460
      %v3735 = vsub.f32 1.0, %v3461
      %v3736 = vsub.f32 1.0, %v3462
      %v3737 = vsub.f32 1.0, %v3463
      %v3738 = vsub.f32 1.0, %v3464
      %v3739 = vsub.f32 1.0, %v3465
      %v3740 = vsub.f32 1.0, %v3466
      %v3741 = vsub.f32 1.0, %v3467
      %v3742 = vsub.f32 1.0, %v3468
      %v3743 = vsub.f32 1.0, %v3469
      %v3744 = vsub.f32 1.0, %v3470
      %v3745 = vsub.f32 1.0, %v3471
      %v3746 = vsub.f32 1.0, %v3472
      %v3747 = vsub.f32 1.0, %v3473
      %v3748 = vsub.f32 1.0, %v3474
      %v3749 = vsub.f32 1.0, %v3475
      %v3750 = vsub.f32 1.0, %v3476
      %v3751 = vsub.f32 1.0, %v3477
      %v3752 = vsub.f32 1.0, %v3478
      %v3753 = vsub.f32 1.0, %v3479
      %v3754 = vsub.f32 1.0, %v3480
      %v3755 = vsub.f32 1.0, %v3481
      %v3756 = vsub.f32 1.0, %v3482
      %v3757 = vsub.f32 1.0, %v3483
      %v3758 = vsub.f32 1.0, %v3484
      %v3759 = vsub.f32 1.0, %v3485
      %v3760 = vsub.f32 1.0, %v3486
      %v3761 = vsub.f32 1.0, %v3487
      %v3762 = vsub.f32 1.0, %v3488
      %v3763 = vsub.f32 1.0, %v3489
      %v3764 = vsub.f32 1.0, %v3490
      %v3765 = vsub.f32 1.0, %v3491
      %v3766 = vsub.f32 1.0, %v3492
      %v3767 = vsub.f32 1.0, %v3493
      %v3768 = vsub.f32 1.0, %v3494
      %v3769 = vsub.f32 1.0, %v3495
      %v3770 = vsub.f32 1.0, %v3496
      %v3771 = vsub.f32 1.0, %v3497
      %v3772 = vsub.f32 1.0, %v3498
      %v3773 = vsub.f32 1.0, %v3499
      %v3774 = vsub.f32 1.0, %v3500
      %v3775 = vsub.f32 1.0, %v3501
      %v3776 = vsub.f32 1.0, %v3502
      %v3777 = vsub.f32 1.0, %v3503
      %v3778 = vsub.f32 1.0, %v3504
      %v3779 = vsub.f32 1.0, %v3505
      %v3780 = vsub.f32 1.0, %v3506
      %v3781 = vsub.f32 1.0, %v3507
      %v3782 = vsub.f32 1.0, %v3508
      %v3783 = vsub.f32 1.0, %v3509
      %v3784 = vsub.f32 1.0, %v3510
      %v3785 = vsub.f32 1.0, %v3511
      %v3786 = vsub.f32 1.0, %v3512
      %v3787 = vsub.f32 1.0, %v3513
      %v3788 = vsub.f32 1.0, %v3514
      %v3789 = vsub.f32 1.0, %v3515
      %v3790 = vsub.f32 1.0, %v3516
      %v3791 = vsub.f32 1.0, %v3517
      %v3792 = vsub.f32 1.0, %v3518
      %v3793 = vsub.f32 1.0, %v3519
      %v3794 = vsub.f32 1.0, %v3520
      %v3795 = vsub.f32 1.0, %v3521
      %v3796 = vsub.f32 1.0, %v3522
      %v3797 = vsub.f32 1.0, %v3523
      %v3798 = vsub.f32 1.0, %v3524
      %v3799 = vsub.f32 1.0, %v3525
      %v3800 = vsub.f32 1.0, %v3526
      %v3801 = vsub.f32 1.0, %v3527
      %v3802 = vsub.f32 1.0, %v3528
      %v3803 = vsub.f32 1.0, %v3529
      %v3804 = vsub.f32 1.0, %v3530
      %v3805 = vsub.f32 1.0, %v3531
      %v3806 = vsub.f32 1.0, %v3532
      %v3807 = vsub.f32 1.0, %v3533
      %v3808 = vsub.f32 1.0, %v3534
      %v3809 = vsub.f32 1.0, %v3535
      %v3810 = vsub.f32 1.0, %v3536
      %v3811 = vsub.f32 1.0, %v3537
      %v3812 = vsub.f32 1.0, %v3538
      %v3813 = vsub.f32 1.0, %v3539
      %v3814 = vsub.f32 1.0, %v3540
      %v3815 = vsub.f32 1.0, %v3541
      %v3816 = vsub.f32 1.0, %v3542
      %v3817 = vsub.f32 1.0, %v3543
      %v3818 = vsub.f32 1.0, %v3544
      %v3819 = vsub.f32 1.0, %v3545
      %v3820 = vsub.f32 1.0, %v3546
      %v3821 = vsub.f32 1.0, %v3547
      %v3822 = vsub.f32 1.0, %v3548
      %v3823 = vsub.f32 1.0, %v3549
      %v3824 = vsub.f32 1.0, %v3550
      %v3825 = vsub.f32 1.0, %v3551
      %v3826 = vsub.f32 1.0, %v3552
      %v3827 = vsub.f32 1.0, %v3553
      %v3828 = vsub.f32 1.0, %v3554
      %v3829 = vsub.f32 1.0, %v3555
      %v3830 = vsub.f32 1.0, %v3556
      %v3831 = vsub.f32 1.0, %v3557
      %v3832 = vsub.f32 1.0, %v3558
      %v3833 = vsub.f32 1.0, %v3559
      %v3834 = vsub.f32 1.0, %v3560
      %v3835 = vsub.f32 1.0, %v3561
      %v3836 = vsub.f32 1.0, %v3562
      %v3837 = vsub.f32 1.0, %v3563
      %v3838 = vsub.f32 1.0, %v3564
      %v3839 = vsub.f32 1.0, %v3565
      %v3840 = vsub.f32 1.0, %v3566
      %v3841 = vsub.f32 1.0, %v3567
      %v3842 = vsub.f32 1.0, %v3568
      %v3843 = vsub.f32 1.0, %v3569
      %v3844 = vsub.f32 1.0, %v3570
      %v3845 = vsub.f32 1.0, %v3571
      %v3846 = vsub.f32 1.0, %v3572
      %v3847 = vsub.f32 1.0, %v3573
      %v3848 = vsub.f32 1.0, %v3574
      %v3849 = vsub.f32 1.0, %v3575
      %v3850 = vsub.f32 1.0, %v3576
      %v3851 = vsub.f32 1.0, %v3577
      %v3852 = vsub.f32 1.0, %v3578
      %v3853 = vsub.f32 1.0, %v3579
      %v3854 = vsub.f32 1.0, %v3580
      %v3855 = vsub.f32 1.0, %v3581
      %v3856 = vsub.f32 1.0, %v3582
      %v3857 = vsub.f32 1.0, %v3583
      %v3858 = vsub.f32 1.0, %v3584
      %v3859 = vsub.f32 1.0, %v3585
      %v3860 = vsub.f32 1.0, %v3586
      %v3861 = vsub.f32 1.0, %v3587
      %v3862 = vsub.f32 1.0, %v3588
      %v3863 = vsub.f32 1.0, %v3589
      %v3864 = vsub.f32 1.0, %v3590
      %v3865 = vsub.f32 1.0, %v3591
      %v3866 = vsub.f32 1.0, %v3592
      %v3867 = vsub.f32 1.0, %v3593
      %v3868 = vsub.f32 1.0, %v3594
      %v3869 = vsub.f32 1.0, %v3595
      %v3870 = vsub.f32 1.0, %v3596
      %v3871 = vsub.f32 1.0, %v3597
      %v3872 = vsub.f32 1.0, %v3598
      %v3873 = vsub.f32 1.0, %v3599
      %v3874 = vsub.f32 1.0, %v3600
      %v3875 = vsub.f32 1.0, %v3601
      %v3876 = vsub.f32 1.0, %v3602
      %v3877 = vsub.f32 1.0, %v3603
      %v3878 = vsub.f32 1.0, %v3604
      %v3879 = vsub.f32 1.0, %v3605
      %v3880 = vsub.f32 1.0, %v3606
      %v3881 = vsub.f32 1.0, %v3607
      %v3882 = vsub.f32 1.0, %v3608
      %v3883 = vsub.f32 1.0, %v3609
      %v3884 = vsub.f32 1.0, %v3610
      %v3885 = vsub.f32 1.0, %v3611
      %v3886 = vsub.f32 1.0, %v3612
      %v3887 = vsub.f32 1.0, %v3613
      %v3888 = vsub.f32 1.0, %v3614
      %v3889 = vsub.f32 1.0, %v3615
      %v3890 = vsub.f32 1.0, %v3616
      %v3891 = vsub.f32 1.0, %v3617
      %v3892 = vmax.f32 %v3618, 0.0
      %v3893 = vmax.f32 %v3619, 0.0
      %v3894 = vmax.f32 %v3620, 0.0
      %v3895 = vmax.f32 %v3621, 0.0
      %v3896 = vmax.f32 %v3622, 0.0
      %v3897 = vmax.f32 %v3623, 0.0
      %v3898 = vmax.f32 %v3624, 0.0
      %v3899 = vmax.f32 %v3625, 0.0
      %v3900 = vmax.f32 %v3626, 0.0
      %v3901 = vmax.f32 %v3627, 0.0
      %v3902 = vmax.f32 %v3628, 0.0
      %v3903 = vmax.f32 %v3629, 0.0
      %v3904 = vmax.f32 %v3630, 0.0
      %v3905 = vmax.f32 %v3631, 0.0
      %v3906 = vmax.f32 %v3632, 0.0
      %v3907 = vmax.f32 %v3633, 0.0
      %v3908 = vmax.f32 %v3634, 0.0
      %v3909 = vmax.f32 %v3635, 0.0
      %v3910 = vmax.f32 %v3636, 0.0
      %v3911 = vmax.f32 %v3637, 0.0
      %v3912 = vmax.f32 %v3638, 0.0
      %v3913 = vmax.f32 %v3639, 0.0
      %v3914 = vmax.f32 %v3640, 0.0
      %v3915 = vmax.f32 %v3641, 0.0
      %v3916 = vmax.f32 %v3642, 0.0
      %v3917 = vmax.f32 %v3643, 0.0
      %v3918 = vmax.f32 %v3644, 0.0
      %v3919 = vmax.f32 %v3645, 0.0
      %v3920 = vmax.f32 %v3646, 0.0
      %v3921 = vmax.f32 %v3647, 0.0
      %v3922 = vmax.f32 %v3648, 0.0
      %v3923 = vmax.f32 %v3649, 0.0
      %v3924 = vmax.f32 %v3650, 0.0
      %v3925 = vmax.f32 %v3651, 0.0
      %v3926 = vmax.f32 %v3652, 0.0
      %v3927 = vmax.f32 %v3653, 0.0
      %v3928 = vmax.f32 %v3654, 0.0
      %v3929 = vmax.f32 %v3655, 0.0
      %v3930 = vmax.f32 %v3656, 0.0
      %v3931 = vmax.f32 %v3657, 0.0
      %v3932 = vmax.f32 %v3658, 0.0
      %v3933 = vmax.f32 %v3659, 0.0
      %v3934 = vmax.f32 %v3660, 0.0
      %v3935 = vmax.f32 %v3661, 0.0
      %v3936 = vmax.f32 %v3662, 0.0
      %v3937 = vmax.f32 %v3663, 0.0
      %v3938 = vmax.f32 %v3664, 0.0
      %v3939 = vmax.f32 %v3665, 0.0
      %v3940 = vmax.f32 %v3666, 0.0
      %v3941 = vmax.f32 %v3667, 0.0
      %v3942 = vmax.f32 %v3668, 0.0
      %v3943 = vmax.f32 %v3669, 0.0
      %v3944 = vmax.f32 %v3670, 0.0
      %v3945 = vmax.f32 %v3671, 0.0
      %v3946 = vmax.f32 %v3672, 0.0
      %v3947 = vmax.f32 %v3673, 0.0
      %v3948 = vmax.f32 %v3674, 0.0
      %v3949 = vmax.f32 %v3675, 0.0
      %v3950 = vmax.f32 %v3676, 0.0
      %v3951 = vmax.f32 %v3677, 0.0
      %v3952 = vmax.f32 %v3678, 0.0
      %v3953 = vmax.f32 %v3679, 0.0
      %v3954 = vmax.f32 %v3680, 0.0
      %v3955 = vmax.f32 %v3681, 0.0
      %v3956 = vmax.f32 %v3682, 0.0
      %v3957 = vmax.f32 %v3683, 0.0
      %v3958 = vmax.f32 %v3684, 0.0
      %v3959 = vmax.f32 %v3685, 0.0
      %v3960 = vmax.f32 %v3686, 0.0
      %v3961 = vmax.f32 %v3687, 0.0
      %v3962 = vmax.f32 %v3688, 0.0
      %v3963 = vmax.f32 %v3689, 0.0
      %v3964 = vmax.f32 %v3690, 0.0
      %v3965 = vmax.f32 %v3691, 0.0
      %v3966 = vmax.f32 %v3692, 0.0
      %v3967 = vmax.f32 %v3693, 0.0
      %v3968 = vmax.f32 %v3694, 0.0
      %v3969 = vmax.f32 %v3695, 0.0
      %v3970 = vmax.f32 %v3696, 0.0
      %v3971 = vmax.f32 %v3697, 0.0
      %v3972 = vmax.f32 %v3698, 0.0
      %v3973 = vmax.f32 %v3699, 0.0
      %v3974 = vmax.f32 %v3700, 0.0
      %v3975 = vmax.f32 %v3701, 0.0
      %v3976 = vmax.f32 %v3702, 0.0
      %v3977 = vmax.f32 %v3703, 0.0
      %v3978 = vmax.f32 %v3704, 0.0
      %v3979 = vmax.f32 %v3705, 0.0
      %v3980 = vmax.f32 %v3706, 0.0
      %v3981 = vmax.f32 %v3707, 0.0
      %v3982 = vmax.f32 %v3708, 0.0
      %v3983 = vmax.f32 %v3709, 0.0
      %v3984 = vmax.f32 %v3710, 0.0
      %v3985 = vmax.f32 %v3711, 0.0
      %v3986 = vmax.f32 %v3712, 0.0
      %v3987 = vmax.f32 %v3713, 0.0
      %v3988 = vmax.f32 %v3714, 0.0
      %v3989 = vmax.f32 %v3715, 0.0
      %v3990 = vmax.f32 %v3716, 0.0
      %v3991 = vmax.f32 %v3717, 0.0
      %v3992 = vmax.f32 %v3718, 0.0
      %v3993 = vmax.f32 %v3719, 0.0
      %v3994 = vmax.f32 %v3720, 0.0
      %v3995 = vmax.f32 %v3721, 0.0
      %v3996 = vmax.f32 %v3722, 0.0
      %v3997 = vmax.f32 %v3723, 0.0
      %v3998 = vmax.f32 %v3724, 0.0
      %v3999 = vmax.f32 %v3725, 0.0
      %v4000 = vmax.f32 %v3726, 0.0
      %v4001 = vmax.f32 %v3727, 0.0
      %v4002 = vmax.f32 %v3728, 0.0
      %v4003 = vmax.f32 %v3729, 0.0
      %v4004 = vmax.f32 %v3730, 0.0
      %v4005 = vmax.f32 %v3731, 0.0
      %v4006 = vmax.f32 %v3732, 0.0
      %v4007 = vmax.f32 %v3733, 0.0
      %v4008 = vmax.f32 %v3734, 0.0
      %v4009 = vmax.f32 %v3735, 0.0
      %v4010 = vmax.f32 %v3736, 0.0
      %v4011 = vmax.f32 %v3737, 0.0
      %v4012 = vmax.f32 %v3738, 0.0
      %v4013 = vmax.f32 %v3739, 0.0
      %v4014 = vmax.f32 %v3740, 0.0
      %v4015 = vmax.f32 %v3741, 0.0
      %v4016 = vmax.f32 %v3742, 0.0
      %v4017 = vmax.f32 %v3743, 0.0
      %v4018 = vmax.f32 %v3744, 0.0
      %v4019 = vmax.f32 %v3745, 0.0
      %v4020 = vmax.f32 %v3746, 0.0
      %v4021 = vmax.f32 %v3747, 0.0
      %v4022 = vmax.f32 %v3748, 0.0
      %v4023 = vmax.f32 %v3749, 0.0
      %v4024 = vmax.f32 %v3750, 0.0
      %v4025 = vmax.f32 %v3751, 0.0
      %v4026 = vmax.f32 %v3752, 0.0
      %v4027 = vmax.f32 %v3753, 0.0
      %v4028 = vmax.f32 %v3754, 0.0
      %v4029 = vmax.f32 %v3755, 0.0
      %v4030 = vmax.f32 %v3756, 0.0
      %v4031 = vmax.f32 %v3757, 0.0
      %v4032 = vmax.f32 %v3758, 0.0
      %v4033 = vmax.f32 %v3759, 0.0
      %v4034 = vmax.f32 %v3760, 0.0
      %v4035 = vmax.f32 %v3761, 0.0
      %v4036 = vmax.f32 %v3762, 0.0
      %v4037 = vmax.f32 %v3763, 0.0
      %v4038 = vmax.f32 %v3764, 0.0
      %v4039 = vmax.f32 %v3765, 0.0
      %v4040 = vmax.f32 %v3766, 0.0
      %v4041 = vmax.f32 %v3767, 0.0
      %v4042 = vmax.f32 %v3768, 0.0
      %v4043 = vmax.f32 %v3769, 0.0
      %v4044 = vmax.f32 %v3770, 0.0
      %v4045 = vmax.f32 %v3771, 0.0
      %v4046 = vmax.f32 %v3772, 0.0
      %v4047 = vmax.f32 %v3773, 0.0
      %v4048 = vmax.f32 %v3774, 0.0
      %v4049 = vmax.f32 %v3775, 0.0
      %v4050 = vmax.f32 %v3776, 0.0
      %v4051 = vmax.f32 %v3777, 0.0
      %v4052 = vmax.f32 %v3778, 0.0
      %v4053 = vmax.f32 %v3779, 0.0
      %v4054 = vmax.f32 %v3780, 0.0
      %v4055 = vmax.f32 %v3781, 0.0
      %v4056 = vmax.f32 %v3782, 0.0
      %v4057 = vmax.f32 %v3783, 0.0
      %v4058 = vmax.f32 %v3784, 0.0
      %v4059 = vmax.f32 %v3785, 0.0
      %v4060 = vmax.f32 %v3786, 0.0
      %v4061 = vmax.f32 %v3787, 0.0
      %v4062 = vmax.f32 %v3788, 0.0
      %v4063 = vmax.f32 %v3789, 0.0
      %v4064 = vmax.f32 %v3790, 0.0
      %v4065 = vmax.f32 %v3791, 0.0
      %v4066 = vmax.f32 %v3792, 0.0
      %v4067 = vmax.f32 %v3793, 0.0
      %v4068 = vmax.f32 %v3794, 0.0
      %v4069 = vmax.f32 %v3795, 0.0
      %v4070 = vmax.f32 %v3796, 0.0
      %v4071 = vmax.f32 %v3797, 0.0
      %v4072 = vmax.f32 %v3798, 0.0
      %v4073 = vmax.f32 %v3799, 0.0
      %v4074 = vmax.f32 %v3800, 0.0
      %v4075 = vmax.f32 %v3801, 0.0
      %v4076 = vmax.f32 %v3802, 0.0
      %v4077 = vmax.f32 %v3803, 0.0
      %v4078 = vmax.f32 %v3804, 0.0
      %v4079 = vmax.f32 %v3805, 0.0
      %v4080 = vmax.f32 %v3806, 0.0
      %v4081 = vmax.f32 %v3807, 0.0
      %v4082 = vmax.f32 %v3808, 0.0
      %v4083 = vmax.f32 %v3809, 0.0
      %v4084 = vmax.f32 %v3810, 0.0
      %v4085 = vmax.f32 %v3811, 0.0
      %v4086 = vmax.f32 %v3812, 0.0
      %v4087 = vmax.f32 %v3813, 0.0
      %v4088 = vmax.f32 %v3814, 0.0
      %v4089 = vmax.f32 %v3815, 0.0
      %v4090 = vmax.f32 %v3816, 0.0
      %v4091 = vmax.f32 %v3817, 0.0
      %v4092 = vmax.f32 %v3818, 0.0
      %v4093 = vmax.f32 %v3819, 0.0
      %v4094 = vmax.f32 %v3820, 0.0
      %v4095 = vmax.f32 %v3821, 0.0
      %v4096 = vmax.f32 %v3822, 0.0
      %v4097 = vmax.f32 %v3823, 0.0
      %v4098 = vmax.f32 %v3824, 0.0
      %v4099 = vmax.f32 %v3825, 0.0
      %v4100 = vmax.f32 %v3826, 0.0
      %v4101 = vmax.f32 %v3827, 0.0
      %v4102 = vmax.f32 %v3828, 0.0
      %v4103 = vmax.f32 %v3829, 0.0
      %v4104 = vmax.f32 %v3830, 0.0
      %v4105 = vmax.f32 %v3831, 0.0
      %v4106 = vmax.f32 %v3832, 0.0
      %v4107 = vmax.f32 %v3833, 0.0
      %v4108 = vmax.f32 %v3834, 0.0
      %v4109 = vmax.f32 %v3835, 0.0
      %v4110 = vmax.f32 %v3836, 0.0
      %v4111 = vmax.f32 %v3837, 0.0
      %v4112 = vmax.f32 %v3838, 0.0
      %v4113 = vmax.f32 %v3839, 0.0
      %v4114 = vmax.f32 %v3840, 0.0
      %v4115 = vmax.f32 %v3841, 0.0
      %v4116 = vmax.f32 %v3842, 0.0
      %v4117 = vmax.f32 %v3843, 0.0
      %v4118 = vmax.f32 %v3844, 0.0
      %v4119 = vmax.f32 %v3845, 0.0
      %v4120 = vmax.f32 %v3846, 0.0
      %v4121 = vmax.f32 %v3847, 0.0
      %v4122 = vmax.f32 %v3848, 0.0
      %v4123 = vmax.f32 %v3849, 0.0
      %v4124 = vmax.f32 %v3850, 0.0
      %v4125 = vmax.f32 %v3851, 0.0
      %v4126 = vmax.f32 %v3852, 0.0
      %v4127 = vmax.f32 %v3853, 0.0
      %v4128 = vmax.f32 %v3854, 0.0
      %v4129 = vmax.f32 %v3855, 0.0
      %v4130 = vmax.f32 %v3856, 0.0
      %v4131 = vmax.f32 %v3857, 0.0
      %v4132 = vmax.f32 %v3858, 0.0
      %v4133 = vmax.f32 %v3859, 0.0
      %v4134 = vmax.f32 %v3860, 0.0
      %v4135 = vmax.f32 %v3861, 0.0
      %v4136 = vmax.f32 %v3862, 0.0
      %v4137 = vmax.f32 %v3863, 0.0
      %v4138 = vmax.f32 %v3864, 0.0
      %v4139 = vmax.f32 %v3865, 0.0
      %v4140 = vmax.f32 %v3866, 0.0
      %v4141 = vmax.f32 %v3867, 0.0
      %v4142 = vmax.f32 %v3868, 0.0
      %v4143 = vmax.f32 %v3869, 0.0
      %v4144 = vmax.f32 %v3870, 0.0
      %v4145 = vmax.f32 %v3871, 0.0
      %v4146 = vmax.f32 %v3872, 0.0
      %v4147 = vmax.f32 %v3873, 0.0
      %v4148 = vmax.f32 %v3874, 0.0
      %v4149 = vmax.f32 %v3875, 0.0
      %v4150 = vmax.f32 %v3876, 0.0
      %v4151 = vmax.f32 %v3877, 0.0
      %v4152 = vmax.f32 %v3878, 0.0
      %v4153 = vmax.f32 %v3879, 0.0
      %v4154 = vmax.f32 %v3880, 0.0
      %v4155 = vmax.f32 %v3881, 0.0
      %v4156 = vmax.f32 %v3882, 0.0
      %v4157 = vmax.f32 %v3883, 0.0
      %v4158 = vmax.f32 %v3884, 0.0
      %v4159 = vmax.f32 %v3885, 0.0
      %v4160 = vmax.f32 %v3886, 0.0
      %v4161 = vmax.f32 %v3887, 0.0
      %v4162 = vmax.f32 %v3888, 0.0
      %v4163 = vmax.f32 %v3889, 0.0
      %v4164 = vmax.f32 %v3890, 0.0
      %v4165 = vmax.f32 %v3891, 0.0
      %v4166 = vld [vmem:[%s0] sm:$0xff]
      %v4167 = vld [vmem:[%s0 + $0x8] sm:$0xff]
      %v4168 = vld [vmem:[%s0 + $0x10] sm:$0xff]
      %v4169 = vld [vmem:[%s0 + $0x18] sm:$0xff]
      %v4170 = vld [vmem:[%s0 + $0x20] sm:$0xff]
      %v4171 = vld [vmem:[%s0 + $0x28] sm:$0xff]
      %v4172 = vld [vmem:[%s0 + $0x30] sm:$0xff]
      %v4173 = vld [vmem:[%s0 + $0x38] sm:$0xff]
      %v4174 = vld [vmem:[%s0 + $0x40] sm:$0xff]
      %v4175 = vld [vmem:[%s0 + $0x48] sm:$0xff]
      %v4176 = vld [vmem:[%s0 + $0x50] sm:$0xff]
      %v4177 = vld [vmem:[%s0 + $0x58] sm:$0xff]
      %v4178 = vld [vmem:[%s0 + $0x60] sm:$0xff]
      %v4179 = vld [vmem:[%s0 + $0x68] sm:$0xff]
      %v4180 = vld [vmem:[%s0 + $0x70] sm:$0xff]
      %v4181 = vld [vmem:[%s0 + $0x78] sm:$0xff]
      %v4182 = vld [vmem:[%s0 + $0x80] sm:$0xff]
      %v4183 = vld [vmem:[%s0 + $0x88] sm:$0xff]
      %v4184 = vld [vmem:[%s0 + $0x90] sm:$0xff]
      %v4185 = vld [vmem:[%s0 + $0x98] sm:$0xff]
      %v4186 = vld [vmem:[%s0 + $0xa0] sm:$0xff]
      %v4187 = vld [vmem:[%s0 + $0xa8] sm:$0xff]
      %v4188 = vld [vmem:[%s0 + $0xb0] sm:$0xff]
      %v4189 = vld [vmem:[%s0 + $0xb8] sm:$0xff]
      %v4190 = vld [vmem:[%s0 + $0xc0] sm:$0xff]
      %v4191 = vld [vmem:[%s0 + $0xc8] sm:$0xff]
      %v4192 = vld [vmem:[%s0 + $0xd0] sm:$0xff]
      %v4193 = vld [vmem:[%s0 + $0xd8] sm:$0xff]
      %v4194 = vld [vmem:[%s0 + $0xe0] sm:$0xff]
      %v4195 = vld [vmem:[%s0 + $0xe8] sm:$0xff]
      %v4196 = vld [vmem:[%s0 + $0xf0] sm:$0xff]
      %v4197 = vld [vmem:[%s0 + $0xf8] sm:$0xff]
      %v4198 = vld [vmem:[%s0 + $0x100] sm:$0xff]
      %v4199 = vld [vmem:[%s0 + $0x108] sm:$0xff]
      %v4200 = vld [vmem:[%s0 + $0x110] sm:$0xff]
      %v4201 = vld [vmem:[%s0 + $0x118] sm:$0xff]
      %v4202 = vld [vmem:[%s0 + $0x120] sm:$0xff]
      %v4203 = vld [vmem:[%s0 + $0x128] sm:$0xff]
      %v4204 = vld [vmem:[%s0 + $0x130] sm:$0xff]
      %v4205 = vld [vmem:[%s0 + $0x138] sm:$0xff]
      %v4206 = vld [vmem:[%s0 + $0x140] sm:$0xff]
      %v4207 = vld [vmem:[%s0 + $0x148] sm:$0xff]
      %v4208 = vld [vmem:[%s0 + $0x150] sm:$0xff]
      %v4209 = vld [vmem:[%s0 + $0x158] sm:$0xff]
      %v4210 = vld [vmem:[%s0 + $0x160] sm:$0xff]
      %v4211 = vld [vmem:[%s0 + $0x168] sm:$0xff]
      %v4212 = vld [vmem:[%s0 + $0x170] sm:$0xff]
      %v4213 = vld [vmem:[%s0 + $0x178] sm:$0xff]
      %v4214 = vld [vmem:[%s0 + $0x180] sm:$0xff]
      %v4215 = vld [vmem:[%s0 + $0x188] sm:$0xff]
      %v4216 = vld [vmem:[%s0 + $0x190] sm:$0xff]
      %v4217 = vld [vmem:[%s0 + $0x198] sm:$0xff]
      %v4218 = vld [vmem:[%s0 + $0x1a0] sm:$0xff]
      %v4219 = vld [vmem:[%s0 + $0x1a8] sm:$0xff]
      %v4220 = vld [vmem:[%s0 + $0x1b0] sm:$0xff]
      %v4221 = vld [vmem:[%s0 + $0x1b8] sm:$0xff]
      %v4222 = vld [vmem:[%s0 + $0x1c0] sm:$0xff]
      %v4223 = vld [vmem:[%s0 + $0x1c8] sm:$0xff]
      %v4224 = vld [vmem:[%s0 + $0x1d0] sm:$0xff]
      %v4225 = vld [vmem:[%s0 + $0x1d8] sm:$0xff]
      %v4226 = vld [vmem:[%s0 + $0x1e0] sm:$0xff]
      %v4227 = vld [vmem:[%s0 + $0x1e8] sm:$0xff]
      %v4228 = vld [vmem:[%s0 + $0x1f0] sm:$0xff]
      %v4229 = vld [vmem:[%s0 + $0x1f8] sm:$0xff]
      %v4230 = vld [vmem:[%s0 + $0x200] sm:$0xff]
      %v4231 = vld [vmem:[%s0 + $0x208] sm:$0xff]
      %v4232 = vld [vmem:[%s0 + $0x210] sm:$0xff]
      %v4233 = vld [vmem:[%s0 + $0x218] sm:$0xff]
      %v4234 = vld [vmem:[%s0 + $0x220] sm:$0xff]
      %v4235 = vld [vmem:[%s0 + $0x228] sm:$0xff]
      %v4236 = vld [vmem:[%s0 + $0x230] sm:$0xff]
      %v4237 = vld [vmem:[%s0 + $0x238] sm:$0xff]
      %v4238 = vld [vmem:[%s0 + $0x240] sm:$0xff]
      %v4239 = vld [vmem:[%s0 + $0x248] sm:$0xff]
      %v4240 = vld [vmem:[%s0 + $0x250] sm:$0xff]
      %v4241 = vld [vmem:[%s0 + $0x258] sm:$0xff]
      %v4242 = vld [vmem:[%s0 + $0x260] sm:$0xff]
      %v4243 = vld [vmem:[%s0 + $0x268] sm:$0xff]
      %v4244 = vld [vmem:[%s0 + $0x270] sm:$0xff]
      %v4245 = vld [vmem:[%s0 + $0x278] sm:$0xff]
      %v4246 = vld [vmem:[%s0 + $0x280] sm:$0xff]
      %v4247 = vld [vmem:[%s0 + $0x288] sm:$0xff]
      %v4248 = vld [vmem:[%s0 + $0x290] sm:$0xff]
      %v4249 = vld [vmem:[%s0 + $0x298] sm:$0xff]
      %v4250 = vld [vmem:[%s0 + $0x2a0] sm:$0xff]
      %v4251 = vld [vmem:[%s0 + $0x2a8] sm:$0xff]
      %v4252 = vld [vmem:[%s0 + $0x2b0] sm:$0xff]
      %v4253 = vld [vmem:[%s0 + $0x2b8] sm:$0xff]
      %v4254 = vld [vmem:[%s0 + $0x2c0] sm:$0xff]
      %v4255 = vld [vmem:[%s0 + $0x2c8] sm:$0xff]
      %v4256 = vld [vmem:[%s0 + $0x2d0] sm:$0xff]
      %v4257 = vld [vmem:[%s0 + $0x2d8] sm:$0xff]
      %v4258 = vld [vmem:[%s0 + $0x2e0] sm:$0xff]
      %v4259 = vld [vmem:[%s0 + $0x2e8] sm:$0xff]
      %v4260 = vld [vmem:[%s0 + $0x2f0] sm:$0xff]
      %v4261 = vld [vmem:[%s0 + $0x2f8] sm:$0xff]
      %v4262 = vld [vmem:[%s0 + $0x300] sm:$0xff]
      %v4263 = vld [vmem:[%s0 + $0x308] sm:$0xff]
      %v4264 = vld [vmem:[%s0 + $0x310] sm:$0xff]
      %v4265 = vld [vmem:[%s0 + $0x318] sm:$0xff]
      %v4266 = vld [vmem:[%s0 + $0x320] sm:$0xff]
      %v4267 = vld [vmem:[%s0 + $0x328] sm:$0xff]
      %v4268 = vld [vmem:[%s0 + $0x330] sm:$0xff]
      %v4269 = vld [vmem:[%s0 + $0x338] sm:$0xff]
      %v4270 = vld [vmem:[%s0 + $0x340] sm:$0xff]
      %v4271 = vld [vmem:[%s0 + $0x348] sm:$0xff]
      %v4272 = vld [vmem:[%s0 + $0x350] sm:$0xff]
      %v4273 = vld [vmem:[%s0 + $0x358] sm:$0xff]
      %v4274 = vld [vmem:[%s0 + $0x360] sm:$0xff]
      %v4275 = vld [vmem:[%s0 + $0x368] sm:$0xff]
      %v4276 = vld [vmem:[%s0 + $0x370] sm:$0xff]
      %v4277 = vld [vmem:[%s0 + $0x378] sm:$0xff]
      %v4278 = vld [vmem:[%s0 + $0x380] sm:$0xff]
      %v4279 = vld [vmem:[%s0 + $0x388] sm:$0xff]
      %v4280 = vld [vmem:[%s0 + $0x390] sm:$0xff]
      %v4281 = vld [vmem:[%s0 + $0x398] sm:$0xff]
      %v4282 = vld [vmem:[%s0 + $0x3a0] sm:$0xff]
      %v4283 = vmul.f32 %v1956, %v3892
      %v4284 = vmul.f32 %v1957, %v3893
      %v4285 = vmul.f32 %v1958, %v3894
      %v4286 = vmul.f32 %v1959, %v3895
      %v4287 = vmul.f32 %v1960, %v3896
      %v4288 = vmul.f32 %v1961, %v3897
      %v4289 = vmul.f32 %v1962, %v3898
      %v4290 = vmul.f32 %v1963, %v3899
      %v4291 = vmul.f32 %v1964, %v3900
      %v4292 = vmul.f32 %v1965, %v3901
      %v4293 = vmul.f32 %v1966, %v3902
      %v4294 = vmul.f32 %v1967, %v3903
      %v4295 = vmul.f32 %v1968, %v3904
      %v4296 = vmul.f32 %v1969, %v3905
      %v4297 = vmul.f32 %v1970, %v3906
      %v4298 = vmul.f32 %v1971, %v3907
      %v4299 = vmul.f32 %v1972, %v3908
      %v4300 = vmul.f32 %v1973, %v3909
      %v4301 = vmul.f32 %v1974, %v3910
      %v4302 = vmul.f32 %v1975, %v3911
      %v4303 = vmul.f32 %v1976, %v3912
      %v4304 = vmul.f32 %v1977, %v3913
      %v4305 = vmul.f32 %v1978, %v3914
      %v4306 = vmul.f32 %v1979, %v3915
      %v4307 = vmul.f32 %v1980, %v3916
      %v4308 = vmul.f32 %v1981, %v3917
      %v4309 = vmul.f32 %v1982, %v3918
      %v4310 = vmul.f32 %v1983, %v3919
      %v4311 = vmul.f32 %v1984, %v3920
      %v4312 = vmul.f32 %v1985, %v3921
      %v4313 = vmul.f32 %v1986, %v3922
      %v4314 = vmul.f32 %v1987, %v3923
      %v4315 = vmul.f32 %v1988, %v3924
      %v4316 = vmul.f32 %v1989, %v3925
      %v4317 = vmul.f32 %v1990, %v3926
      %v4318 = vmul.f32 %v1991, %v3927
      %v4319 = vmul.f32 %v1992, %v3928
      %v4320 = vmul.f32 %v1993, %v3929
      %v4321 = vmul.f32 %v1994, %v3930
      %v4322 = vmul.f32 %v1995, %v3931
      %v4323 = vmul.f32 %v1996, %v3932
      %v4324 = vmul.f32 %v1997, %v3933
      %v4325 = vmul.f32 %v1998, %v3934
      %v4326 = vmul.f32 %v1999, %v3935
      %v4327 = vmul.f32 %v2000, %v3936
      %v4328 = vmul.f32 %v2001, %v3937
      %v4329 = vmul.f32 %v2002, %v3938
      %v4330 = vmul.f32 %v2003, %v3939
      %v4331 = vmul.f32 %v2004, %v3940
      %v4332 = vmul.f32 %v2005, %v3941
      %v4333 = vmul.f32 %v2006, %v3942
      %v4334 = vmul.f32 %v2007, %v3943
      %v4335 = vmul.f32 %v2008, %v3944
      %v4336 = vmul.f32 %v2009, %v3945
      %v4337 = vmul.f32 %v2010, %v3946
      %v4338 = vmul.f32 %v2011, %v3947
      %v4339 = vmul.f32 %v2012, %v3948
      %v4340 = vmul.f32 %v2013, %v3949
      %v4341 = vmul.f32 %v2014, %v3950
      %v4342 = vmul.f32 %v2015, %v3951
      %v4343 = vmul.f32 %v2016, %v3952
      %v4344 = vmul.f32 %v2017, %v3953
      %v4345 = vmul.f32 %v2018, %v3954
      %v4346 = vmul.f32 %v2019, %v3955
      %v4347 = vmul.f32 %v2020, %v3956
      %v4348 = vmul.f32 %v2021, %v3957
      %v4349 = vmul.f32 %v2022, %v3958
      %v4350 = vmul.f32 %v2023, %v3959
      %v4351 = vmul.f32 %v2024, %v3960
      %v4352 = vmul.f32 %v2025, %v3961
      %v4353 = vmul.f32 %v2026, %v3962
      %v4354 = vmul.f32 %v2027, %v3963
      %v4355 = vmul.f32 %v2028, %v3964
      %v4356 = vmul.f32 %v2029, %v3965
      %v4357 = vmul.f32 %v2030, %v3966
      %v4358 = vmul.f32 %v2031, %v3967
      %v4359 = vmul.f32 %v2032, %v3968
      %v4360 = vmul.f32 %v2033, %v3969
      %v4361 = vmul.f32 %v2034, %v3970
      %v4362 = vmul.f32 %v2035, %v3971
      %v4363 = vmul.f32 %v2036, %v3972
      %v4364 = vmul.f32 %v2037, %v3973
      %v4365 = vmul.f32 %v2038, %v3974
      %v4366 = vmul.f32 %v2039, %v3975
      %v4367 = vmul.f32 %v2040, %v3976
      %v4368 = vmul.f32 %v2041, %v3977
      %v4369 = vmul.f32 %v2042, %v3978
      %v4370 = vmul.f32 %v2043, %v3979
      %v4371 = vmul.f32 %v2044, %v3980
      %v4372 = vmul.f32 %v2045, %v3981
      %v4373 = vmul.f32 %v2046, %v3982
      %v4374 = vmul.f32 %v2047, %v3983
      %v4375 = vmul.f32 %v2048, %v3984
      %v4376 = vmul.f32 %v2049, %v3985
      %v4377 = vmul.f32 %v2050, %v3986
      %v4378 = vmul.f32 %v2051, %v3987
      %v4379 = vmul.f32 %v2052, %v3988
      %v4380 = vmul.f32 %v2053, %v3989
      %v4381 = vmul.f32 %v2054, %v3990
      %v4382 = vmul.f32 %v2055, %v3991
      %v4383 = vmul.f32 %v2056, %v3992
      %v4384 = vmul.f32 %v2057, %v3993
      %v4385 = vmul.f32 %v2058, %v3994
      %v4386 = vmul.f32 %v2059, %v3995
      %v4387 = vmul.f32 %v2060, %v3996
      %v4388 = vmul.f32 %v2061, %v3997
      %v4389 = vmul.f32 %v2062, %v3998
      %v4390 = vmul.f32 %v2063, %v3999
      %v4391 = vmul.f32 %v2064, %v4000
      %v4392 = vmul.f32 %v2065, %v4001
      %v4393 = vmul.f32 %v2066, %v4002
      %v4394 = vmul.f32 %v2067, %v4003
      %v4395 = vmul.f32 %v2068, %v4004
      %v4396 = vmul.f32 %v2069, %v4005
      %v4397 = vmul.f32 %v2070, %v4006
      %v4398 = vmul.f32 %v2071, %v4007
      %v4399 = vmul.f32 %v2072, %v4008
      %v4400 = vmul.f32 %v2073, %v4009
      %v4401 = vmul.f32 %v2074, %v4010
      %v4402 = vmul.f32 %v2075, %v4011
      %v4403 = vmul.f32 %v2076, %v4012
      %v4404 = vmul.f32 %v2077, %v4013
      %v4405 = vmul.f32 %v2078, %v4014
      %v4406 = vmul.f32 %v2079, %v4015
      %v4407 = vmul.f32 %v2080, %v4016
      %v4408 = vmul.f32 %v2081, %v4017
      %v4409 = vmul.f32 %v2082, %v4018
      %v4410 = vmul.f32 %v2083, %v4019
      %v4411 = vmul.f32 %v2084, %v4020
      %v4412 = vmul.f32 %v2085, %v4021
      %v4413 = vmul.f32 %v2086, %v4022
      %v4414 = vmul.f32 %v2087, %v4023
      %v4415 = vmul.f32 %v2088, %v4024
      %v4416 = vmul.f32 %v2089, %v4025
      %v4417 = vmul.f32 %v2090, %v4026
      %v4418 = vmul.f32 %v2091, %v4027
      %v4419 = vmul.f32 %v2092, %v4028
      %v4420 = vmul.f32 %v2093, %v4029
      %v4421 = vmul.f32 %v2094, %v4030
      %v4422 = vmul.f32 %v2095, %v4031
      %v4423 = vmul.f32 %v2096, %v4032
      %v4424 = vmul.f32 %v2097, %v4033
      %v4425 = vmul.f32 %v2098, %v4034
      %v4426 = vmul.f32 %v2099, %v4035
      %v4427 = vmul.f32 %v2100, %v4036
      %v4428 = vmul.f32 %v2101, %v4037
      %v4429 = vmul.f32 %v2102, %v4038
      %v4430 = vmul.f32 %v2103, %v4039
      %v4431 = vmul.f32 %v2104, %v4040
      %v4432 = vmul.f32 %v2105, %v4041
      %v4433 = vmul.f32 %v2106, %v4042
      %v4434 = vmul.f32 %v2107, %v4043
      %v4435 = vmul.f32 %v2108, %v4044
      %v4436 = vmul.f32 %v2109, %v4045
      %v4437 = vmul.f32 %v2110, %v4046
      %v4438 = vmul.f32 %v2111, %v4047
      %v4439 = vmul.f32 %v2112, %v4048
      %v4440 = vmul.f32 %v2113, %v4049
      %v4441 = vmul.f32 %v2114, %v4050
      %v4442 = vmul.f32 %v2115, %v4051
      %v4443 = vmul.f32 %v2116, %v4052
      %v4444 = vmul.f32 %v2117, %v4053
      %v4445 = vmul.f32 %v2118, %v4054
      %v4446 = vmul.f32 %v2119, %v4055
      %v4447 = vmul.f32 %v2120, %v4056
      %v4448 = vmul.f32 %v2121, %v4057
      %v4449 = vmul.f32 %v2122, %v4058
      %v4450 = vmul.f32 %v2123, %v4059
      %v4451 = vmul.f32 %v2124, %v4060
      %v4452 = vmul.f32 %v2125, %v4061
      %v4453 = vmul.f32 %v2126, %v4062
      %v4454 = vmul.f32 %v2127, %v4063
      %v4455 = vmul.f32 %v2128, %v4064
      %v4456 = vmul.f32 %v2129, %v4065
      %v4457 = vmul.f32 %v2130, %v4066
      %v4458 = vmul.f32 %v2131, %v4067
      %v4459 = vmul.f32 %v2132, %v4068
      %v4460 = vmul.f32 %v2133, %v4069
      %v4461 = vmul.f32 %v2134, %v4070
      %v4462 = vmul.f32 %v2135, %v4071
      %v4463 = vmul.f32 %v2136, %v4072
      %v4464 = vmul.f32 %v2137, %v4073
      %v4465 = vmul.f32 %v2138, %v4074
      %v4466 = vmul.f32 %v2139, %v4075
      %v4467 = vmul.f32 %v2140, %v4076
      %v4468 = vmul.f32 %v2141, %v4077
      %v4469 = vmul.f32 %v2142, %v4078
      %v4470 = vmul.f32 %v2143, %v4079
      %v4471 = vmul.f32 %v2144, %v4080
      %v4472 = vmul.f32 %v2145, %v4081
      %v4473 = vmul.f32 %v2146, %v4082
      %v4474 = vmul.f32 %v2147, %v4083
      %v4475 = vmul.f32 %v2148, %v4084
      %v4476 = vmul.f32 %v2149, %v4085
      %v4477 = vmul.f32 %v2150, %v4086
      %v4478 = vmul.f32 %v2151, %v4087
      %v4479 = vmul.f32 %v2152, %v4088
      %v4480 = vmul.f32 %v2153, %v4089
      %v4481 = vmul.f32 %v2154, %v4090
      %v4482 = vmul.f32 %v2155, %v4091
      %v4483 = vmul.f32 %v2156, %v4092
      %v4484 = vmul.f32 %v2157, %v4093
      %v4485 = vmul.f32 %v2158, %v4094
      %v4486 = vmul.f32 %v2159, %v4095
      %v4487 = vmul.f32 %v2160, %v4096
      %v4488 = vmul.f32 %v2161, %v4097
      %v4489 = vmul.f32 %v2162, %v4098
      %v4490 = vmul.f32 %v2163, %v4099
      %v4491 = vmul.f32 %v2164, %v4100
      %v4492 = vmul.f32 %v2165, %v4101
      %v4493 = vmul.f32 %v2166, %v4102
      %v4494 = vmul.f32 %v2167, %v4103
      %v4495 = vmul.f32 %v2168, %v4104
      %v4496 = vmul.f32 %v2169, %v4105
      %v4497 = vmul.f32 %v2170, %v4106
      %v4498 = vmul.f32 %v2171, %v4107
      %v4499 = vmul.f32 %v2172, %v4108
      %v4500 = vmul.f32 %v2173, %v4109
      %v4501 = vmul.f32 %v2174, %v4110
      %v4502 = vmul.f32 %v2175, %v4111
      %v4503 = vmul.f32 %v2176, %v4112
      %v4504 = vmul.f32 %v2177, %v4113
      %v4505 = vmul.f32 %v2178, %v4114
      %v4506 = vmul.f32 %v2179, %v4115
      %v4507 = vmul.f32 %v2180, %v4116
      %v4508 = vmul.f32 %v2181, %v4117
      %v4509 = vmul.f32 %v2182, %v4118
      %v4510 = vmul.f32 %v2183, %v4119
      %v4511 = vmul.f32 %v2184, %v4120
      %v4512 = vmul.f32 %v2185, %v4121
      %v4513 = vmul.f32 %v2186, %v4122
      %v4514 = vmul.f32 %v2187, %v4123
      %v4515 = vmul.f32 %v2188, %v4124
      %v4516 = vmul.f32 %v2189, %v4125
      %v4517 = vmul.f32 %v2190, %v4126
      %v4518 = vmul.f32 %v2191, %v4127
      %v4519 = vmul.f32 %v2192, %v4128
      %v4520 = vmul.f32 %v2193, %v4129
      %v4521 = vmul.f32 %v2194, %v4130
      %v4522 = vmul.f32 %v2195, %v4131
      %v4523 = vmul.f32 %v2196, %v4132
      %v4524 = vmul.f32 %v2197, %v4133
      %v4525 = vmul.f32 %v2198, %v4134
      %v4526 = vmul.f32 %v2199, %v4135
      %v4527 = vmul.f32 %v2200, %v4136
      %v4528 = vmul.f32 %v2201, %v4137
      %v4529 = vmul.f32 %v2202, %v4138
      %v4530 = vmul.f32 %v2203, %v4139
      %v4531 = vmul.f32 %v2204, %v4140
      %v4532 = vmul.f32 %v2205, %v4141
      %v4533 = vmul.f32 %v2206, %v4142
      %v4534 = vmul.f32 %v2207, %v4143
      %v4535 = vmul.f32 %v2208, %v4144
      %v4536 = vmul.f32 %v2209, %v4145
      %v4537 = vmul.f32 %v2210, %v4146
      %v4538 = vmul.f32 %v2211, %v4147
      %v4539 = vmul.f32 %v2212, %v4148
      %v4540 = vmul.f32 %v2213, %v4149
      %v4541 = vmul.f32 %v2214, %v4150
      %v4542 = vmul.f32 %v2215, %v4151
      %v4543 = vmul.f32 %v2216, %v4152
      %v4544 = vmul.f32 %v2217, %v4153
      %v4545 = vmul.f32 %v2218, %v4154
      %v4546 = vmul.f32 %v2219, %v4155
      %v4547 = vmul.f32 %v2220, %v4156
      %v4548 = vmul.f32 %v2221, %v4157
      %v4549 = vmul.f32 %v2222, %v4158
      %v4550 = vmul.f32 %v2223, %v4159
      %v4551 = vmul.f32 %v2224, %v4160
      %v4552 = vmul.f32 %v2225, %v4161
      %v4553 = vmul.f32 %v2226, %v4162
      %v4554 = vmul.f32 %v2227, %v4163
      %v4555 = vmul.f32 %v2228, %v4164
      %v4556 = vmul.f32 %v2229, %v4165
      %vm4557 = vcmask 588800
      %v4559 = vsel %vm4557, %v4174, 0
      %v4562 = vsel %vm4557, %v4183, 0
      %v4565 = vsel %vm4557, %v4192, 0
      %v4568 = vsel %vm4557, %v4201, 0
      %v4571 = vsel %vm4557, %v4210, 0
      %v4574 = vsel %vm4557, %v4219, 0
      %v4577 = vsel %vm4557, %v4228, 0
      %v4580 = vsel %vm4557, %v4237, 0
      %v4583 = vsel %vm4557, %v4246, 0
      %v4586 = vsel %vm4557, %v4255, 0
      %v4589 = vsel %vm4557, %v4264, 0
      %v4592 = vsel %vm4557, %v4273, 0
      %v4595 = vsel %vm4557, %v4282, 0
      %4597 = vmatprep.subr.mxu0 %v4314
      %4598 = vmatpush1.msra.mxu0 %v4313
      %4599 = vmatprep.subr.mxu0 %v4312
      %4600 = vmatpush1.msra.mxu0 %v4311
      %4601 = vmatprep.subr.mxu0 %v4310
      %4602 = vmatpush1.msra.mxu0 %v4309
      %4603 = vmatprep.subr.mxu0 %v4308
      %4604 = vmatpush1.msra.mxu0 %v4307
      %4605 = vmatprep.subr.mxu0 %v4306
      %4606 = vmatpush1.msra.mxu0 %v4305
      %4607 = vmatprep.subr.mxu0 %v4304
      %4608 = vmatpush1.msra.mxu0 %v4303
      %4609 = vmatprep.subr.mxu0 %v4302
      %4610 = vmatpush1.msra.mxu0 %v4301
      %4611 = vmatprep.subr.mxu0 %v4300
      %4612 = vmatpush1.msra.mxu0 %v4299
      %4613 = vmatprep.subr.mxu0 %v4298
      %4614 = vmatpush1.msra.mxu0 %v4297
      %4615 = vmatprep.subr.mxu0 %v4296
      %4616 = vmatpush1.msra.mxu0 %v4295
      %4617 = vmatprep.subr.mxu0 %v4294
      %4618 = vmatpush1.msra.mxu0 %v4293
      %4619 = vmatprep.subr.mxu0 %v4292
      %4620 = vmatpush1.msra.mxu0 %v4291
      %4621 = vmatprep.subr.mxu0 %v4290
      %4622 = vmatpush1.msra.mxu0 %v4289
      %4623 = vmatprep.subr.mxu0 %v4288
      %4624 = vmatpush1.msra.mxu0 %v4287
      %4625 = vmatprep.subr.mxu0 %v4286
      %4626 = vmatpush1.msra.mxu0 %v4285
      %4627 = vmatprep.subr.mxu0 %v4284
      %4628 = vmatpush1.msra.mxu0 %v4283
      %4629 = vmatprep.subr.mxu0 %v4346
      %4630 = vmatpush2.msra.mxu0 %v4345
      %4631 = vmatprep.subr.mxu0 %v4344
      %4632 = vmatpush2.msra.mxu0 %v4343
      %4633 = vmatprep.subr.mxu0 %v4342
      %4634 = vmatpush2.msra.mxu0 %v4341
      %4635 = vmatprep.subr.mxu0 %v4340
      %4636 = vmatpush2.msra.mxu0 %v4339
      %4637 = vmatprep.subr.mxu0 %v4338
      %4638 = vmatpush2.msra.mxu0 %v4337
      %4639 = vmatprep.subr.mxu0 %v4336
      %4640 = vmatpush2.msra.mxu0 %v4335
      %4641 = vmatprep.subr.mxu0 %v4334
      %4642 = vmatpush2.msra.mxu0 %v4333
      %4643 = vmatprep.subr.mxu0 %v4332
      %4644 = vmatpush2.msra.mxu0 %v4331
      %4645 = vmatprep.subr.mxu0 %v4330
      %4646 = vmatpush2.msra.mxu0 %v4329
      %4647 = vmatprep.subr.mxu0 %v4328
      %4648 = vmatpush2.msra.mxu0 %v4327
      %4649 = vmatprep.subr.mxu0 %v4326
      %4650 = vmatpush2.msra.mxu0 %v4325
      %4651 = vmatprep.subr.mxu0 %v4324
      %4652 = vmatpush2.msra.mxu0 %v4323
      %4653 = vmatprep.subr.mxu0 %v4322
      %4654 = vmatpush2.msra.mxu0 %v4321
      %4655 = vmatprep.subr.mxu0 %v4320
      %4656 = vmatpush2.msra.mxu0 %v4319
      %4657 = vmatprep.subr.mxu0 %v4318
      %4658 = vmatpush2.msra.mxu0 %v4317
      %4659 = vmatprep.subr.mxu0 %v4316
      %4660 = vmatpush2.msra.mxu0 %v4315
      %4661 = vmatprep.mubr.f32.mxu0 %v4167
      %4662 = vmatmul.mubr.f32.gmra.mxu0 %v4166
      %v4663 = vpop.f32.mrf.mxu0
      %v4664 = vadd.f32 0.0, %v4663
      %v4665 = vpop.f32.mrf.mxu0
      %v4666 = vadd.f32 0.0, %v4665
      %4667 = vmatprep.mubr.f32.mxu0 %v4176
      %4668 = vmatmul.mubr.f32.gmra.mxu0 %v4175
      %v4669 = vpop.f32.mrf.mxu0
      %v4670 = vadd.f32 0.0, %v4669
      %v4671 = vpop.f32.mrf.mxu0
      %v4672 = vadd.f32 0.0, %v4671
      %4673 = vmatprep.mubr.f32.mxu0 %v4185
      %4674 = vmatmul.mubr.f32.gmra.mxu0 %v4184
      %v4675 = vpop.f32.mrf.mxu0
      %v4676 = vadd.f32 0.0, %v4675
      %v4677 = vpop.f32.mrf.mxu0
      %v4678 = vadd.f32 0.0, %v4677
      %4679 = vmatprep.mubr.f32.mxu0 %v4194
      %4680 = vmatmul.mubr.f32.gmra.mxu0 %v4193
      %v4681 = vpop.f32.mrf.mxu0
      %v4682 = vadd.f32 0.0, %v4681
      %v4683 = vpop.f32.mrf.mxu0
      %v4684 = vadd.f32 0.0, %v4683
      %4685 = vmatprep.mubr.f32.mxu0 %v4203
      %4686 = vmatmul.mubr.f32.gmra.mxu0 %v4202
      %v4687 = vpop.f32.mrf.mxu0
      %v4688 = vadd.f32 0.0, %v4687
      %v4689 = vpop.f32.mrf.mxu0
      %v4690 = vadd.f32 0.0, %v4689
      %4691 = vmatprep.mubr.f32.mxu0 %v4212
      %4692 = vmatmul.mubr.f32.gmra.mxu0 %v4211
      %v4693 = vpop.f32.mrf.mxu0
      %v4694 = vadd.f32 0.0, %v4693
      %v4695 = vpop.f32.mrf.mxu0
      %v4696 = vadd.f32 0.0, %v4695
      %4697 = vmatprep.mubr.f32.mxu0 %v4221
      %4698 = vmatmul.mubr.f32.gmra.mxu0 %v4220
      %v4699 = vpop.f32.mrf.mxu0
      %v4700 = vadd.f32 0.0, %v4699
      %v4701 = vpop.f32.mrf.mxu0
      %v4702 = vadd.f32 0.0, %v4701
      %4703 = vmatprep.mubr.f32.mxu0 %v4230
      %4704 = vmatmul.mubr.f32.gmra.mxu0 %v4229
      %v4705 = vpop.f32.mrf.mxu0
      %v4706 = vadd.f32 0.0, %v4705
      %v4707 = vpop.f32.mrf.mxu0
      %v4708 = vadd.f32 0.0, %v4707
      %4709 = vmatprep.mubr.f32.mxu0 %v4239
      %4710 = vmatmul.mubr.f32.gmra.mxu0 %v4238
      %v4711 = vpop.f32.mrf.mxu0
      %v4712 = vadd.f32 0.0, %v4711
      %v4713 = vpop.f32.mrf.mxu0
      %v4714 = vadd.f32 0.0, %v4713
      %4715 = vmatprep.mubr.f32.mxu0 %v4248
      %4716 = vmatmul.mubr.f32.gmra.mxu0 %v4247
      %v4717 = vpop.f32.mrf.mxu0
      %v4718 = vadd.f32 0.0, %v4717
      %v4719 = vpop.f32.mrf.mxu0
      %v4720 = vadd.f32 0.0, %v4719
      %4721 = vmatprep.mubr.f32.mxu0 %v4257
      %4722 = vmatmul.mubr.f32.gmra.mxu0 %v4256
      %v4723 = vpop.f32.mrf.mxu0
      %v4724 = vadd.f32 0.0, %v4723
      %v4725 = vpop.f32.mrf.mxu0
      %v4726 = vadd.f32 0.0, %v4725
      %4727 = vmatprep.mubr.f32.mxu0 %v4266
      %4728 = vmatmul.mubr.f32.gmra.mxu0 %v4265
      %v4729 = vpop.f32.mrf.mxu0
      %v4730 = vadd.f32 0.0, %v4729
      %v4731 = vpop.f32.mrf.mxu0
      %v4732 = vadd.f32 0.0, %v4731
      %4733 = vmatprep.mubr.f32.mxu0 %v4275
      %4734 = vmatmul.mubr.f32.gmra.mxu0 %v4274
      %v4735 = vpop.f32.mrf.mxu0
      %v4736 = vadd.f32 0.0, %v4735
      %v4737 = vpop.f32.mrf.mxu0
      %v4738 = vadd.f32 0.0, %v4737
      %4739 = vdwg.mxu0
      %4740 = vmatprep.subr.mxu0 %v4378
      %4741 = vmatpush1.msra.mxu0 %v4377
      %4742 = vmatprep.subr.mxu0 %v4376
      %4743 = vmatpush1.msra.mxu0 %v4375
      %4744 = vmatprep.subr.mxu0 %v4374
      %4745 = vmatpush1.msra.mxu0 %v4373
      %4746 = vmatprep.subr.mxu0 %v4372
      %4747 = vmatpush1.msra.mxu0 %v4371
      %4748 = vmatprep.subr.mxu0 %v4370
      %4749 = vmatpush1.msra.mxu0 %v4369
      %4750 = vmatprep.subr.mxu0 %v4368
      %4751 = vmatpush1.msra.mxu0 %v4367
      %4752 = vmatprep.subr.mxu0 %v4366
      %4753 = vmatpush1.msra.mxu0 %v4365
      %4754 = vmatprep.subr.mxu0 %v4364
      %4755 = vmatpush1.msra.mxu0 %v4363
      %4756 = vmatprep.subr.mxu0 %v4362
      %4757 = vmatpush1.msra.mxu0 %v4361
      %4758 = vmatprep.subr.mxu0 %v4360
      %4759 = vmatpush1.msra.mxu0 %v4359
      %4760 = vmatprep.subr.mxu0 %v4358
      %4761 = vmatpush1.msra.mxu0 %v4357
      %4762 = vmatprep.subr.mxu0 %v4356
      %4763 = vmatpush1.msra.mxu0 %v4355
      %4764 = vmatprep.subr.mxu0 %v4354
      %4765 = vmatpush1.msra.mxu0 %v4353
      %4766 = vmatprep.subr.mxu0 %v4352
      %4767 = vmatpush1.msra.mxu0 %v4351
      %4768 = vmatprep.subr.mxu0 %v4350
      %4769 = vmatpush1.msra.mxu0 %v4349
      %4770 = vmatprep.subr.mxu0 %v4348
      %4771 = vmatpush1.msra.mxu0 %v4347
      %4772 = vmatprep.subr.mxu0 %v4410
      %4773 = vmatpush2.msra.mxu0 %v4409
      %4774 = vmatprep.subr.mxu0 %v4408
      %4775 = vmatpush2.msra.mxu0 %v4407
      %4776 = vmatprep.subr.mxu0 %v4406
      %4777 = vmatpush2.msra.mxu0 %v4405
      %4778 = vmatprep.subr.mxu0 %v4404
      %4779 = vmatpush2.msra.mxu0 %v4403
      %4780 = vmatprep.subr.mxu0 %v4402
      %4781 = vmatpush2.msra.mxu0 %v4401
      %4782 = vmatprep.subr.mxu0 %v4400
      %4783 = vmatpush2.msra.mxu0 %v4399
      %4784 = vmatprep.subr.mxu0 %v4398
      %4785 = vmatpush2.msra.mxu0 %v4397
      %4786 = vmatprep.subr.mxu0 %v4396
      %4787 = vmatpush2.msra.mxu0 %v4395
      %4788 = vmatprep.subr.mxu0 %v4394
      %4789 = vmatpush2.msra.mxu0 %v4393
      %4790 = vmatprep.subr.mxu0 %v4392
      %4791 = vmatpush2.msra.mxu0 %v4391
      %4792 = vmatprep.subr.mxu0 %v4390
      %4793 = vmatpush2.msra.mxu0 %v4389
      %4794 = vmatprep.subr.mxu0 %v4388
      %4795 = vmatpush2.msra.mxu0 %v4387
      %4796 = vmatprep.subr.mxu0 %v4386
      %4797 = vmatpush2.msra.mxu0 %v4385
      %4798 = vmatprep.subr.mxu0 %v4384
      %4799 = vmatpush2.msra.mxu0 %v4383
      %4800 = vmatprep.subr.mxu0 %v4382
      %4801 = vmatpush2.msra.mxu0 %v4381
      %4802 = vmatprep.subr.mxu0 %v4380
      %4803 = vmatpush2.msra.mxu0 %v4379
      %4804 = vmatprep.mubr.f32.mxu0 %v4169
      %4805 = vmatmul.mubr.f32.gmra.mxu0 %v4168
      %v4806 = vpop.f32.mrf.mxu0
      %v4807 = vadd.f32 %v4664, %v4806
      %v4808 = vpop.f32.mrf.mxu0
      %v4809 = vadd.f32 %v4666, %v4808
      %4810 = vmatprep.mubr.f32.mxu0 %v4178
      %4811 = vmatmul.mubr.f32.gmra.mxu0 %v4177
      %v4812 = vpop.f32.mrf.mxu0
      %v4813 = vadd.f32 %v4670, %v4812
      %v4814 = vpop.f32.mrf.mxu0
      %v4815 = vadd.f32 %v4672, %v4814
      %4816 = vmatprep.mubr.f32.mxu0 %v4187
      %4817 = vmatmul.mubr.f32.gmra.mxu0 %v4186
      %v4818 = vpop.f32.mrf.mxu0
      %v4819 = vadd.f32 %v4676, %v4818
      %v4820 = vpop.f32.mrf.mxu0
      %v4821 = vadd.f32 %v4678, %v4820
      %4822 = vmatprep.mubr.f32.mxu0 %v4196
      %4823 = vmatmul.mubr.f32.gmra.mxu0 %v4195
      %v4824 = vpop.f32.mrf.mxu0
      %v4825 = vadd.f32 %v4682, %v4824
      %v4826 = vpop.f32.mrf.mxu0
      %v4827 = vadd.f32 %v4684, %v4826
      %4828 = vmatprep.mubr.f32.mxu0 %v4205
      %4829 = vmatmul.mubr.f32.gmra.mxu0 %v4204
      %v4830 = vpop.f32.mrf.mxu0
      %v4831 = vadd.f32 %v4688, %v4830
      %v4832 = vpop.f32.mrf.mxu0
      %v4833 = vadd.f32 %v4690, %v4832
      %4834 = vmatprep.mubr.f32.mxu0 %v4214
      %4835 = vmatmul.mubr.f32.gmra.mxu0 %v4213
      %v4836 = vpop.f32.mrf.mxu0
      %v4837 = vadd.f32 %v4694, %v4836
      %v4838 = vpop.f32.mrf.mxu0
      %v4839 = vadd.f32 %v4696, %v4838
      %4840 = vmatprep.mubr.f32.mxu0 %v4223
      %4841 = vmatmul.mubr.f32.gmra.mxu0 %v4222
      %v4842 = vpop.f32.mrf.mxu0
      %v4843 = vadd.f32 %v4700, %v4842
      %v4844 = vpop.f32.mrf.mxu0
      %v4845 = vadd.f32 %v4702, %v4844
      %4846 = vmatprep.mubr.f32.mxu0 %v4232
      %4847 = vmatmul.mubr.f32.gmra.mxu0 %v4231
      %v4848 = vpop.f32.mrf.mxu0
      %v4849 = vadd.f32 %v4706, %v4848
      %v4850 = vpop.f32.mrf.mxu0
      %v4851 = vadd.f32 %v4708, %v4850
      %4852 = vmatprep.mubr.f32.mxu0 %v4241
      %4853 = vmatmul.mubr.f32.gmra.mxu0 %v4240
      %v4854 = vpop.f32.mrf.mxu0
      %v4855 = vadd.f32 %v4712, %v4854
      %v4856 = vpop.f32.mrf.mxu0
      %v4857 = vadd.f32 %v4714, %v4856
      %4858 = vmatprep.mubr.f32.mxu0 %v4250
      %4859 = vmatmul.mubr.f32.gmra.mxu0 %v4249
      %v4860 = vpop.f32.mrf.mxu0
      %v4861 = vadd.f32 %v4718, %v4860
      %v4862 = vpop.f32.mrf.mxu0
      %v4863 = vadd.f32 %v4720, %v4862
      %4864 = vmatprep.mubr.f32.mxu0 %v4259
      %4865 = vmatmul.mubr.f32.gmra.mxu0 %v4258
      %v4866 = vpop.f32.mrf.mxu0
      %v4867 = vadd.f32 %v4724, %v4866
      %v4868 = vpop.f32.mrf.mxu0
      %v4869 = vadd.f32 %v4726, %v4868
      %4870 = vmatprep.mubr.f32.mxu0 %v4268
      %4871 = vmatmul.mubr.f32.gmra.mxu0 %v4267
      %v4872 = vpop.f32.mrf.mxu0
      %v4873 = vadd.f32 %v4730, %v4872
      %v4874 = vpop.f32.mrf.mxu0
      %v4875 = vadd.f32 %v4732, %v4874
      %4876 = vmatprep.mubr.f32.mxu0 %v4277
      %4877 = vmatmul.mubr.f32.gmra.mxu0 %v4276
      %v4878 = vpop.f32.mrf.mxu0
      %v4879 = vadd.f32 %v4736, %v4878
      %v4880 = vpop.f32.mrf.mxu0
      %v4881 = vadd.f32 %v4738, %v4880
      %4882 = vdwg.mxu0
      %4883 = vmatprep.subr.mxu0 %v4442
      %4884 = vmatpush1.msra.mxu0 %v4441
      %4885 = vmatprep.subr.mxu0 %v4440
      %4886 = vmatpush1.msra.mxu0 %v4439
      %4887 = vmatprep.subr.mxu0 %v4438
      %4888 = vmatpush1.msra.mxu0 %v4437
      %4889 = vmatprep.subr.mxu0 %v4436
      %4890 = vmatpush1.msra.mxu0 %v4435
      %4891 = vmatprep.subr.mxu0 %v4434
      %4892 = vmatpush1.msra.mxu0 %v4433
      %4893 = vmatprep.subr.mxu0 %v4432
      %4894 = vmatpush1.msra.mxu0 %v4431
      %4895 = vmatprep.subr.mxu0 %v4430
      %4896 = vmatpush1.msra.mxu0 %v4429
      %4897 = vmatprep.subr.mxu0 %v4428
      %4898 = vmatpush1.msra.mxu0 %v4427
      %4899 = vmatprep.subr.mxu0 %v4426
      %4900 = vmatpush1.msra.mxu0 %v4425
      %4901 = vmatprep.subr.mxu0 %v4424
      %4902 = vmatpush1.msra.mxu0 %v4423
      %4903 = vmatprep.subr.mxu0 %v4422
      %4904 = vmatpush1.msra.mxu0 %v4421
      %4905 = vmatprep.subr.mxu0 %v4420
      %4906 = vmatpush1.msra.mxu0 %v4419
      %4907 = vmatprep.subr.mxu0 %v4418
      %4908 = vmatpush1.msra.mxu0 %v4417
      %4909 = vmatprep.subr.mxu0 %v4416
      %4910 = vmatpush1.msra.mxu0 %v4415
      %4911 = vmatprep.subr.mxu0 %v4414
      %4912 = vmatpush1.msra.mxu0 %v4413
      %4913 = vmatprep.subr.mxu0 %v4412
      %4914 = vmatpush1.msra.mxu0 %v4411
      %4915 = vmatprep.subr.mxu0 %v4474
      %4916 = vmatpush2.msra.mxu0 %v4473
      %4917 = vmatprep.subr.mxu0 %v4472
      %4918 = vmatpush2.msra.mxu0 %v4471
      %4919 = vmatprep.subr.mxu0 %v4470
      %4920 = vmatpush2.msra.mxu0 %v4469
      %4921 = vmatprep.subr.mxu0 %v4468
      %4922 = vmatpush2.msra.mxu0 %v4467
      %4923 = vmatprep.subr.mxu0 %v4466
      %4924 = vmatpush2.msra.mxu0 %v4465
      %4925 = vmatprep.subr.mxu0 %v4464
      %4926 = vmatpush2.msra.mxu0 %v4463
      %4927 = vmatprep.subr.mxu0 %v4462
      %4928 = vmatpush2.msra.mxu0 %v4461
      %4929 = vmatprep.subr.mxu0 %v4460
      %4930 = vmatpush2.msra.mxu0 %v4459
      %4931 = vmatprep.subr.mxu0 %v4458
      %4932 = vmatpush2.msra.mxu0 %v4457
      %4933 = vmatprep.subr.mxu0 %v4456
      %4934 = vmatpush2.msra.mxu0 %v4455
      %4935 = vmatprep.subr.mxu0 %v4454
      %4936 = vmatpush2.msra.mxu0 %v4453
      %4937 = vmatprep.subr.mxu0 %v4452
      %4938 = vmatpush2.msra.mxu0 %v4451
      %4939 = vmatprep.subr.mxu0 %v4450
      %4940 = vmatpush2.msra.mxu0 %v4449
      %4941 = vmatprep.subr.mxu0 %v4448
      %4942 = vmatpush2.msra.mxu0 %v4447
      %4943 = vmatprep.subr.mxu0 %v4446
      %4944 = vmatpush2.msra.mxu0 %v4445
      %4945 = vmatprep.subr.mxu0 %v4444
      %4946 = vmatpush2.msra.mxu0 %v4443
      %4947 = vmatprep.mubr.f32.mxu0 %v4171
      %4948 = vmatmul.mubr.f32.gmra.mxu0 %v4170
      %v4949 = vpop.f32.mrf.mxu0
      %v4950 = vadd.f32 %v4807, %v4949
      %v4951 = vpop.f32.mrf.mxu0
      %v4952 = vadd.f32 %v4809, %v4951
      %4953 = vmatprep.mubr.f32.mxu0 %v4180
      %4954 = vmatmul.mubr.f32.gmra.mxu0 %v4179
      %v4955 = vpop.f32.mrf.mxu0
      %v4956 = vadd.f32 %v4813, %v4955
      %v4957 = vpop.f32.mrf.mxu0
      %v4958 = vadd.f32 %v4815, %v4957
      %4959 = vmatprep.mubr.f32.mxu0 %v4189
      %4960 = vmatmul.mubr.f32.gmra.mxu0 %v4188
      %v4961 = vpop.f32.mrf.mxu0
      %v4962 = vadd.f32 %v4819, %v4961
      %v4963 = vpop.f32.mrf.mxu0
      %v4964 = vadd.f32 %v4821, %v4963
      %4965 = vmatprep.mubr.f32.mxu0 %v4198
      %4966 = vmatmul.mubr.f32.gmra.mxu0 %v4197
      %v4967 = vpop.f32.mrf.mxu0
      %v4968 = vadd.f32 %v4825, %v4967
      %v4969 = vpop.f32.mrf.mxu0
      %v4970 = vadd.f32 %v4827, %v4969
      %4971 = vmatprep.mubr.f32.mxu0 %v4207
      %4972 = vmatmul.mubr.f32.gmra.mxu0 %v4206
      %v4973 = vpop.f32.mrf.mxu0
      %v4974 = vadd.f32 %v4831, %v4973
      %v4975 = vpop.f32.mrf.mxu0
      %v4976 = vadd.f32 %v4833, %v4975
      %4977 = vmatprep.mubr.f32.mxu0 %v4216
      %4978 = vmatmul.mubr.f32.gmra.mxu0 %v4215
      %v4979 = vpop.f32.mrf.mxu0
      %v4980 = vadd.f32 %v4837, %v4979
      %v4981 = vpop.f32.mrf.mxu0
      %v4982 = vadd.f32 %v4839, %v4981
      %4983 = vmatprep.mubr.f32.mxu0 %v4225
      %4984 = vmatmul.mubr.f32.gmra.mxu0 %v4224
      %v4985 = vpop.f32.mrf.mxu0
      %v4986 = vadd.f32 %v4843, %v4985
      %v4987 = vpop.f32.mrf.mxu0
      %v4988 = vadd.f32 %v4845, %v4987
      %4989 = vmatprep.mubr.f32.mxu0 %v4234
      %4990 = vmatmul.mubr.f32.gmra.mxu0 %v4233
      %v4991 = vpop.f32.mrf.mxu0
      %v4992 = vadd.f32 %v4849, %v4991
      %v4993 = vpop.f32.mrf.mxu0
      %v4994 = vadd.f32 %v4851, %v4993
      %4995 = vmatprep.mubr.f32.mxu0 %v4243
      %4996 = vmatmul.mubr.f32.gmra.mxu0 %v4242
      %v4997 = vpop.f32.mrf.mxu0
      %v4998 = vadd.f32 %v4855, %v4997
      %v4999 = vpop.f32.mrf.mxu0
      %v5000 = vadd.f32 %v4857, %v4999
      %5001 = vmatprep.mubr.f32.mxu0 %v4252
      %5002 = vmatmul.mubr.f32.gmra.mxu0 %v4251
      %v5003 = vpop.f32.mrf.mxu0
      %v5004 = vadd.f32 %v4861, %v5003
      %v5005 = vpop.f32.mrf.mxu0
      %v5006 = vadd.f32 %v4863, %v5005
      %5007 = vmatprep.mubr.f32.mxu0 %v4261
      %5008 = vmatmul.mubr.f32.gmra.mxu0 %v4260
      %v5009 = vpop.f32.mrf.mxu0
      %v5010 = vadd.f32 %v4867, %v5009
      %v5011 = vpop.f32.mrf.mxu0
      %v5012 = vadd.f32 %v4869, %v5011
      %5013 = vmatprep.mubr.f32.mxu0 %v4270
      %5014 = vmatmul.mubr.f32.gmra.mxu0 %v4269
      %v5015 = vpop.f32.mrf.mxu0
      %v5016 = vadd.f32 %v4873, %v5015
      %v5017 = vpop.f32.mrf.mxu0
      %v5018 = vadd.f32 %v4875, %v5017
      %5019 = vmatprep.mubr.f32.mxu0 %v4279
      %5020 = vmatmul.mubr.f32.gmra.mxu0 %v4278
      %v5021 = vpop.f32.mrf.mxu0
      %v5022 = vadd.f32 %v4879, %v5021
      %v5023 = vpop.f32.mrf.mxu0
      %v5024 = vadd.f32 %v4881, %v5023
      %5025 = vdwg.mxu0
      %5026 = vmatprep.subr.mxu0 %v4506
      %5027 = vmatpush1.msra.mxu0 %v4505
      %5028 = vmatprep.subr.mxu0 %v4504
      %5029 = vmatpush1.msra.mxu0 %v4503
      %5030 = vmatprep.subr.mxu0 %v4502
      %5031 = vmatpush1.msra.mxu0 %v4501
      %5032 = vmatprep.subr.mxu0 %v4500
      %5033 = vmatpush1.msra.mxu0 %v4499
      %5034 = vmatprep.subr.mxu0 %v4498
      %5035 = vmatpush1.msra.mxu0 %v4497
      %5036 = vmatprep.subr.mxu0 %v4496
      %5037 = vmatpush1.msra.mxu0 %v4495
      %5038 = vmatprep.subr.mxu0 %v4494
      %5039 = vmatpush1.msra.mxu0 %v4493
      %5040 = vmatprep.subr.mxu0 %v4492
      %5041 = vmatpush1.msra.mxu0 %v4491
      %5042 = vmatprep.subr.mxu0 %v4490
      %5043 = vmatpush1.msra.mxu0 %v4489
      %5044 = vmatprep.subr.mxu0 %v4488
      %5045 = vmatpush1.msra.mxu0 %v4487
      %5046 = vmatprep.subr.mxu0 %v4486
      %5047 = vmatpush1.msra.mxu0 %v4485
      %5048 = vmatprep.subr.mxu0 %v4484
      %5049 = vmatpush1.msra.mxu0 %v4483
      %5050 = vmatprep.subr.mxu0 %v4482
      %5051 = vmatpush1.msra.mxu0 %v4481
      %5052 = vmatprep.subr.mxu0 %v4480
      %5053 = vmatpush1.msra.mxu0 %v4479
      %5054 = vmatprep.subr.mxu0 %v4478
      %5055 = vmatpush1.msra.mxu0 %v4477
      %5056 = vmatprep.subr.mxu0 %v4476
      %5057 = vmatpush1.msra.mxu0 %v4475
      %5058 = vmatprep.subr.mxu0 %v4538
      %5059 = vmatpush2.msra.mxu0 %v4537
      %5060 = vmatprep.subr.mxu0 %v4536
      %5061 = vmatpush2.msra.mxu0 %v4535
      %5062 = vmatprep.subr.mxu0 %v4534
      %5063 = vmatpush2.msra.mxu0 %v4533
      %5064 = vmatprep.subr.mxu0 %v4532
      %5065 = vmatpush2.msra.mxu0 %v4531
      %5066 = vmatprep.subr.mxu0 %v4530
      %5067 = vmatpush2.msra.mxu0 %v4529
      %5068 = vmatprep.subr.mxu0 %v4528
      %5069 = vmatpush2.msra.mxu0 %v4527
      %5070 = vmatprep.subr.mxu0 %v4526
      %5071 = vmatpush2.msra.mxu0 %v4525
      %5072 = vmatprep.subr.mxu0 %v4524
      %5073 = vmatpush2.msra.mxu0 %v4523
      %5074 = vmatprep.subr.mxu0 %v4522
      %5075 = vmatpush2.msra.mxu0 %v4521
      %5076 = vmatprep.subr.mxu0 %v4520
      %5077 = vmatpush2.msra.mxu0 %v4519
      %5078 = vmatprep.subr.mxu0 %v4518
      %5079 = vmatpush2.msra.mxu0 %v4517
      %5080 = vmatprep.subr.mxu0 %v4516
      %5081 = vmatpush2.msra.mxu0 %v4515
      %5082 = vmatprep.subr.mxu0 %v4514
      %5083 = vmatpush2.msra.mxu0 %v4513
      %5084 = vmatprep.subr.mxu0 %v4512
      %5085 = vmatpush2.msra.mxu0 %v4511
      %5086 = vmatprep.subr.mxu0 %v4510
      %5087 = vmatpush2.msra.mxu0 %v4509
      %5088 = vmatprep.subr.mxu0 %v4508
      %5089 = vmatpush2.msra.mxu0 %v4507
      %5090 = vmatprep.mubr.f32.mxu0 %v4173
      %5091 = vmatmul.mubr.f32.gmra.mxu0 %v4172
      %v5092 = vpop.f32.mrf.mxu0
      %v5093 = vadd.f32 %v4950, %v5092
      %v5094 = vpop.f32.mrf.mxu0
      %v5095 = vadd.f32 %v4952, %v5094
      %5096 = vmatprep.mubr.f32.mxu0 %v4182
      %5097 = vmatmul.mubr.f32.gmra.mxu0 %v4181
      %v5098 = vpop.f32.mrf.mxu0
      %v5099 = vadd.f32 %v4956, %v5098
      %v5100 = vpop.f32.mrf.mxu0
      %v5101 = vadd.f32 %v4958, %v5100
      %5102 = vmatprep.mubr.f32.mxu0 %v4191
      %5103 = vmatmul.mubr.f32.gmra.mxu0 %v4190
      %v5104 = vpop.f32.mrf.mxu0
      %v5105 = vadd.f32 %v4962, %v5104
      %v5106 = vpop.f32.mrf.mxu0
      %v5107 = vadd.f32 %v4964, %v5106
      %5108 = vmatprep.mubr.f32.mxu0 %v4200
      %5109 = vmatmul.mubr.f32.gmra.mxu0 %v4199
      %v5110 = vpop.f32.mrf.mxu0
      %v5111 = vadd.f32 %v4968, %v5110
      %v5112 = vpop.f32.mrf.mxu0
      %v5113 = vadd.f32 %v4970, %v5112
      %5114 = vmatprep.mubr.f32.mxu0 %v4209
      %5115 = vmatmul.mubr.f32.gmra.mxu0 %v4208
      %v5116 = vpop.f32.mrf.mxu0
      %v5117 = vadd.f32 %v4974, %v5116
      %v5118 = vpop.f32.mrf.mxu0
      %v5119 = vadd.f32 %v4976, %v5118
      %5120 = vmatprep.mubr.f32.mxu0 %v4218
      %5121 = vmatmul.mubr.f32.gmra.mxu0 %v4217
      %v5122 = vpop.f32.mrf.mxu0
      %v5123 = vadd.f32 %v4980, %v5122
      %v5124 = vpop.f32.mrf.mxu0
      %v5125 = vadd.f32 %v4982, %v5124
      %5126 = vmatprep.mubr.f32.mxu0 %v4227
      %5127 = vmatmul.mubr.f32.gmra.mxu0 %v4226
      %v5128 = vpop.f32.mrf.mxu0
      %v5129 = vadd.f32 %v4986, %v5128
      %v5130 = vpop.f32.mrf.mxu0
      %v5131 = vadd.f32 %v4988, %v5130
      %5132 = vmatprep.mubr.f32.mxu0 %v4236
      %5133 = vmatmul.mubr.f32.gmra.mxu0 %v4235
      %v5134 = vpop.f32.mrf.mxu0
      %v5135 = vadd.f32 %v4992, %v5134
      %v5136 = vpop.f32.mrf.mxu0
      %v5137 = vadd.f32 %v4994, %v5136
      %5138 = vmatprep.mubr.f32.mxu0 %v4245
      %5139 = vmatmul.mubr.f32.gmra.mxu0 %v4244
      %v5140 = vpop.f32.mrf.mxu0
      %v5141 = vadd.f32 %v4998, %v5140
      %v5142 = vpop.f32.mrf.mxu0
      %v5143 = vadd.f32 %v5000, %v5142
      %5144 = vmatprep.mubr.f32.mxu0 %v4254
      %5145 = vmatmul.mubr.f32.gmra.mxu0 %v4253
      %v5146 = vpop.f32.mrf.mxu0
      %v5147 = vadd.f32 %v5004, %v5146
      %v5148 = vpop.f32.mrf.mxu0
      %v5149 = vadd.f32 %v5006, %v5148
      %5150 = vmatprep.mubr.f32.mxu0 %v4263
      %5151 = vmatmul.mubr.f32.gmra.mxu0 %v4262
      %v5152 = vpop.f32.mrf.mxu0
      %v5153 = vadd.f32 %v5010, %v5152
      %v5154 = vpop.f32.mrf.mxu0
      %v5155 = vadd.f32 %v5012, %v5154
      %5156 = vmatprep.mubr.f32.mxu0 %v4272
      %5157 = vmatmul.mubr.f32.gmra.mxu0 %v4271
      %v5158 = vpop.f32.mrf.mxu0
      %v5159 = vadd.f32 %v5016, %v5158
      %v5160 = vpop.f32.mrf.mxu0
      %v5161 = vadd.f32 %v5018, %v5160
      %5162 = vmatprep.mubr.f32.mxu0 %v4281
      %5163 = vmatmul.mubr.f32.gmra.mxu0 %v4280
      %v5164 = vpop.f32.mrf.mxu0
      %v5165 = vadd.f32 %v5022, %v5164
      %v5166 = vpop.f32.mrf.mxu0
      %v5167 = vadd.f32 %v5024, %v5166
      %5168 = vdwg.mxu0
      %5169 = vmatprep.subr.mxu0 0.0
      %5170 = vmatpush1.msra.mxu0 0.0
      %5171 = vmatprep.subr.mxu0 0.0
      %5172 = vmatpush1.msra.mxu0 0.0
      %5173 = vmatprep.subr.mxu0 0.0
      %5174 = vmatpush1.msra.mxu0 0.0
      %5175 = vmatprep.subr.mxu0 0.0
      %5176 = vmatpush1.msra.mxu0 0.0
      %5177 = vmatprep.subr.mxu0 0.0
      %5178 = vmatpush1.msra.mxu0 0.0
      %5179 = vmatprep.subr.mxu0 0.0
      %5180 = vmatpush1.msra.mxu0 0.0
      %5181 = vmatprep.subr.mxu0 0.0
      %5182 = vmatpush1.msra.mxu0 0.0
      %5183 = vmatprep.subr.mxu0 %v4556
      %5184 = vmatpush1.msra.mxu0 %v4555
      %5185 = vmatprep.subr.mxu0 %v4554
      %5186 = vmatpush1.msra.mxu0 %v4553
      %5187 = vmatprep.subr.mxu0 %v4552
      %5188 = vmatpush1.msra.mxu0 %v4551
      %5189 = vmatprep.subr.mxu0 %v4550
      %5190 = vmatpush1.msra.mxu0 %v4549
      %5191 = vmatprep.subr.mxu0 %v4548
      %5192 = vmatpush1.msra.mxu0 %v4547
      %5193 = vmatprep.subr.mxu0 %v4546
      %5194 = vmatpush1.msra.mxu0 %v4545
      %5195 = vmatprep.subr.mxu0 %v4544
      %5196 = vmatpush1.msra.mxu0 %v4543
      %5197 = vmatprep.subr.mxu0 %v4542
      %5198 = vmatpush1.msra.mxu0 %v4541
      %5199 = vmatprep.subr.mxu0 %v4540
      %5200 = vmatpush1.msra.mxu0 %v4539
      %5201 = vmatprep.subr.mxu0 0.0
      %5202 = vmatpush2.msra.mxu0 0.0
      %5203 = vmatprep.subr.mxu0 0.0
      %5204 = vmatpush2.msra.mxu0 0.0
      %5205 = vmatprep.subr.mxu0 0.0
      %5206 = vmatpush2.msra.mxu0 0.0
      %5207 = vmatprep.subr.mxu0 0.0
      %5208 = vmatpush2.msra.mxu0 0.0
      %5209 = vmatprep.subr.mxu0 0.0
      %5210 = vmatpush2.msra.mxu0 0.0
      %5211 = vmatprep.subr.mxu0 0.0
      %5212 = vmatpush2.msra.mxu0 0.0
      %5213 = vmatprep.subr.mxu0 0.0
      %5214 = vmatpush2.msra.mxu0 0.0
      %5215 = vmatprep.subr.mxu0 0.0
      %5216 = vmatpush2.msra.mxu0 0.0
      %5217 = vmatprep.subr.mxu0 0.0
      %5218 = vmatpush2.msra.mxu0 0.0
      %5219 = vmatprep.subr.mxu0 0.0
      %5220 = vmatpush2.msra.mxu0 0.0
      %5221 = vmatprep.subr.mxu0 0.0
      %5222 = vmatpush2.msra.mxu0 0.0
      %5223 = vmatprep.subr.mxu0 0.0
      %5224 = vmatpush2.msra.mxu0 0.0
      %5225 = vmatprep.subr.mxu0 0.0
      %5226 = vmatpush2.msra.mxu0 0.0
      %5227 = vmatprep.subr.mxu0 0.0
      %5228 = vmatpush2.msra.mxu0 0.0
      %5229 = vmatprep.subr.mxu0 0.0
      %5230 = vmatpush2.msra.mxu0 0.0
      %5231 = vmatprep.subr.mxu0 0.0
      %5232 = vmatpush2.msra.mxu0 0.0
      %5233 = vmatprep.mubr.f32.mxu0 0.0
      %5234 = vmatmul.mubr.f32.gmra.mxu0 %v4559
      %v5235 = vpop.f32.mrf.mxu0
      %v5236 = vadd.f32 %v5093, %v5235
      %v5237 = vpop.f32.mrf.mxu0
      %v5238 = vadd.f32 %v5095, %v5237
      %5239 = vmatprep.mubr.f32.mxu0 0.0
      %5240 = vmatmul.mubr.f32.gmra.mxu0 %v4562
      %v5241 = vpop.f32.mrf.mxu0
      %v5242 = vadd.f32 %v5099, %v5241
      %v5243 = vpop.f32.mrf.mxu0
      %v5244 = vadd.f32 %v5101, %v5243
      %5245 = vmatprep.mubr.f32.mxu0 0.0
      %5246 = vmatmul.mubr.f32.gmra.mxu0 %v4565
      %v5247 = vpop.f32.mrf.mxu0
      %v5248 = vadd.f32 %v5105, %v5247
      %v5249 = vpop.f32.mrf.mxu0
      %v5250 = vadd.f32 %v5107, %v5249
      %5251 = vmatprep.mubr.f32.mxu0 0.0
      %5252 = vmatmul.mubr.f32.gmra.mxu0 %v4568
      %v5253 = vpop.f32.mrf.mxu0
      %v5254 = vadd.f32 %v5111, %v5253
      %v5255 = vpop.f32.mrf.mxu0
      %v5256 = vadd.f32 %v5113, %v5255
      %5257 = vmatprep.mubr.f32.mxu0 0.0
      %5258 = vmatmul.mubr.f32.gmra.mxu0 %v4571
      %v5259 = vpop.f32.mrf.mxu0
      %v5260 = vadd.f32 %v5117, %v5259
      %v5261 = vpop.f32.mrf.mxu0
      %v5262 = vadd.f32 %v5119, %v5261
      %5263 = vmatprep.mubr.f32.mxu0 0.0
      %5264 = vmatmul.mubr.f32.gmra.mxu0 %v4574
      %v5265 = vpop.f32.mrf.mxu0
      %v5266 = vadd.f32 %v5123, %v5265
      %v5267 = vpop.f32.mrf.mxu0
      %v5268 = vadd.f32 %v5125, %v5267
      %5269 = vmatprep.mubr.f32.mxu0 0.0
      %5270 = vmatmul.mubr.f32.gmra.mxu0 %v4577
      %v5271 = vpop.f32.mrf.mxu0
      %v5272 = vadd.f32 %v5129, %v5271
      %v5273 = vpop.f32.mrf.mxu0
      %v5274 = vadd.f32 %v5131, %v5273
      %5275 = vmatprep.mubr.f32.mxu0 0.0
      %5276 = vmatmul.mubr.f32.gmra.mxu0 %v4580
      %v5277 = vpop.f32.mrf.mxu0
      %v5278 = vadd.f32 %v5135, %v5277
      %v5279 = vpop.f32.mrf.mxu0
      %v5280 = vadd.f32 %v5137, %v5279
      %5281 = vmatprep.mubr.f32.mxu0 0.0
      %5282 = vmatmul.mubr.f32.gmra.mxu0 %v4583
      %v5283 = vpop.f32.mrf.mxu0
      %v5284 = vadd.f32 %v5141, %v5283
      %v5285 = vpop.f32.mrf.mxu0
      %v5286 = vadd.f32 %v5143, %v5285
      %5287 = vmatprep.mubr.f32.mxu0 0.0
      %5288 = vmatmul.mubr.f32.gmra.mxu0 %v4586
      %v5289 = vpop.f32.mrf.mxu0
      %v5290 = vadd.f32 %v5147, %v5289
      %v5291 = vpop.f32.mrf.mxu0
      %v5292 = vadd.f32 %v5149, %v5291
      %5293 = vmatprep.mubr.f32.mxu0 0.0
      %5294 = vmatmul.mubr.f32.gmra.mxu0 %v4589
      %v5295 = vpop.f32.mrf.mxu0
      %v5296 = vadd.f32 %v5153, %v5295
      %v5297 = vpop.f32.mrf.mxu0
      %v5298 = vadd.f32 %v5155, %v5297
      %5299 = vmatprep.mubr.f32.mxu0 0.0
      %5300 = vmatmul.mubr.f32.gmra.mxu0 %v4592
      %v5301 = vpop.f32.mrf.mxu0
      %v5302 = vadd.f32 %v5159, %v5301
      %v5303 = vpop.f32.mrf.mxu0
      %v5304 = vadd.f32 %v5161, %v5303
      %5305 = vmatprep.mubr.f32.mxu0 0.0
      %5306 = vmatmul.mubr.f32.gmra.mxu0 %v4595
      %v5307 = vpop.f32.mrf.mxu0
      %v5308 = vadd.f32 %v5165, %v5307
      %v5309 = vpop.f32.mrf.mxu0
      %v5310 = vadd.f32 %v5167, %v5309
      %5311 = vdwg.mxu0
      %v5312 = vld [vmem:[%s4] sm:$0xff]
      %v5313 = vld [vmem:[%s4 + $0x8] sm:$0xff]
      %v5314 = vld [vmem:[%s4 + $0x10] sm:$0xff]
      %v5315 = vld [vmem:[%s4 + $0x18] sm:$0xff]
      %v5316 = vld [vmem:[%s4 + $0x20] sm:$0xff]
      %v5317 = vld [vmem:[%s4 + $0x28] sm:$0xff]
      %v5318 = vld [vmem:[%s4 + $0x30] sm:$0xff]
      %v5319 = vld [vmem:[%s4 + $0x38] sm:$0xff]
      %v5320 = vld [vmem:[%s4 + $0x40] sm:$0xff]
      %v5321 = vld [vmem:[%s4 + $0x48] sm:$0xff]
      %v5322 = vld [vmem:[%s4 + $0x50] sm:$0xff]
      %v5323 = vld [vmem:[%s4 + $0x58] sm:$0xff]
      %v5324 = vld [vmem:[%s4 + $0x60] sm:$0xff]
      %5326 = vset.pattern.permute.xlu0 0
      %5327 = vperm.xlu0 %5326, %v5312
      %v5328 = vpop.permute.xlu0 %5327
      %5331 = vset.pattern.permute.xlu0 0
      %5332 = vperm.xlu0 %5331, %v5313
      %v5333 = vpop.permute.xlu0 %5332
      %5336 = vset.pattern.permute.xlu0 0
      %5337 = vperm.xlu0 %5336, %v5314
      %v5338 = vpop.permute.xlu0 %5337
      %5341 = vset.pattern.permute.xlu0 0
      %5342 = vperm.xlu0 %5341, %v5315
      %v5343 = vpop.permute.xlu0 %5342
      %5346 = vset.pattern.permute.xlu0 0
      %5347 = vperm.xlu0 %5346, %v5316
      %v5348 = vpop.permute.xlu0 %5347
      %5351 = vset.pattern.permute.xlu0 0
      %5352 = vperm.xlu0 %5351, %v5317
      %v5353 = vpop.permute.xlu0 %5352
      %5356 = vset.pattern.permute.xlu0 0
      %5357 = vperm.xlu0 %5356, %v5318
      %v5358 = vpop.permute.xlu0 %5357
      %5361 = vset.pattern.permute.xlu0 0
      %5362 = vperm.xlu0 %5361, %v5319
      %v5363 = vpop.permute.xlu0 %5362
      %5366 = vset.pattern.permute.xlu0 0
      %5367 = vperm.xlu0 %5366, %v5320
      %v5368 = vpop.permute.xlu0 %5367
      %5371 = vset.pattern.permute.xlu0 0
      %5372 = vperm.xlu0 %5371, %v5321
      %v5373 = vpop.permute.xlu0 %5372
      %5376 = vset.pattern.permute.xlu0 0
      %5377 = vperm.xlu0 %5376, %v5322
      %v5378 = vpop.permute.xlu0 %5377
      %5381 = vset.pattern.permute.xlu0 0
      %5382 = vperm.xlu0 %5381, %v5323
      %v5383 = vpop.permute.xlu0 %5382
      %5386 = vset.pattern.permute.xlu0 0
      %5387 = vperm.xlu0 %5386, %v5324
      %v5388 = vpop.permute.xlu0 %5387
      %v5390 = vlaneseq
      %v5391 = vshrl.u32 %v5390, 7
      %v5392 = vsub.s32 0, %v5391
      %v5393 = vrot.slane %v292, %v5392
      %v5394 = vlaneseq
      %v5395 = vshrl.u32 %v5394, 7
      %v5396 = vsub.s32 4, %v5395
      %v5397 = vrot.slane %v292, %v5396
      %v5400 = vlaneseq
      %v5401 = vshrl.u32 %v5400, 7
      %v5402 = vsub.s32 0, %v5401
      %v5403 = vrot.slane %v5393, %v5402
      %v5404 = vlaneseq
      %v5405 = vshrl.u32 %v5404, 7
      %v5406 = vsub.s32 0, %v5405
      %v5407 = vrot.slane %v5397, %v5406
      %v5408 = vsub.f32 %v5328, %v5403
      %v5409 = vsub.f32 %v5328, %v5407
      %v5410 = vsub.f32 %v5333, %v5403
      %v5411 = vsub.f32 %v5333, %v5407
      %v5412 = vsub.f32 %v5338, %v5403
      %v5413 = vsub.f32 %v5338, %v5407
      %v5414 = vsub.f32 %v5343, %v5403
      %v5415 = vsub.f32 %v5343, %v5407
      %v5416 = vsub.f32 %v5348, %v5403
      %v5417 = vsub.f32 %v5348, %v5407
      %v5418 = vsub.f32 %v5353, %v5403
      %v5419 = vsub.f32 %v5353, %v5407
      %v5420 = vsub.f32 %v5358, %v5403
      %v5421 = vsub.f32 %v5358, %v5407
      %v5422 = vsub.f32 %v5363, %v5403
      %v5423 = vsub.f32 %v5363, %v5407
      %v5424 = vsub.f32 %v5368, %v5403
      %v5425 = vsub.f32 %v5368, %v5407
      %v5426 = vsub.f32 %v5373, %v5403
      %v5427 = vsub.f32 %v5373, %v5407
      %v5428 = vsub.f32 %v5378, %v5403
      %v5429 = vsub.f32 %v5378, %v5407
      %v5430 = vsub.f32 %v5383, %v5403
      %v5431 = vsub.f32 %v5383, %v5407
      %v5432 = vsub.f32 %v5388, %v5403
      %v5433 = vsub.f32 %v5388, %v5407
      %v5434 = vand.u32 2147483647, %v5408
      %v5435 = vand.u32 2147483647, %v5409
      %v5436 = vand.u32 2147483647, %v5410
      %v5437 = vand.u32 2147483647, %v5411
      %v5438 = vand.u32 2147483647, %v5412
      %v5439 = vand.u32 2147483647, %v5413
      %v5440 = vand.u32 2147483647, %v5414
      %v5441 = vand.u32 2147483647, %v5415
      %v5442 = vand.u32 2147483647, %v5416
      %v5443 = vand.u32 2147483647, %v5417
      %v5444 = vand.u32 2147483647, %v5418
      %v5445 = vand.u32 2147483647, %v5419
      %v5446 = vand.u32 2147483647, %v5420
      %v5447 = vand.u32 2147483647, %v5421
      %v5448 = vand.u32 2147483647, %v5422
      %v5449 = vand.u32 2147483647, %v5423
      %v5450 = vand.u32 2147483647, %v5424
      %v5451 = vand.u32 2147483647, %v5425
      %v5452 = vand.u32 2147483647, %v5426
      %v5453 = vand.u32 2147483647, %v5427
      %v5454 = vand.u32 2147483647, %v5428
      %v5455 = vand.u32 2147483647, %v5429
      %v5456 = vand.u32 2147483647, %v5430
      %v5457 = vand.u32 2147483647, %v5431
      %v5458 = vand.u32 2147483647, %v5432
      %v5459 = vand.u32 2147483647, %v5433
      %v5460 = vsub.f32 1.0, %v5434
      %v5461 = vsub.f32 1.0, %v5435
      %v5462 = vsub.f32 1.0, %v5436
      %v5463 = vsub.f32 1.0, %v5437
      %v5464 = vsub.f32 1.0, %v5438
      %v5465 = vsub.f32 1.0, %v5439
      %v5466 = vsub.f32 1.0, %v5440
      %v5467 = vsub.f32 1.0, %v5441
      %v5468 = vsub.f32 1.0, %v5442
      %v5469 = vsub.f32 1.0, %v5443
      %v5470 = vsub.f32 1.0, %v5444
      %v5471 = vsub.f32 1.0, %v5445
      %v5472 = vsub.f32 1.0, %v5446
      %v5473 = vsub.f32 1.0, %v5447
      %v5474 = vsub.f32 1.0, %v5448
      %v5475 = vsub.f32 1.0, %v5449
      %v5476 = vsub.f32 1.0, %v5450
      %v5477 = vsub.f32 1.0, %v5451
      %v5478 = vsub.f32 1.0, %v5452
      %v5479 = vsub.f32 1.0, %v5453
      %v5480 = vsub.f32 1.0, %v5454
      %v5481 = vsub.f32 1.0, %v5455
      %v5482 = vsub.f32 1.0, %v5456
      %v5483 = vsub.f32 1.0, %v5457
      %v5484 = vsub.f32 1.0, %v5458
      %v5485 = vsub.f32 1.0, %v5459
      %v5486 = vmax.f32 %v5460, 0.0
      %v5487 = vmax.f32 %v5461, 0.0
      %v5488 = vmax.f32 %v5462, 0.0
      %v5489 = vmax.f32 %v5463, 0.0
      %v5490 = vmax.f32 %v5464, 0.0
      %v5491 = vmax.f32 %v5465, 0.0
      %v5492 = vmax.f32 %v5466, 0.0
      %v5493 = vmax.f32 %v5467, 0.0
      %v5494 = vmax.f32 %v5468, 0.0
      %v5495 = vmax.f32 %v5469, 0.0
      %v5496 = vmax.f32 %v5470, 0.0
      %v5497 = vmax.f32 %v5471, 0.0
      %v5498 = vmax.f32 %v5472, 0.0
      %v5499 = vmax.f32 %v5473, 0.0
      %v5500 = vmax.f32 %v5474, 0.0
      %v5501 = vmax.f32 %v5475, 0.0
      %v5502 = vmax.f32 %v5476, 0.0
      %v5503 = vmax.f32 %v5477, 0.0
      %v5504 = vmax.f32 %v5478, 0.0
      %v5505 = vmax.f32 %v5479, 0.0
      %v5506 = vmax.f32 %v5480, 0.0
      %v5507 = vmax.f32 %v5481, 0.0
      %v5508 = vmax.f32 %v5482, 0.0
      %v5509 = vmax.f32 %v5483, 0.0
      %v5510 = vmax.f32 %v5484, 0.0
      %v5511 = vmax.f32 %v5485, 0.0
      %v5512 = vld [vmem:[%s1] sm:$0x7]
      %v5513 = vmul.f32 %v5236, %v5486
      %v5514 = vmul.f32 %v5238, %v5487
      %v5515 = vmul.f32 %v5242, %v5488
      %v5516 = vmul.f32 %v5244, %v5489
      %v5517 = vmul.f32 %v5248, %v5490
      %v5518 = vmul.f32 %v5250, %v5491
      %v5519 = vmul.f32 %v5254, %v5492
      %v5520 = vmul.f32 %v5256, %v5493
      %v5521 = vmul.f32 %v5260, %v5494
      %v5522 = vmul.f32 %v5262, %v5495
      %v5523 = vmul.f32 %v5266, %v5496
      %v5524 = vmul.f32 %v5268, %v5497
      %v5525 = vmul.f32 %v5272, %v5498
      %v5526 = vmul.f32 %v5274, %v5499
      %v5527 = vmul.f32 %v5278, %v5500
      %v5528 = vmul.f32 %v5280, %v5501
      %v5529 = vmul.f32 %v5284, %v5502
      %v5530 = vmul.f32 %v5286, %v5503
      %v5531 = vmul.f32 %v5290, %v5504
      %v5532 = vmul.f32 %v5292, %v5505
      %v5533 = vmul.f32 %v5296, %v5506
      %v5534 = vmul.f32 %v5298, %v5507
      %v5535 = vmul.f32 %v5302, %v5508
      %v5536 = vmul.f32 %v5304, %v5509
      %v5537 = vmul.f32 %v5308, %v5510
      %v5538 = vmul.f32 %v5310, %v5511
      %vm5539 = vcmask 850944
      %v5541 = vsel %vm5539, %v5512, 0
      %5543 = vmatprep.subr.mxu0 0.0
      %5544 = vmatpush1.msra.mxu0 0.0
      %5545 = vmatprep.subr.mxu0 0.0
      %5546 = vmatpush1.msra.mxu0 0.0
      %5547 = vmatprep.subr.mxu0 0.0
      %5548 = vmatpush1.msra.mxu0 0.0
      %5549 = vmatprep.subr.mxu0 %v5538
      %5550 = vmatpush1.msra.mxu0 %v5537
      %5551 = vmatprep.subr.mxu0 %v5536
      %5552 = vmatpush1.msra.mxu0 %v5535
      %5553 = vmatprep.subr.mxu0 %v5534
      %5554 = vmatpush1.msra.mxu0 %v5533
      %5555 = vmatprep.subr.mxu0 %v5532
      %5556 = vmatpush1.msra.mxu0 %v5531
      %5557 = vmatprep.subr.mxu0 %v5530
      %5558 = vmatpush1.msra.mxu0 %v5529
      %5559 = vmatprep.subr.mxu0 %v5528
      %5560 = vmatpush1.msra.mxu0 %v5527
      %5561 = vmatprep.subr.mxu0 %v5526
      %5562 = vmatpush1.msra.mxu0 %v5525
      %5563 = vmatprep.subr.mxu0 %v5524
      %5564 = vmatpush1.msra.mxu0 %v5523
      %5565 = vmatprep.subr.mxu0 %v5522
      %5566 = vmatpush1.msra.mxu0 %v5521
      %5567 = vmatprep.subr.mxu0 %v5520
      %5568 = vmatpush1.msra.mxu0 %v5519
      %5569 = vmatprep.subr.mxu0 %v5518
      %5570 = vmatpush1.msra.mxu0 %v5517
      %5571 = vmatprep.subr.mxu0 %v5516
      %5572 = vmatpush1.msra.mxu0 %v5515
      %5573 = vmatprep.subr.mxu0 %v5514
      %5574 = vmatpush1.msra.mxu0 %v5513
      %5575 = vmatprep.subr.mxu0 0.0
      %5576 = vmatpush2.msra.mxu0 0.0
      %5577 = vmatprep.subr.mxu0 0.0
      %5578 = vmatpush2.msra.mxu0 0.0
      %5579 = vmatprep.subr.mxu0 0.0
      %5580 = vmatpush2.msra.mxu0 0.0
      %5581 = vmatprep.subr.mxu0 0.0
      %5582 = vmatpush2.msra.mxu0 0.0
      %5583 = vmatprep.subr.mxu0 0.0
      %5584 = vmatpush2.msra.mxu0 0.0
      %5585 = vmatprep.subr.mxu0 0.0
      %5586 = vmatpush2.msra.mxu0 0.0
      %5587 = vmatprep.subr.mxu0 0.0
      %5588 = vmatpush2.msra.mxu0 0.0
      %5589 = vmatprep.subr.mxu0 0.0
      %5590 = vmatpush2.msra.mxu0 0.0
      %5591 = vmatprep.subr.mxu0 0.0
      %5592 = vmatpush2.msra.mxu0 0.0
      %5593 = vmatprep.subr.mxu0 0.0
      %5594 = vmatpush2.msra.mxu0 0.0
      %5595 = vmatprep.subr.mxu0 0.0
      %5596 = vmatpush2.msra.mxu0 0.0
      %5597 = vmatprep.subr.mxu0 0.0
      %5598 = vmatpush2.msra.mxu0 0.0
      %5599 = vmatprep.subr.mxu0 0.0
      %5600 = vmatpush2.msra.mxu0 0.0
      %5601 = vmatprep.subr.mxu0 0.0
      %5602 = vmatpush2.msra.mxu0 0.0
      %5603 = vmatprep.subr.mxu0 0.0
      %5604 = vmatpush2.msra.mxu0 0.0
      %5605 = vmatprep.subr.mxu0 0.0
      %5606 = vmatpush2.msra.mxu0 0.0
      %5607 = vmatprep.mubr.f32.mxu0 0.0
      %5608 = vmatmul.mubr.f32.gmra.mxu0 %v5541
      %v5609 = vpop.f32.mrf.mxu0
      %v5610 = vadd.f32 0.0, %v5609
      %v5611 = vpop.f32.mrf.mxu0
      %v5612 = vadd.f32 0.0, %v5611
      %5613 = vdwg.mxu0
      %v5616 = vcombine.low %v5610, %v5612
      %5618 = vst [vmem:[%s289] sm:$0x77] %v5616
      %s5619 = smul.u32 2, %s22
      %p5620 = scmp.lt.s32.totalorder %s21, 1
      %s5621 = scalar_select %p5620, %s21, 1
      %p5622 = scmp.lt.s32.totalorder %s5619, 1
      %s5623 = scalar_select %p5622, %s5619, 1
      %s5624 = smul.addr %s5621, 2
      %s5625 = sadd.s32 %s5623, %s5624
      %s5626 = smul.addr %s5625, 4
      %s5627 = scalar_lea.vmem %s6, %s5626
      // Predicated region
      $region45: #{tpu_custom_call.1} parent=43 // pred_check
        %p5628 = pneg %p182
      $region46: #{tpu_custom_call.1} parent=43 // pred_check_branch
        %5630 = sbr.rel (%p5628) target = $region48
      $region47: #{tpu_custom_call.1} parent=43 // pred_region
        %s5631 = smul.u32 2, %s22
      $region48: #{tpu_custom_call.1} parent=43 // pred_fallthru
        _
    $region44: #{tpu_custom_call.1} parent=5 // pred_fallthru
      _
    %p5632 = scmp.le.s32.totalorder 2, %s12
    // Predicated region
    $region49: #{tpu_custom_call.1} parent=5 // pred_check
      %p5633 = pneg %p5632
    $region50: #{tpu_custom_call.1} parent=5 // pred_check_branch
      %5635 = sbr.rel (%p5633) target = $region52
    $region51: #{tpu_custom_call.1} parent=5 // pred_region
      %s5636 = ssub.s32 %s12, 2
      // Predicated region
      $region53: #{tpu_custom_call.1} parent=51 // pred_check
        %p5637 = pneg %p188
      $region54: #{tpu_custom_call.1} parent=51 // pred_check_branch
        %5639 = sbr.rel (%p5637) target = $region56
      $region55: #{tpu_custom_call.1} parent=51 // pred_region
        %s5640 = smul.u32 2, %s24
        %p5641 = scmp.lt.s32.totalorder %s23, 1
        %s5642 = scalar_select %p5641, %s23, 1
        %p5643 = scmp.lt.s32.totalorder %s5640, 1
        %s5644 = scalar_select %p5643, %s5640, 1
        %s5645 = smul.addr %s5642, 2
        %s5646 = sadd.s32 %s5644, %s5645
        %s5647 = smul.addr %s5646, 4
        %s5648 = scalar_lea.vmem %s6, %s5647
      $region56: #{tpu_custom_call.1} parent=51 // pred_fallthru
        _
    $region52: #{tpu_custom_call.1} parent=5 // pred_fallthru
      _
  $region6: #{tpu_custom_call.1} parent=0 // loop_footer
    %s16 = sadd.s32 1, %s12
  $region7: #{tpu_custom_call.1} parent=0 // loop_footer_branch
    %11 = sbr.rel target = $region3
  $region8: #{tpu_custom_call.1} parent=0 // loop_exit
    _

</llo_original>
